<compile_context>
chip_gen: v7x
topology: tpu7x:2x2x1
jax: 0.10.0
libtpu: 0.0.40
codegen_flags: <defaults>
</compile_context>

<pallas_src>
import functools
import numpy as np
import jax
import jax.numpy as jnp
from jax.experimental import pallas as pl
from jax.experimental.pallas import tpu as pltpu

# On v6e/v7x set this to jnp.bfloat16 for full-rate MXU (accumulation stays f32);
# kept f32 here so the fused kernel matches the f32 reference bit-closely.
MXU_INPUT_DTYPE = jnp.float32


def _dot(a, b):
    return jnp.dot(a.astype(MXU_INPUT_DTYPE), b.astype(MXU_INPUT_DTYPE),
                   preferred_element_type=jnp.float32)


# ----------------------------- fused kernel -----------------------------

def make_fused_conv_kernel(names, n_groups, rep_dim, num_channels):
    n_in = len(names)

    def kernel(*refs):
        ins = dict(zip(names, refs[:n_in]))
        node_out_ref, edge_out_ref, cycle_out_ref = refs[n_in:]

        def L(k):
            return ins[k][...]

        def lin(xs, w_keys, b_key, relu):
            # split-weight Linear: sum_i x_i @ W_i + b  (replaces HBM-level concat)
            y = L(b_key)
            for x, wk in zip(xs, w_keys):
                y = y + _dot(x, L(wk))
            return jnp.maximum(y, 0.0) if relu else y

        node_rep = L("node_rep")
        edge_rep = L("edge_rep")
        cycle_rep = L("cycle_rep")

        # ---------------- Edge_node ----------------
        node2edge = _dot(L("n2e"), node_rep)                       # node -> edge gather
        h = lin([edge_rep, node2edge], ["en_e_w0a", "en_e_w0b"], "en_e_b0", True)
        edge_out_en = lin([h], ["en_e_w1"], "en_e_b1", False)
        edge2node = _dot(L("e2n"), edge_out_en)                    # edge -> node gather
        h = lin([node_rep, edge2node], ["en_n_w0a", "en_n_w0b"], "en_n_b0", True)
        node_out = lin([h], ["en_n_w1"], "en_n_b1", False)

        # ---------------- Edge_cycle ----------------
        e2c = _dot(L("e2c"), edge_rep)                             # edge -> cycle (1b) gather
        # Fused structural matrix (csum @ e2c): cycle-sum linmap directly from
        # edge_rep — independent of the e2c gather above (shorter MXU chain).
        e2c_sum = _dot(L("csum_e2c"), edge_rep)
        # Autobahn per cycle-size group, applied block-diagonally via row masks.
        aut = None
        for g in range(n_groups):
            term = L(f"aut_m{g}") * (_dot(e2c, L(f"aut_w{g}")) + L(f"aut_b{g}"))
            aut = term if aut is None else aut + term
        h = lin([cycle_rep, aut, e2c_sum, e2c],
                ["ec_c_w0a", "ec_c_w0b", "ec_c_w0c", "ec_c_w0d"], "ec_c_b0", True)
        h = lin([h], ["ec_c_w1"], "ec_c_b1", True)
        cycle_out = lin([h], ["ec_c_w2"], "ec_c_b2", False)

        # Fused structural matrix (c2e @ csum): cycle->edge "sum" gather applied
        # directly to cycle_out — no intermediate c_out_sum matmul needed.
        cyc2e_sum = _dot(L("c2e_csum"), cycle_out)                 # 1b -> 0b gather (sum part)
        cyc2e_id = _dot(L("c2e"), cycle_out)                       # 1b -> 0b gather (id part)
        h = lin([edge_rep, cyc2e_sum, cyc2e_id],
                ["ec_e_w0a", "ec_e_w0b", "ec_e_w0c"], "ec_e_b0", True)
        edge_out_ec = lin([h], ["ec_e_w1"], "ec_e_b1", False)

        # ---------------- ConvLayer fuse ----------------
        h = lin([edge_out_en, edge_out_ec], ["cv_w0a", "cv_w0b"], "cv_b0", True)
        h = lin([h], ["cv_w1"], "cv_b1", True)
        edge_out = lin([h], ["cv_w2"], "cv_b2", False)

        # dropout rate 0.0 / eval mode -> identity; residual adds folded into the stores
        node_out_ref[...] = node_rep + node_out
        edge_out_ref[...] = edge_rep + edge_out
        cycle_out_ref[...] = cycle_rep + cycle_out

    return kernel


# ----------------------------- parameters -----------------------------

def init_linear(key, fan_in, fan_out):
    kw, kb = jax.random.split(key)
    lim = 1.0 / float(np.sqrt(fan_in))
    w = jax.random.uniform(kw, (fan_in, fan_out), jnp.float32, -lim, lim)
    b = jax.random.uniform(kb, (1, fan_out), jnp.float32, -lim, lim)
    return (w, b)


def init_mlp(key, in_dim, hidden, out_dim, num_layers):
    dims = [in_dim] + [hidden] * (num_layers - 1) + [out_dim]
    keys = jax.random.split(key, num_layers)
    return [init_linear(k, dims[i], dims[i + 1]) for i, k in enumerate(keys)]


def init_conv_layer_params(key, rep_dim, num_channels, cycle_sizes):
    hidden = rep_dim * 2  # _inner_mlp_mult = 2
    ks = jax.random.split(key, 5 + len(cycle_sizes))
    return {
        # Edge_node
        "en_edge_mlp_0": init_mlp(ks[0], 2 * rep_dim, hidden, rep_dim, 2),
        "en_node_mlp": init_mlp(ks[1], 2 * rep_dim, hidden, rep_dim, 2),
        # Edge_cycle
        "ec_cycle_mlp": init_mlp(ks[2], (1 + 2 + num_channels) * rep_dim, hidden, rep_dim, 3),
        "ec_edge_mlp": init_mlp(ks[3], 3 * rep_dim, hidden, rep_dim, 2),
        # ConvLayer
        "conv_edge_mlp": init_mlp(ks[4], 2 * rep_dim, hidden, rep_dim, 3),
        # Autobahn per cycle size (approximated as per-row linear map)
        "autobahn": [init_linear(ks[5 + i], rep_dim, rep_dim * num_channels)
                     for i in range(len(cycle_sizes))],
    }


def _split_rows(w, sizes):
    out, off = [], 0
    for s in sizes:
        out.append(w[off:off + s])
        off += s
    return out


def flatten_inputs(params, node_rep, edge_rep, cycle_rep, mats, gmasks,
                   rep_dim, num_channels):
    """Flatten everything into one named dict of kernel inputs; first-layer MLP
    weights are split row-wise so the kernel never concatenates activations."""
    D, nc = rep_dim, num_channels
    flat = dict(node_rep=node_rep, edge_rep=edge_rep, cycle_rep=cycle_rep,
                n2e=mats["n2e"], e2n=mats["e2n"], e2c=mats["e2c"],
                csum_e2c=mats["csum_e2c"], c2e=mats["c2e"],
                c2e_csum=mats["c2e_csum"])

    (w0, b0), (w1, b1) = params["en_edge_mlp_0"]
    wa, wb = _split_rows(w0, [D, D])
    flat.update(en_e_w0a=wa, en_e_w0b=wb, en_e_b0=b0, en_e_w1=w1, en_e_b1=b1)

    (w0, b0), (w1, b1) = params["en_node_mlp"]
    wa, wb = _split_rows(w0, [D, D])
    flat.update(en_n_w0a=wa, en_n_w0b=wb, en_n_b0=b0, en_n_w1=w1, en_n_b1=b1)

    (w0, b0), (w1, b1), (w2, b2) = params["ec_cycle_mlp"]
    wa, wb, wc, wd = _split_rows(w0, [D, nc * D, D, D])
    flat.update(ec_c_w0a=wa, ec_c_w0b=wb, ec_c_w0c=wc, ec_c_w0d=wd, ec_c_b0=b0,
                ec_c_w1=w1, ec_c_b1=b1, ec_c_w2=w2, ec_c_b2=b2)

    (w0, b0), (w1, b1) = params["ec_edge_mlp"]
    wa, wb, wc = _split_rows(w0, [D, D, D])
    flat.update(ec_e_w0a=wa, ec_e_w0b=wb, ec_e_w0c=wc, ec_e_b0=b0,
                ec_e_w1=w1, ec_e_b1=b1)

    (w0, b0), (w1, b1), (w2, b2) = params["conv_edge_mlp"]
    wa, wb = _split_rows(w0, [D, D])
    flat.update(cv_w0a=wa, cv_w0b=wb, cv_b0=b0, cv_w1=w1, cv_b1=b1, cv_w2=w2, cv_b2=b2)

    for g, (w, b) in enumerate(params["autobahn"]):
        flat[f"aut_w{g}"] = w
        flat[f"aut_b{g}"] = b
        flat[f"aut_m{g}"] = gmasks[g]
    return flat


# ----------------------------- forward -----------------------------

def conv_layer_forward(params, node_rep, edge_rep, cycle_rep, mats, gmasks,
                       *, rep_dim, num_channels):
    inputs = flatten_inputs(params, node_rep, edge_rep, cycle_rep, mats, gmasks,
                            rep_dim, num_channels)
    names = tuple(inputs.keys())
    vals = [inputs[k] for k in names]

    kernel = make_fused_conv_kernel(names, len(gmasks), rep_dim, num_channels)
    out_shape = (
        jax.ShapeDtypeStruct(node_rep.shape, jnp.float32),
        jax.ShapeDtypeStruct(edge_rep.shape, jnp.float32),
        jax.ShapeDtypeStruct(cycle_rep.shape, jnp.float32),
    )
    # Single fused invocation: no grid, every operand is a full-array VMEM block
    # (total live data << 1 MiB, fits v5e/v6e/v7x VMEM with large margin).
    return pl.pallas_call(
        kernel,
        out_shape=out_shape,
        compiler_params=pltpu.CompilerParams(vmem_limit_bytes=32 * 1024 * 1024),
    )(*vals)


# ----------------------------- pure-JAX reference -----------------------------

def reference_forward(params, node_rep, edge_rep, cycle_rep, mats, gmasks,
                      rep_dim, num_channels):
    def mlp(layers, x):
        n = len(layers)
        for i, (w, b) in enumerate(layers):
            x = x @ w + b
            if i < n - 1:
                x = jnp.maximum(x, 0.0)
        return x

    node2edge = mats["n2e"] @ node_rep
    edge_out_en = mlp(params["en_edge_mlp_0"], jnp.concatenate([edge_rep, node2edge], -1))
    edge2node = mats["e2n"] @ edge_out_en
    node_out = mlp(params["en_node_mlp"], jnp.concatenate([node_rep, edge2node], -1))

    e2c = mats["e2c"] @ edge_rep
    aut = jnp.zeros((e2c.shape[0], rep_dim * num_channels), jnp.float32)
    for g, (w, b) in enumerate(params["autobahn"]):
        aut = aut + gmasks[g] * (e2c @ w + b)
    e2c_sum = mats["csum"] @ e2c
    cycle_out = mlp(params["ec_cycle_mlp"],
                    jnp.concatenate([cycle_rep, aut, e2c_sum, e2c], -1))
    c_out_sum = mats["csum"] @ cycle_out
    cycle2edge = mats["c2e"] @ jnp.concatenate([c_out_sum, cycle_out], -1)
    edge_out_ec = mlp(params["ec_edge_mlp"], jnp.concatenate([edge_rep, cycle2edge], -1))
    edge_out = mlp(params["conv_edge_mlp"], jnp.concatenate([edge_out_en, edge_out_ec], -1))
    return node_rep + node_out, edge_rep + edge_out, cycle_rep + cycle_out


# ----------------------------- synthetic graph -----------------------------

def build_graph_mats(n_nodes):
    # edges: ring + chords
    edges = [(i, (i + 1) % n_nodes) for i in range(n_nodes)] + \
            [(i, (i + 2) % n_nodes) for i in range(0, n_nodes, 2)]
    E = len(edges)

    # cycles: 3 of size 5, 2 of size 6 (synthetic node sets)
    cycles = [list(range(k, k + 5)) for k in (0, 5, 10)] + \
             [list(range(k, k + 6)) for k in (0, 8)]
    cycle_row_counts = [3 * 5, 2 * 6]   # rows per cycle-size group
    Ctot = sum(len(c) for c in cycles)

    n2e = np.zeros((E, n_nodes), np.float32)
    for e, (u, v) in enumerate(edges):
        n2e[e, u] = 1.0
        n2e[e, v] = 1.0
    e2n = n2e.T.copy()

    e2c = np.zeros((Ctot, E), np.float32)
    csum = np.zeros((Ctot, Ctot), np.float32)
    row = 0
    for cyc in cycles:
        node_set = set(cyc)
        s = len(cyc)
        csum[row:row + s, row:row + s] = 1.0
        for j, v in enumerate(cyc):
            for e, (a, b) in enumerate(edges):
                if a in node_set and b in node_set and (a == v or b == v):
                    e2c[row + j, e] = 1.0
        row += s
    c2e = e2c.T.copy()

    # Host-side precompute of composed structural linmaps (graph-build time,
    # not on the per-forward critical path): shortens the in-kernel MXU chain.
    csum_e2c = csum @ e2c          # (Ctot, E): cycle-sum of edge->cycle gather
    c2e_csum = c2e @ csum          # (E, Ctot): cycle->edge gather of cycle-sum

    # 0/1 row-group masks [Ctot, 1] per cycle-size group (disjoint row ranges)
    gmasks = []
    off = 0
    for cnt in cycle_row_counts:
        m = np.zeros((Ctot, 1), np.float32)
        m[off:off + cnt] = 1.0
        gmasks.append(jnp.asarray(m))
        off += cnt

    mats = {
        "n2e": jnp.asarray(n2e),
        "e2n": jnp.asarray(e2n),
        "e2c": jnp.asarray(e2c),
        "csum": jnp.asarray(csum),
        "csum_e2c": jnp.asarray(csum_e2c),
        "c2e": jnp.asarray(c2e),
        "c2e_csum": jnp.asarray(c2e_csum),
    }
    return mats, E, Ctot, gmasks


# ----------------------------- main -----------------------------

if __name__ == "__main__":
    rep_dim = 32
    num_channels = 4
    cycle_sizes = [5, 6]
    n_nodes = 16

    mats, n_edges, n_cycle_rows, gmasks = build_graph_mats(n_nodes)

    key = jax.random.PRNGKey(0)
    k_params, k_node, k_edge, k_cycle = jax.random.split(key, 4)

    params = init_conv_layer_params(k_params, rep_dim, num_channels, cycle_sizes)

    node_rep = jax.random.normal(k_node, (n_nodes, rep_dim), jnp.float32)
    edge_rep = jax.random.normal(k_edge, (n_edges, rep_dim), jnp.float32)
    cycle_rep = jax.random.normal(k_cycle, (n_cycle_rows, rep_dim), jnp.float32)

    fwd = jax.jit(functools.partial(conv_layer_forward,
                                    rep_dim=rep_dim, num_channels=num_channels))
    node_out, edge_out, cycle_out = fwd(params, node_rep, edge_rep, cycle_rep,
                                        mats, gmasks)
    jax.block_until_ready((node_out, edge_out, cycle_out))

    assert node_out.shape == (n_nodes, rep_dim)
    assert edge_out.shape == (n_edges, rep_dim)
    assert cycle_out.shape == (n_cycle_rows, rep_dim)

    # sanity-check the fused kernel against a pure-JAX reference
    ref = reference_forward(params, node_rep, edge_rep, cycle_rep, mats, gmasks,
                            rep_dim, num_channels)
    for got, want in zip((node_out, edge_out, cycle_out), ref):
        np.testing.assert_allclose(np.asarray(got), np.asarray(want),
                                   rtol=1e-2, atol=1e-2)

    print("KERNEL_OK")
</pallas_src>

<mosaic_0001>
module attributes {stable_mosaic.version = 11 : i64} {
  func.func @kernel(%arg0: memref<16x32xf32, #tpu.memory_space<vmem>>, %arg1: memref<24x32xf32, #tpu.memory_space<vmem>>, %arg2: memref<27x32xf32, #tpu.memory_space<vmem>>, %arg3: memref<24x16xf32, #tpu.memory_space<vmem>>, %arg4: memref<16x24xf32, #tpu.memory_space<vmem>>, %arg5: memref<27x24xf32, #tpu.memory_space<vmem>>, %arg6: memref<27x24xf32, #tpu.memory_space<vmem>>, %arg7: memref<24x27xf32, #tpu.memory_space<vmem>>, %arg8: memref<24x27xf32, #tpu.memory_space<vmem>>, %arg9: memref<32x64xf32, #tpu.memory_space<vmem>>, %arg10: memref<32x64xf32, #tpu.memory_space<vmem>>, %arg11: memref<1x64xf32, #tpu.memory_space<vmem>>, %arg12: memref<64x32xf32, #tpu.memory_space<vmem>>, %arg13: memref<1x32xf32, #tpu.memory_space<vmem>>, %arg14: memref<32x64xf32, #tpu.memory_space<vmem>>, %arg15: memref<32x64xf32, #tpu.memory_space<vmem>>, %arg16: memref<1x64xf32, #tpu.memory_space<vmem>>, %arg17: memref<64x32xf32, #tpu.memory_space<vmem>>, %arg18: memref<1x32xf32, #tpu.memory_space<vmem>>, %arg19: memref<32x64xf32, #tpu.memory_space<vmem>>, %arg20: memref<128x64xf32, #tpu.memory_space<vmem>>, %arg21: memref<32x64xf32, #tpu.memory_space<vmem>>, %arg22: memref<32x64xf32, #tpu.memory_space<vmem>>, %arg23: memref<1x64xf32, #tpu.memory_space<vmem>>, %arg24: memref<64x64xf32, #tpu.memory_space<vmem>>, %arg25: memref<1x64xf32, #tpu.memory_space<vmem>>, %arg26: memref<64x32xf32, #tpu.memory_space<vmem>>, %arg27: memref<1x32xf32, #tpu.memory_space<vmem>>, %arg28: memref<32x64xf32, #tpu.memory_space<vmem>>, %arg29: memref<32x64xf32, #tpu.memory_space<vmem>>, %arg30: memref<32x64xf32, #tpu.memory_space<vmem>>, %arg31: memref<1x64xf32, #tpu.memory_space<vmem>>, %arg32: memref<64x32xf32, #tpu.memory_space<vmem>>, %arg33: memref<1x32xf32, #tpu.memory_space<vmem>>, %arg34: memref<32x64xf32, #tpu.memory_space<vmem>>, %arg35: memref<32x64xf32, #tpu.memory_space<vmem>>, %arg36: memref<1x64xf32, #tpu.memory_space<vmem>>, %arg37: memref<64x64xf32, #tpu.memory_space<vmem>>, %arg38: memref<1x64xf32, #tpu.memory_space<vmem>>, %arg39: memref<64x32xf32, #tpu.memory_space<vmem>>, %arg40: memref<1x32xf32, #tpu.memory_space<vmem>>, %arg41: memref<32x128xf32, #tpu.memory_space<vmem>>, %arg42: memref<1x128xf32, #tpu.memory_space<vmem>>, %arg43: memref<27x1xf32, #tpu.memory_space<vmem>>, %arg44: memref<32x128xf32, #tpu.memory_space<vmem>>, %arg45: memref<1x128xf32, #tpu.memory_space<vmem>>, %arg46: memref<27x1xf32, #tpu.memory_space<vmem>>, %arg47: memref<16x32xf32, #tpu.memory_space<vmem>>, %arg48: memref<24x32xf32, #tpu.memory_space<vmem>>, %arg49: memref<27x32xf32, #tpu.memory_space<vmem>>) attributes {dimension_semantics = [], scalar_prefetch = 0 : i64, scratch_operands = 0 : i64, tpu.core_type = #tpu.core_type<tc>} {
    %c0 = arith.constant 0 : index
    %c0_0 = arith.constant 0 : index
    %0 = vector.load %arg0[%c0, %c0_0] : memref<16x32xf32, #tpu.memory_space<vmem>>, vector<16x32xf32>
    %c0_1 = arith.constant 0 : index
    %c0_2 = arith.constant 0 : index
    %1 = vector.load %arg1[%c0_1, %c0_2] : memref<24x32xf32, #tpu.memory_space<vmem>>, vector<24x32xf32>
    %c0_3 = arith.constant 0 : index
    %c0_4 = arith.constant 0 : index
    %2 = vector.load %arg2[%c0_3, %c0_4] : memref<27x32xf32, #tpu.memory_space<vmem>>, vector<27x32xf32>
    %c0_5 = arith.constant 0 : index
    %c0_6 = arith.constant 0 : index
    %3 = vector.load %arg3[%c0_5, %c0_6] : memref<24x16xf32, #tpu.memory_space<vmem>>, vector<24x16xf32>
    %cst = arith.constant dense<0.000000e+00> : vector<24x32xf32>
    %4 = tpu.matmul %3, %0, %cst {dimension_numbers = #tpu.dot_dimension_numbers<[1], [0], [0], [1], [0, 0, 1, 1], [], []>} : vector<24x16xf32>, vector<16x32xf32>, vector<24x32xf32> -> vector<24x32xf32>
    %c0_7 = arith.constant 0 : index
    %c0_8 = arith.constant 0 : index
    %5 = vector.load %arg11[%c0_7, %c0_8] : memref<1x64xf32, #tpu.memory_space<vmem>>, vector<1x64xf32>
    %c0_9 = arith.constant 0 : index
    %c0_10 = arith.constant 0 : index
    %6 = vector.load %arg9[%c0_9, %c0_10] : memref<32x64xf32, #tpu.memory_space<vmem>>, vector<32x64xf32>
    %cst_11 = arith.constant dense<0.000000e+00> : vector<24x64xf32>
    %7 = tpu.matmul %1, %6, %cst_11 {dimension_numbers = #tpu.dot_dimension_numbers<[1], [0], [0], [1], [0, 0, 1, 1], [], []>} : vector<24x32xf32>, vector<32x64xf32>, vector<24x64xf32> -> vector<24x64xf32>
    %8 = vector.broadcast %5 : vector<1x64xf32> to vector<24x64xf32>
    %9 = arith.addf %8, %7 : vector<24x64xf32>
    %c0_12 = arith.constant 0 : index
    %c0_13 = arith.constant 0 : index
    %10 = vector.load %arg10[%c0_12, %c0_13] : memref<32x64xf32, #tpu.memory_space<vmem>>, vector<32x64xf32>
    %cst_14 = arith.constant dense<0.000000e+00> : vector<24x64xf32>
    %11 = tpu.matmul %4, %10, %cst_14 {dimension_numbers = #tpu.dot_dimension_numbers<[1], [0], [0], [1], [0, 0, 1, 1], [], []>} : vector<24x32xf32>, vector<32x64xf32>, vector<24x64xf32> -> vector<24x64xf32>
    %12 = arith.addf %9, %11 : vector<24x64xf32>
    %cst_15 = arith.constant 0.000000e+00 : f32
    %13 = vector.broadcast %cst_15 : f32 to vector<24x64xf32>
    %14 = arith.maximumf %12, %13 : vector<24x64xf32>
    %c0_16 = arith.constant 0 : index
    %c0_17 = arith.constant 0 : index
    %15 = vector.load %arg13[%c0_16, %c0_17] : memref<1x32xf32, #tpu.memory_space<vmem>>, vector<1x32xf32>
    %c0_18 = arith.constant 0 : index
    %c0_19 = arith.constant 0 : index
    %16 = vector.load %arg12[%c0_18, %c0_19] : memref<64x32xf32, #tpu.memory_space<vmem>>, vector<64x32xf32>
    %cst_20 = arith.constant dense<0.000000e+00> : vector<24x32xf32>
    %17 = tpu.matmul %14, %16, %cst_20 {dimension_numbers = #tpu.dot_dimension_numbers<[1], [0], [0], [1], [0, 0, 1, 1], [], []>} : vector<24x64xf32>, vector<64x32xf32>, vector<24x32xf32> -> vector<24x32xf32>
    %18 = vector.broadcast %15 : vector<1x32xf32> to vector<24x32xf32>
    %19 = arith.addf %18, %17 : vector<24x32xf32>
    %c0_21 = arith.constant 0 : index
    %c0_22 = arith.constant 0 : index
    %20 = vector.load %arg4[%c0_21, %c0_22] : memref<16x24xf32, #tpu.memory_space<vmem>>, vector<16x24xf32>
    %cst_23 = arith.constant dense<0.000000e+00> : vector<16x32xf32>
    %21 = tpu.matmul %20, %19, %cst_23 {dimension_numbers = #tpu.dot_dimension_numbers<[1], [0], [0], [1], [0, 0, 1, 1], [], []>} : vector<16x24xf32>, vector<24x32xf32>, vector<16x32xf32> -> vector<16x32xf32>
    %c0_24 = arith.constant 0 : index
    %c0_25 = arith.constant 0 : index
    %22 = vector.load %arg16[%c0_24, %c0_25] : memref<1x64xf32, #tpu.memory_space<vmem>>, vector<1x64xf32>
    %c0_26 = arith.constant 0 : index
    %c0_27 = arith.constant 0 : index
    %23 = vector.load %arg14[%c0_26, %c0_27] : memref<32x64xf32, #tpu.memory_space<vmem>>, vector<32x64xf32>
    %cst_28 = arith.constant dense<0.000000e+00> : vector<16x64xf32>
    %24 = tpu.matmul %0, %23, %cst_28 {dimension_numbers = #tpu.dot_dimension_numbers<[1], [0], [0], [1], [0, 0, 1, 1], [], []>} : vector<16x32xf32>, vector<32x64xf32>, vector<16x64xf32> -> vector<16x64xf32>
    %25 = vector.broadcast %22 : vector<1x64xf32> to vector<16x64xf32>
    %26 = arith.addf %25, %24 : vector<16x64xf32>
    %c0_29 = arith.constant 0 : index
    %c0_30 = arith.constant 0 : index
    %27 = vector.load %arg15[%c0_29, %c0_30] : memref<32x64xf32, #tpu.memory_space<vmem>>, vector<32x64xf32>
    %cst_31 = arith.constant dense<0.000000e+00> : vector<16x64xf32>
    %28 = tpu.matmul %21, %27, %cst_31 {dimension_numbers = #tpu.dot_dimension_numbers<[1], [0], [0], [1], [0, 0, 1, 1], [], []>} : vector<16x32xf32>, vector<32x64xf32>, vector<16x64xf32> -> vector<16x64xf32>
    %29 = arith.addf %26, %28 : vector<16x64xf32>
    %cst_32 = arith.constant 0.000000e+00 : f32
    %30 = vector.broadcast %cst_32 : f32 to vector<16x64xf32>
    %31 = arith.maximumf %29, %30 : vector<16x64xf32>
    %c0_33 = arith.constant 0 : index
    %c0_34 = arith.constant 0 : index
    %32 = vector.load %arg18[%c0_33, %c0_34] : memref<1x32xf32, #tpu.memory_space<vmem>>, vector<1x32xf32>
    %c0_35 = arith.constant 0 : index
    %c0_36 = arith.constant 0 : index
    %33 = vector.load %arg17[%c0_35, %c0_36] : memref<64x32xf32, #tpu.memory_space<vmem>>, vector<64x32xf32>
    %cst_37 = arith.constant dense<0.000000e+00> : vector<16x32xf32>
    %34 = tpu.matmul %31, %33, %cst_37 {dimension_numbers = #tpu.dot_dimension_numbers<[1], [0], [0], [1], [0, 0, 1, 1], [], []>} : vector<16x64xf32>, vector<64x32xf32>, vector<16x32xf32> -> vector<16x32xf32>
    %35 = vector.broadcast %32 : vector<1x32xf32> to vector<16x32xf32>
    %36 = arith.addf %35, %34 : vector<16x32xf32>
    %c0_38 = arith.constant 0 : index
    %c0_39 = arith.constant 0 : index
    %37 = vector.load %arg5[%c0_38, %c0_39] : memref<27x24xf32, #tpu.memory_space<vmem>>, vector<27x24xf32>
    %cst_40 = arith.constant dense<0.000000e+00> : vector<27x32xf32>
    %38 = tpu.matmul %37, %1, %cst_40 {dimension_numbers = #tpu.dot_dimension_numbers<[1], [0], [0], [1], [0, 0, 1, 1], [], []>} : vector<27x24xf32>, vector<24x32xf32>, vector<27x32xf32> -> vector<27x32xf32>
    %c0_41 = arith.constant 0 : index
    %c0_42 = arith.constant 0 : index
    %39 = vector.load %arg6[%c0_41, %c0_42] : memref<27x24xf32, #tpu.memory_space<vmem>>, vector<27x24xf32>
    %cst_43 = arith.constant dense<0.000000e+00> : vector<27x32xf32>
    %40 = tpu.matmul %39, %1, %cst_43 {dimension_numbers = #tpu.dot_dimension_numbers<[1], [0], [0], [1], [0, 0, 1, 1], [], []>} : vector<27x24xf32>, vector<24x32xf32>, vector<27x32xf32> -> vector<27x32xf32>
    %c0_44 = arith.constant 0 : index
    %c0_45 = arith.constant 0 : index
    %41 = vector.load %arg43[%c0_44, %c0_45] : memref<27x1xf32, #tpu.memory_space<vmem>>, vector<27x1xf32>
    %c0_46 = arith.constant 0 : index
    %c0_47 = arith.constant 0 : index
    %42 = vector.load %arg41[%c0_46, %c0_47] : memref<32x128xf32, #tpu.memory_space<vmem>>, vector<32x128xf32>
    %cst_48 = arith.constant dense<0.000000e+00> : vector<27x128xf32>
    %43 = tpu.matmul %38, %42, %cst_48 {dimension_numbers = #tpu.dot_dimension_numbers<[1], [0], [0], [1], [0, 0, 1, 1], [], []>} : vector<27x32xf32>, vector<32x128xf32>, vector<27x128xf32> -> vector<27x128xf32>
    %c0_49 = arith.constant 0 : index
    %c0_50 = arith.constant 0 : index
    %44 = vector.load %arg42[%c0_49, %c0_50] : memref<1x128xf32, #tpu.memory_space<vmem>>, vector<1x128xf32>
    %45 = vector.broadcast %44 : vector<1x128xf32> to vector<27x128xf32>
    %46 = arith.addf %43, %45 : vector<27x128xf32>
    %47 = vector.broadcast %41 : vector<27x1xf32> to vector<27x128xf32>
    %48 = arith.mulf %47, %46 : vector<27x128xf32>
    %c0_51 = arith.constant 0 : index
    %c0_52 = arith.constant 0 : index
    %49 = vector.load %arg46[%c0_51, %c0_52] : memref<27x1xf32, #tpu.memory_space<vmem>>, vector<27x1xf32>
    %c0_53 = arith.constant 0 : index
    %c0_54 = arith.constant 0 : index
    %50 = vector.load %arg44[%c0_53, %c0_54] : memref<32x128xf32, #tpu.memory_space<vmem>>, vector<32x128xf32>
    %cst_55 = arith.constant dense<0.000000e+00> : vector<27x128xf32>
    %51 = tpu.matmul %38, %50, %cst_55 {dimension_numbers = #tpu.dot_dimension_numbers<[1], [0], [0], [1], [0, 0, 1, 1], [], []>} : vector<27x32xf32>, vector<32x128xf32>, vector<27x128xf32> -> vector<27x128xf32>
    %c0_56 = arith.constant 0 : index
    %c0_57 = arith.constant 0 : index
    %52 = vector.load %arg45[%c0_56, %c0_57] : memref<1x128xf32, #tpu.memory_space<vmem>>, vector<1x128xf32>
    %53 = vector.broadcast %52 : vector<1x128xf32> to vector<27x128xf32>
    %54 = arith.addf %51, %53 : vector<27x128xf32>
    %55 = vector.broadcast %49 : vector<27x1xf32> to vector<27x128xf32>
    %56 = arith.mulf %55, %54 : vector<27x128xf32>
    %57 = arith.addf %48, %56 : vector<27x128xf32>
    %c0_58 = arith.constant 0 : index
    %c0_59 = arith.constant 0 : index
    %58 = vector.load %arg23[%c0_58, %c0_59] : memref<1x64xf32, #tpu.memory_space<vmem>>, vector<1x64xf32>
    %c0_60 = arith.constant 0 : index
    %c0_61 = arith.constant 0 : index
    %59 = vector.load %arg19[%c0_60, %c0_61] : memref<32x64xf32, #tpu.memory_space<vmem>>, vector<32x64xf32>
    %cst_62 = arith.constant dense<0.000000e+00> : vector<27x64xf32>
    %60 = tpu.matmul %2, %59, %cst_62 {dimension_numbers = #tpu.dot_dimension_numbers<[1], [0], [0], [1], [0, 0, 1, 1], [], []>} : vector<27x32xf32>, vector<32x64xf32>, vector<27x64xf32> -> vector<27x64xf32>
    %61 = vector.broadcast %58 : vector<1x64xf32> to vector<27x64xf32>
    %62 = arith.addf %61, %60 : vector<27x64xf32>
    %c0_63 = arith.constant 0 : index
    %c0_64 = arith.constant 0 : index
    %63 = vector.load %arg20[%c0_63, %c0_64] : memref<128x64xf32, #tpu.memory_space<vmem>>, vector<128x64xf32>
    %cst_65 = arith.constant dense<0.000000e+00> : vector<27x64xf32>
    %64 = tpu.matmul %57, %63, %cst_65 {dimension_numbers = #tpu.dot_dimension_numbers<[1], [0], [0], [1], [0, 0, 1, 1], [], []>} : vector<27x128xf32>, vector<128x64xf32>, vector<27x64xf32> -> vector<27x64xf32>
    %65 = arith.addf %62, %64 : vector<27x64xf32>
    %c0_66 = arith.constant 0 : index
    %c0_67 = arith.constant 0 : index
    %66 = vector.load %arg21[%c0_66, %c0_67] : memref<32x64xf32, #tpu.memory_space<vmem>>, vector<32x64xf32>
    %cst_68 = arith.constant dense<0.000000e+00> : vector<27x64xf32>
    %67 = tpu.matmul %40, %66, %cst_68 {dimension_numbers = #tpu.dot_dimension_numbers<[1], [0], [0], [1], [0, 0, 1, 1], [], []>} : vector<27x32xf32>, vector<32x64xf32>, vector<27x64xf32> -> vector<27x64xf32>
    %68 = arith.addf %65, %67 : vector<27x64xf32>
    %c0_69 = arith.constant 0 : index
    %c0_70 = arith.constant 0 : index
    %69 = vector.load %arg22[%c0_69, %c0_70] : memref<32x64xf32, #tpu.memory_space<vmem>>, vector<32x64xf32>
    %cst_71 = arith.constant dense<0.000000e+00> : vector<27x64xf32>
    %70 = tpu.matmul %38, %69, %cst_71 {dimension_numbers = #tpu.dot_dimension_numbers<[1], [0], [0], [1], [0, 0, 1, 1], [], []>} : vector<27x32xf32>, vector<32x64xf32>, vector<27x64xf32> -> vector<27x64xf32>
    %71 = arith.addf %68, %70 : vector<27x64xf32>
    %cst_72 = arith.constant 0.000000e+00 : f32
    %72 = vector.broadcast %cst_72 : f32 to vector<27x64xf32>
    %73 = arith.maximumf %71, %72 : vector<27x64xf32>
    %c0_73 = arith.constant 0 : index
    %c0_74 = arith.constant 0 : index
    %74 = vector.load %arg25[%c0_73, %c0_74] : memref<1x64xf32, #tpu.memory_space<vmem>>, vector<1x64xf32>
    %c0_75 = arith.constant 0 : index
    %c0_76 = arith.constant 0 : index
    %75 = vector.load %arg24[%c0_75, %c0_76] : memref<64x64xf32, #tpu.memory_space<vmem>>, vector<64x64xf32>
    %cst_77 = arith.constant dense<0.000000e+00> : vector<27x64xf32>
    %76 = tpu.matmul %73, %75, %cst_77 {dimension_numbers = #tpu.dot_dimension_numbers<[1], [0], [0], [1], [0, 0, 1, 1], [], []>} : vector<27x64xf32>, vector<64x64xf32>, vector<27x64xf32> -> vector<27x64xf32>
    %77 = vector.broadcast %74 : vector<1x64xf32> to vector<27x64xf32>
    %78 = arith.addf %77, %76 : vector<27x64xf32>
    %cst_78 = arith.constant 0.000000e+00 : f32
    %79 = vector.broadcast %cst_78 : f32 to vector<27x64xf32>
    %80 = arith.maximumf %78, %79 : vector<27x64xf32>
    %c0_79 = arith.constant 0 : index
    %c0_80 = arith.constant 0 : index
    %81 = vector.load %arg27[%c0_79, %c0_80] : memref<1x32xf32, #tpu.memory_space<vmem>>, vector<1x32xf32>
    %c0_81 = arith.constant 0 : index
    %c0_82 = arith.constant 0 : index
    %82 = vector.load %arg26[%c0_81, %c0_82] : memref<64x32xf32, #tpu.memory_space<vmem>>, vector<64x32xf32>
    %cst_83 = arith.constant dense<0.000000e+00> : vector<27x32xf32>
    %83 = tpu.matmul %80, %82, %cst_83 {dimension_numbers = #tpu.dot_dimension_numbers<[1], [0], [0], [1], [0, 0, 1, 1], [], []>} : vector<27x64xf32>, vector<64x32xf32>, vector<27x32xf32> -> vector<27x32xf32>
    %84 = vector.broadcast %81 : vector<1x32xf32> to vector<27x32xf32>
    %85 = arith.addf %84, %83 : vector<27x32xf32>
    %c0_84 = arith.constant 0 : index
    %c0_85 = arith.constant 0 : index
    %86 = vector.load %arg8[%c0_84, %c0_85] : memref<24x27xf32, #tpu.memory_space<vmem>>, vector<24x27xf32>
    %cst_86 = arith.constant dense<0.000000e+00> : vector<24x32xf32>
    %87 = tpu.matmul %86, %85, %cst_86 {dimension_numbers = #tpu.dot_dimension_numbers<[1], [0], [0], [1], [0, 0, 1, 1], [], []>} : vector<24x27xf32>, vector<27x32xf32>, vector<24x32xf32> -> vector<24x32xf32>
    %c0_87 = arith.constant 0 : index
    %c0_88 = arith.constant 0 : index
    %88 = vector.load %arg7[%c0_87, %c0_88] : memref<24x27xf32, #tpu.memory_space<vmem>>, vector<24x27xf32>
    %cst_89 = arith.constant dense<0.000000e+00> : vector<24x32xf32>
    %89 = tpu.matmul %88, %85, %cst_89 {dimension_numbers = #tpu.dot_dimension_numbers<[1], [0], [0], [1], [0, 0, 1, 1], [], []>} : vector<24x27xf32>, vector<27x32xf32>, vector<24x32xf32> -> vector<24x32xf32>
    %c0_90 = arith.constant 0 : index
    %c0_91 = arith.constant 0 : index
    %90 = vector.load %arg31[%c0_90, %c0_91] : memref<1x64xf32, #tpu.memory_space<vmem>>, vector<1x64xf32>
    %c0_92 = arith.constant 0 : index
    %c0_93 = arith.constant 0 : index
    %91 = vector.load %arg28[%c0_92, %c0_93] : memref<32x64xf32, #tpu.memory_space<vmem>>, vector<32x64xf32>
    %cst_94 = arith.constant dense<0.000000e+00> : vector<24x64xf32>
    %92 = tpu.matmul %1, %91, %cst_94 {dimension_numbers = #tpu.dot_dimension_numbers<[1], [0], [0], [1], [0, 0, 1, 1], [], []>} : vector<24x32xf32>, vector<32x64xf32>, vector<24x64xf32> -> vector<24x64xf32>
    %93 = vector.broadcast %90 : vector<1x64xf32> to vector<24x64xf32>
    %94 = arith.addf %93, %92 : vector<24x64xf32>
    %c0_95 = arith.constant 0 : index
    %c0_96 = arith.constant 0 : index
    %95 = vector.load %arg29[%c0_95, %c0_96] : memref<32x64xf32, #tpu.memory_space<vmem>>, vector<32x64xf32>
    %cst_97 = arith.constant dense<0.000000e+00> : vector<24x64xf32>
    %96 = tpu.matmul %87, %95, %cst_97 {dimension_numbers = #tpu.dot_dimension_numbers<[1], [0], [0], [1], [0, 0, 1, 1], [], []>} : vector<24x32xf32>, vector<32x64xf32>, vector<24x64xf32> -> vector<24x64xf32>
    %97 = arith.addf %94, %96 : vector<24x64xf32>
    %c0_98 = arith.constant 0 : index
    %c0_99 = arith.constant 0 : index
    %98 = vector.load %arg30[%c0_98, %c0_99] : memref<32x64xf32, #tpu.memory_space<vmem>>, vector<32x64xf32>
    %cst_100 = arith.constant dense<0.000000e+00> : vector<24x64xf32>
    %99 = tpu.matmul %89, %98, %cst_100 {dimension_numbers = #tpu.dot_dimension_numbers<[1], [0], [0], [1], [0, 0, 1, 1], [], []>} : vector<24x32xf32>, vector<32x64xf32>, vector<24x64xf32> -> vector<24x64xf32>
    %100 = arith.addf %97, %99 : vector<24x64xf32>
    %cst_101 = arith.constant 0.000000e+00 : f32
    %101 = vector.broadcast %cst_101 : f32 to vector<24x64xf32>
    %102 = arith.maximumf %100, %101 : vector<24x64xf32>
    %c0_102 = arith.constant 0 : index
    %c0_103 = arith.constant 0 : index
    %103 = vector.load %arg33[%c0_102, %c0_103] : memref<1x32xf32, #tpu.memory_space<vmem>>, vector<1x32xf32>
    %c0_104 = arith.constant 0 : index
    %c0_105 = arith.constant 0 : index
    %104 = vector.load %arg32[%c0_104, %c0_105] : memref<64x32xf32, #tpu.memory_space<vmem>>, vector<64x32xf32>
    %cst_106 = arith.constant dense<0.000000e+00> : vector<24x32xf32>
    %105 = tpu.matmul %102, %104, %cst_106 {dimension_numbers = #tpu.dot_dimension_numbers<[1], [0], [0], [1], [0, 0, 1, 1], [], []>} : vector<24x64xf32>, vector<64x32xf32>, vector<24x32xf32> -> vector<24x32xf32>
    %106 = vector.broadcast %103 : vector<1x32xf32> to vector<24x32xf32>
    %107 = arith.addf %106, %105 : vector<24x32xf32>
    %c0_107 = arith.constant 0 : index
    %c0_108 = arith.constant 0 : index
    %108 = vector.load %arg36[%c0_107, %c0_108] : memref<1x64xf32, #tpu.memory_space<vmem>>, vector<1x64xf32>
    %c0_109 = arith.constant 0 : index
    %c0_110 = arith.constant 0 : index
    %109 = vector.load %arg34[%c0_109, %c0_110] : memref<32x64xf32, #tpu.memory_space<vmem>>, vector<32x64xf32>
    %cst_111 = arith.constant dense<0.000000e+00> : vector<24x64xf32>
    %110 = tpu.matmul %19, %109, %cst_111 {dimension_numbers = #tpu.dot_dimension_numbers<[1], [0], [0], [1], [0, 0, 1, 1], [], []>} : vector<24x32xf32>, vector<32x64xf32>, vector<24x64xf32> -> vector<24x64xf32>
    %111 = vector.broadcast %108 : vector<1x64xf32> to vector<24x64xf32>
    %112 = arith.addf %111, %110 : vector<24x64xf32>
    %c0_112 = arith.constant 0 : index
    %c0_113 = arith.constant 0 : index
    %113 = vector.load %arg35[%c0_112, %c0_113] : memref<32x64xf32, #tpu.memory_space<vmem>>, vector<32x64xf32>
    %cst_114 = arith.constant dense<0.000000e+00> : vector<24x64xf32>
    %114 = tpu.matmul %107, %113, %cst_114 {dimension_numbers = #tpu.dot_dimension_numbers<[1], [0], [0], [1], [0, 0, 1, 1], [], []>} : vector<24x32xf32>, vector<32x64xf32>, vector<24x64xf32> -> vector<24x64xf32>
    %115 = arith.addf %112, %114 : vector<24x64xf32>
    %cst_115 = arith.constant 0.000000e+00 : f32
    %116 = vector.broadcast %cst_115 : f32 to vector<24x64xf32>
    %117 = arith.maximumf %115, %116 : vector<24x64xf32>
    %c0_116 = arith.constant 0 : index
    %c0_117 = arith.constant 0 : index
    %118 = vector.load %arg38[%c0_116, %c0_117] : memref<1x64xf32, #tpu.memory_space<vmem>>, vector<1x64xf32>
    %c0_118 = arith.constant 0 : index
    %c0_119 = arith.constant 0 : index
    %119 = vector.load %arg37[%c0_118, %c0_119] : memref<64x64xf32, #tpu.memory_space<vmem>>, vector<64x64xf32>
    %cst_120 = arith.constant dense<0.000000e+00> : vector<24x64xf32>
    %120 = tpu.matmul %117, %119, %cst_120 {dimension_numbers = #tpu.dot_dimension_numbers<[1], [0], [0], [1], [0, 0, 1, 1], [], []>} : vector<24x64xf32>, vector<64x64xf32>, vector<24x64xf32> -> vector<24x64xf32>
    %121 = vector.broadcast %118 : vector<1x64xf32> to vector<24x64xf32>
    %122 = arith.addf %121, %120 : vector<24x64xf32>
    %cst_121 = arith.constant 0.000000e+00 : f32
    %123 = vector.broadcast %cst_121 : f32 to vector<24x64xf32>
    %124 = arith.maximumf %122, %123 : vector<24x64xf32>
    %c0_122 = arith.constant 0 : index
    %c0_123 = arith.constant 0 : index
    %125 = vector.load %arg40[%c0_122, %c0_123] : memref<1x32xf32, #tpu.memory_space<vmem>>, vector<1x32xf32>
    %c0_124 = arith.constant 0 : index
    %c0_125 = arith.constant 0 : index
    %126 = vector.load %arg39[%c0_124, %c0_125] : memref<64x32xf32, #tpu.memory_space<vmem>>, vector<64x32xf32>
    %cst_126 = arith.constant dense<0.000000e+00> : vector<24x32xf32>
    %127 = tpu.matmul %124, %126, %cst_126 {dimension_numbers = #tpu.dot_dimension_numbers<[1], [0], [0], [1], [0, 0, 1, 1], [], []>} : vector<24x64xf32>, vector<64x32xf32>, vector<24x32xf32> -> vector<24x32xf32>
    %128 = vector.broadcast %125 : vector<1x32xf32> to vector<24x32xf32>
    %129 = arith.addf %128, %127 : vector<24x32xf32>
    %130 = arith.addf %0, %36 : vector<16x32xf32>
    %c0_127 = arith.constant 0 : index
    %c0_128 = arith.constant 0 : index
    %131 = vector.load %arg47[%c0_127, %c0_128] : memref<16x32xf32, #tpu.memory_space<vmem>>, vector<16x32xf32>
    tpu.vector_store %arg47[%c0_127, %c0_128], %130 {strides = array<i32>} : memref<16x32xf32, #tpu.memory_space<vmem>>, vector<16x32xf32>,
    %132 = arith.addf %1, %129 : vector<24x32xf32>
    %c0_129 = arith.constant 0 : index
    %c0_130 = arith.constant 0 : index
    %133 = vector.load %arg48[%c0_129, %c0_130] : memref<24x32xf32, #tpu.memory_space<vmem>>, vector<24x32xf32>
    tpu.vector_store %arg48[%c0_129, %c0_130], %132 {strides = array<i32>} : memref<24x32xf32, #tpu.memory_space<vmem>>, vector<24x32xf32>,
    %134 = arith.addf %2, %85 : vector<27x32xf32>
    %c0_131 = arith.constant 0 : index
    %c0_132 = arith.constant 0 : index
    %135 = vector.load %arg49[%c0_131, %c0_132] : memref<27x32xf32, #tpu.memory_space<vmem>>, vector<27x32xf32>
    tpu.vector_store %arg49[%c0_131, %c0_132], %134 {strides = array<i32>} : memref<27x32xf32, #tpu.memory_space<vmem>>, vector<27x32xf32>,
    return
  }
}

</mosaic_0001>

<llo_original>
// kernel: conv_layer_forward.1
$region0: #{conv_layer_forward.1}
  #allocation0 [shape = 'u32[]', space=smem, size = 0x4, offset = 0x4, fixed_abs, tag = 'smem constant byte address 0x4 - core index']
  #allocation1 [shape = 'u32[144,128]{1,0:T(1,128)}', space=vmem, size = 0x12000, scoped, tag = 'internal scratch']
  %s0 = inlined_call_operand.smem [shape: u32[50], index: -1, kind: input, shape index: {}]
  %s1 = sld [smem:[%s0]]
  %s2 = scalar_lea.smem %s0, 1
  %s3 = sld [smem:[%s2]]
  %s4 = scalar_lea.smem %s0, 2
  %s5 = sld [smem:[%s4]]
  %s6 = scalar_lea.smem %s0, 3
  %s7 = sld [smem:[%s6]]
  %s8 = scalar_lea.smem %s0, 4
  %s9 = sld [smem:[%s8]]
  %s10 = scalar_lea.smem %s0, 5
  %s11 = sld [smem:[%s10]]
  %s12 = scalar_lea.smem %s0, 6
  %s13 = sld [smem:[%s12]]
  %s14 = scalar_lea.smem %s0, 7
  %s15 = sld [smem:[%s14]]
  %s16 = scalar_lea.smem %s0, 8
  %s17 = sld [smem:[%s16]]
  %s18 = scalar_lea.smem %s0, 9
  %s19 = sld [smem:[%s18]]
  %s20 = scalar_lea.smem %s0, 10
  %s21 = sld [smem:[%s20]]
  %s22 = scalar_lea.smem %s0, 11
  %s23 = sld [smem:[%s22]]
  %s24 = scalar_lea.smem %s0, 12
  %s25 = sld [smem:[%s24]]
  %s26 = scalar_lea.smem %s0, 13
  %s27 = sld [smem:[%s26]]
  %s28 = scalar_lea.smem %s0, 14
  %s29 = sld [smem:[%s28]]
  %s30 = scalar_lea.smem %s0, 15
  %s31 = sld [smem:[%s30]]
  %s32 = scalar_lea.smem %s0, 16
  %s33 = sld [smem:[%s32]]
  %s34 = scalar_lea.smem %s0, 17
  %s35 = sld [smem:[%s34]]
  %s36 = scalar_lea.smem %s0, 18
  %s37 = sld [smem:[%s36]]
  %s38 = scalar_lea.smem %s0, 19
  %s39 = sld [smem:[%s38]]
  %s40 = scalar_lea.smem %s0, 20
  %s41 = sld [smem:[%s40]]
  %s42 = scalar_lea.smem %s0, 21
  %s43 = sld [smem:[%s42]]
  %s44 = scalar_lea.smem %s0, 22
  %s45 = sld [smem:[%s44]]
  %s46 = scalar_lea.smem %s0, 23
  %s47 = sld [smem:[%s46]]
  %s48 = scalar_lea.smem %s0, 24
  %s49 = sld [smem:[%s48]]
  %s50 = scalar_lea.smem %s0, 25
  %s51 = sld [smem:[%s50]]
  %s52 = scalar_lea.smem %s0, 26
  %s53 = sld [smem:[%s52]]
  %s54 = scalar_lea.smem %s0, 27
  %s55 = sld [smem:[%s54]]
  %s56 = scalar_lea.smem %s0, 28
  %s57 = sld [smem:[%s56]]
  %s58 = scalar_lea.smem %s0, 29
  %s59 = sld [smem:[%s58]]
  %s60 = scalar_lea.smem %s0, 30
  %s61 = sld [smem:[%s60]]
  %s62 = scalar_lea.smem %s0, 31
  %s63 = sld [smem:[%s62]]
  %s64 = scalar_lea.smem %s0, 32
  %s65 = sld [smem:[%s64]]
  %s66 = scalar_lea.smem %s0, 33
  %s67 = sld [smem:[%s66]]
  %s68 = scalar_lea.smem %s0, 34
  %s69 = sld [smem:[%s68]]
  %s70 = scalar_lea.smem %s0, 35
  %s71 = sld [smem:[%s70]]
  %s72 = scalar_lea.smem %s0, 36
  %s73 = sld [smem:[%s72]]
  %s74 = scalar_lea.smem %s0, 37
  %s75 = sld [smem:[%s74]]
  %s76 = scalar_lea.smem %s0, 38
  %s77 = sld [smem:[%s76]]
  %s78 = scalar_lea.smem %s0, 39
  %s79 = sld [smem:[%s78]]
  %s80 = scalar_lea.smem %s0, 40
  %s81 = sld [smem:[%s80]]
  %s82 = scalar_lea.smem %s0, 41
  %s83 = sld [smem:[%s82]]
  %s84 = scalar_lea.smem %s0, 42
  %s85 = sld [smem:[%s84]]
  %s86 = scalar_lea.smem %s0, 43
  %s87 = sld [smem:[%s86]]
  %s88 = scalar_lea.smem %s0, 44
  %s89 = sld [smem:[%s88]]
  %s90 = scalar_lea.smem %s0, 45
  %s91 = sld [smem:[%s90]]
  %s92 = scalar_lea.smem %s0, 46
  %s93 = sld [smem:[%s92]]
  %s94 = scalar_lea.smem %s0, 47
  %s95 = sld [smem:[%s94]]
  %s96 = scalar_lea.smem %s0, 48
  %s97 = sld [smem:[%s96]]
  %s98 = scalar_lea.smem %s0, 49
  %s99 = sld [smem:[%s98]]
  %100 = xla_tuple %s95, %s97, %s99
  %s101 = sld [smem:[#allocation0]]
  $region214: #{conv_layer_forward.1} parent=0
    _
  %s103 = ssub.s32 1, %s101
  %s104 = scalar_select 0, %s103, %s101
  $region1: #{conv_layer_forward.1} parent=0
    #allocation2 [shape = 'u8[8192]{0}', space=vmem, size = 0x2000, scoped, tag = 'output window, operand 0, single buffered']
    #allocation3 [shape = 's32[1]{0}', space=sflag, size = 0x4, scoped, tag = 'scoped memory for conv_layer_forward.1']
    #allocation4 [shape = 'u8[12288]{0}', space=vmem, size = 0x3000, scoped, tag = 'output window, operand 1, single buffered']
    #allocation5 [shape = 's32[1]{0}', space=sflag, size = 0x4, scoped, tag = 'scoped memory for conv_layer_forward.1']
    #allocation6 [shape = 'u8[16384]{0}', space=vmem, size = 0x4000, scoped, tag = 'output window, operand 2, single buffered']
    %105 = vsyncpa [#allocation3], 0
    %106 = vsyncpa [#allocation5], 0
    // Predicated region
    $region2: #{conv_layer_forward.1} parent=1 // pred_check
      _
    $region3: #{conv_layer_forward.1} parent=1 // pred_check_branch
      %108 = sbr.rel (0) target = $region5
    $region4: #{conv_layer_forward.1} parent=1 // pred_region
      _
    $region5: #{conv_layer_forward.1} parent=1 // pred_fallthru
      _
    // Predicated region
    $region6: #{conv_layer_forward.1} parent=1 // pred_check
      _
    $region7: #{conv_layer_forward.1} parent=1 // pred_check_branch
      %110 = sbr.rel (0) target = $region9
    $region8: #{conv_layer_forward.1} parent=1 // pred_region
      _
    $region9: #{conv_layer_forward.1} parent=1 // pred_fallthru
      _
    // Predicated region
    $region10: #{conv_layer_forward.1} parent=1 // pred_check
      _
    $region11: #{conv_layer_forward.1} parent=1 // pred_check_branch
      %112 = sbr.rel (0) target = $region13
    $region12: #{conv_layer_forward.1} parent=1 // pred_region
      _
    $region13: #{conv_layer_forward.1} parent=1 // pred_fallthru
      _
    // Predicated region
    $region14: #{conv_layer_forward.1} parent=1 // pred_check
      _
    $region15: #{conv_layer_forward.1} parent=1 // pred_check_branch
      %114 = sbr.rel (0) target = $region17
    $region16: #{conv_layer_forward.1} parent=1 // pred_region
      _
    $region17: #{conv_layer_forward.1} parent=1 // pred_fallthru
      _
    // Predicated region
    $region18: #{conv_layer_forward.1} parent=1 // pred_check
      _
    $region19: #{conv_layer_forward.1} parent=1 // pred_check_branch
      %116 = sbr.rel (0) target = $region21
    $region20: #{conv_layer_forward.1} parent=1 // pred_region
      _
    $region21: #{conv_layer_forward.1} parent=1 // pred_fallthru
      _
    // Predicated region
    $region22: #{conv_layer_forward.1} parent=1 // pred_check
      _
    $region23: #{conv_layer_forward.1} parent=1 // pred_check_branch
      %118 = sbr.rel (0) target = $region25
    $region24: #{conv_layer_forward.1} parent=1 // pred_region
      _
    $region25: #{conv_layer_forward.1} parent=1 // pred_fallthru
      _
    // Predicated region
    $region26: #{conv_layer_forward.1} parent=1 // pred_check
      _
    $region27: #{conv_layer_forward.1} parent=1 // pred_check_branch
      %120 = sbr.rel (0) target = $region29
    $region28: #{conv_layer_forward.1} parent=1 // pred_region
      _
    $region29: #{conv_layer_forward.1} parent=1 // pred_fallthru
      _
    // Predicated region
    $region30: #{conv_layer_forward.1} parent=1 // pred_check
      _
    $region31: #{conv_layer_forward.1} parent=1 // pred_check_branch
      %122 = sbr.rel (0) target = $region33
    $region32: #{conv_layer_forward.1} parent=1 // pred_region
      _
    $region33: #{conv_layer_forward.1} parent=1 // pred_fallthru
      _
    // Predicated region
    $region34: #{conv_layer_forward.1} parent=1 // pred_check
      _
    $region35: #{conv_layer_forward.1} parent=1 // pred_check_branch
      %124 = sbr.rel (0) target = $region37
    $region36: #{conv_layer_forward.1} parent=1 // pred_region
      _
    $region37: #{conv_layer_forward.1} parent=1 // pred_fallthru
      _
    // Predicated region
    $region38: #{conv_layer_forward.1} parent=1 // pred_check
      _
    $region39: #{conv_layer_forward.1} parent=1 // pred_check_branch
      %126 = sbr.rel (0) target = $region41
    $region40: #{conv_layer_forward.1} parent=1 // pred_region
      _
    $region41: #{conv_layer_forward.1} parent=1 // pred_fallthru
      _
    // Predicated region
    $region42: #{conv_layer_forward.1} parent=1 // pred_check
      _
    $region43: #{conv_layer_forward.1} parent=1 // pred_check_branch
      %128 = sbr.rel (0) target = $region45
    $region44: #{conv_layer_forward.1} parent=1 // pred_region
      _
    $region45: #{conv_layer_forward.1} parent=1 // pred_fallthru
      _
    // Predicated region
    $region46: #{conv_layer_forward.1} parent=1 // pred_check
      _
    $region47: #{conv_layer_forward.1} parent=1 // pred_check_branch
      %130 = sbr.rel (0) target = $region49
    $region48: #{conv_layer_forward.1} parent=1 // pred_region
      _
    $region49: #{conv_layer_forward.1} parent=1 // pred_fallthru
      _
    // Predicated region
    $region50: #{conv_layer_forward.1} parent=1 // pred_check
      _
    $region51: #{conv_layer_forward.1} parent=1 // pred_check_branch
      %132 = sbr.rel (0) target = $region53
    $region52: #{conv_layer_forward.1} parent=1 // pred_region
      _
    $region53: #{conv_layer_forward.1} parent=1 // pred_fallthru
      _
    // Predicated region
    $region54: #{conv_layer_forward.1} parent=1 // pred_check
      _
    $region55: #{conv_layer_forward.1} parent=1 // pred_check_branch
      %134 = sbr.rel (0) target = $region57
    $region56: #{conv_layer_forward.1} parent=1 // pred_region
      _
    $region57: #{conv_layer_forward.1} parent=1 // pred_fallthru
      _
    // Predicated region
    $region58: #{conv_layer_forward.1} parent=1 // pred_check
      _
    $region59: #{conv_layer_forward.1} parent=1 // pred_check_branch
      %136 = sbr.rel (0) target = $region61
    $region60: #{conv_layer_forward.1} parent=1 // pred_region
      _
    $region61: #{conv_layer_forward.1} parent=1 // pred_fallthru
      _
    // Predicated region
    $region62: #{conv_layer_forward.1} parent=1 // pred_check
      _
    $region63: #{conv_layer_forward.1} parent=1 // pred_check_branch
      %138 = sbr.rel (0) target = $region65
    $region64: #{conv_layer_forward.1} parent=1 // pred_region
      _
    $region65: #{conv_layer_forward.1} parent=1 // pred_fallthru
      _
    // Predicated region
    $region66: #{conv_layer_forward.1} parent=1 // pred_check
      _
    $region67: #{conv_layer_forward.1} parent=1 // pred_check_branch
      %140 = sbr.rel (0) target = $region69
    $region68: #{conv_layer_forward.1} parent=1 // pred_region
      _
    $region69: #{conv_layer_forward.1} parent=1 // pred_fallthru
      _
    // Predicated region
    $region70: #{conv_layer_forward.1} parent=1 // pred_check
      _
    $region71: #{conv_layer_forward.1} parent=1 // pred_check_branch
      %142 = sbr.rel (0) target = $region73
    $region72: #{conv_layer_forward.1} parent=1 // pred_region
      _
    $region73: #{conv_layer_forward.1} parent=1 // pred_fallthru
      _
    // Predicated region
    $region74: #{conv_layer_forward.1} parent=1 // pred_check
      _
    $region75: #{conv_layer_forward.1} parent=1 // pred_check_branch
      %144 = sbr.rel (0) target = $region77
    $region76: #{conv_layer_forward.1} parent=1 // pred_region
      _
    $region77: #{conv_layer_forward.1} parent=1 // pred_fallthru
      _
    // Predicated region
    $region78: #{conv_layer_forward.1} parent=1 // pred_check
      _
    $region79: #{conv_layer_forward.1} parent=1 // pred_check_branch
      %146 = sbr.rel (0) target = $region81
    $region80: #{conv_layer_forward.1} parent=1 // pred_region
      _
    $region81: #{conv_layer_forward.1} parent=1 // pred_fallthru
      _
    // Predicated region
    $region82: #{conv_layer_forward.1} parent=1 // pred_check
      _
    $region83: #{conv_layer_forward.1} parent=1 // pred_check_branch
      %148 = sbr.rel (0) target = $region85
    $region84: #{conv_layer_forward.1} parent=1 // pred_region
      _
    $region85: #{conv_layer_forward.1} parent=1 // pred_fallthru
      _
    // Predicated region
    $region86: #{conv_layer_forward.1} parent=1 // pred_check
      _
    $region87: #{conv_layer_forward.1} parent=1 // pred_check_branch
      %150 = sbr.rel (0) target = $region89
    $region88: #{conv_layer_forward.1} parent=1 // pred_region
      _
    $region89: #{conv_layer_forward.1} parent=1 // pred_fallthru
      _
    // Predicated region
    $region90: #{conv_layer_forward.1} parent=1 // pred_check
      _
    $region91: #{conv_layer_forward.1} parent=1 // pred_check_branch
      %152 = sbr.rel (0) target = $region93
    $region92: #{conv_layer_forward.1} parent=1 // pred_region
      _
    $region93: #{conv_layer_forward.1} parent=1 // pred_fallthru
      _
    // Predicated region
    $region94: #{conv_layer_forward.1} parent=1 // pred_check
      _
    $region95: #{conv_layer_forward.1} parent=1 // pred_check_branch
      %154 = sbr.rel (0) target = $region97
    $region96: #{conv_layer_forward.1} parent=1 // pred_region
      _
    $region97: #{conv_layer_forward.1} parent=1 // pred_fallthru
      _
    // Predicated region
    $region98: #{conv_layer_forward.1} parent=1 // pred_check
      _
    $region99: #{conv_layer_forward.1} parent=1 // pred_check_branch
      %156 = sbr.rel (0) target = $region101
    $region100: #{conv_layer_forward.1} parent=1 // pred_region
      _
    $region101: #{conv_layer_forward.1} parent=1 // pred_fallthru
      _
    // Predicated region
    $region102: #{conv_layer_forward.1} parent=1 // pred_check
      _
    $region103: #{conv_layer_forward.1} parent=1 // pred_check_branch
      %158 = sbr.rel (0) target = $region105
    $region104: #{conv_layer_forward.1} parent=1 // pred_region
      _
    $region105: #{conv_layer_forward.1} parent=1 // pred_fallthru
      _
    // Predicated region
    $region106: #{conv_layer_forward.1} parent=1 // pred_check
      _
    $region107: #{conv_layer_forward.1} parent=1 // pred_check_branch
      %160 = sbr.rel (0) target = $region109
    $region108: #{conv_layer_forward.1} parent=1 // pred_region
      _
    $region109: #{conv_layer_forward.1} parent=1 // pred_fallthru
      _
    // Predicated region
    $region110: #{conv_layer_forward.1} parent=1 // pred_check
      _
    $region111: #{conv_layer_forward.1} parent=1 // pred_check_branch
      %162 = sbr.rel (0) target = $region113
    $region112: #{conv_layer_forward.1} parent=1 // pred_region
      _
    $region113: #{conv_layer_forward.1} parent=1 // pred_fallthru
      _
    // Predicated region
    $region114: #{conv_layer_forward.1} parent=1 // pred_check
      _
    $region115: #{conv_layer_forward.1} parent=1 // pred_check_branch
      %164 = sbr.rel (0) target = $region117
    $region116: #{conv_layer_forward.1} parent=1 // pred_region
      _
    $region117: #{conv_layer_forward.1} parent=1 // pred_fallthru
      _
    // Predicated region
    $region118: #{conv_layer_forward.1} parent=1 // pred_check
      _
    $region119: #{conv_layer_forward.1} parent=1 // pred_check_branch
      %166 = sbr.rel (0) target = $region121
    $region120: #{conv_layer_forward.1} parent=1 // pred_region
      _
    $region121: #{conv_layer_forward.1} parent=1 // pred_fallthru
      _
    // Predicated region
    $region122: #{conv_layer_forward.1} parent=1 // pred_check
      _
    $region123: #{conv_layer_forward.1} parent=1 // pred_check_branch
      %168 = sbr.rel (0) target = $region125
    $region124: #{conv_layer_forward.1} parent=1 // pred_region
      _
    $region125: #{conv_layer_forward.1} parent=1 // pred_fallthru
      _
    // Predicated region
    $region126: #{conv_layer_forward.1} parent=1 // pred_check
      _
    $region127: #{conv_layer_forward.1} parent=1 // pred_check_branch
      %170 = sbr.rel (0) target = $region129
    $region128: #{conv_layer_forward.1} parent=1 // pred_region
      _
    $region129: #{conv_layer_forward.1} parent=1 // pred_fallthru
      _
    // Predicated region
    $region130: #{conv_layer_forward.1} parent=1 // pred_check
      _
    $region131: #{conv_layer_forward.1} parent=1 // pred_check_branch
      %172 = sbr.rel (0) target = $region133
    $region132: #{conv_layer_forward.1} parent=1 // pred_region
      _
    $region133: #{conv_layer_forward.1} parent=1 // pred_fallthru
      _
    // Predicated region
    $region134: #{conv_layer_forward.1} parent=1 // pred_check
      _
    $region135: #{conv_layer_forward.1} parent=1 // pred_check_branch
      %174 = sbr.rel (0) target = $region137
    $region136: #{conv_layer_forward.1} parent=1 // pred_region
      _
    $region137: #{conv_layer_forward.1} parent=1 // pred_fallthru
      _
    // Predicated region
    $region138: #{conv_layer_forward.1} parent=1 // pred_check
      _
    $region139: #{conv_layer_forward.1} parent=1 // pred_check_branch
      %176 = sbr.rel (0) target = $region141
    $region140: #{conv_layer_forward.1} parent=1 // pred_region
      _
    $region141: #{conv_layer_forward.1} parent=1 // pred_fallthru
      _
    // Predicated region
    $region142: #{conv_layer_forward.1} parent=1 // pred_check
      _
    $region143: #{conv_layer_forward.1} parent=1 // pred_check_branch
      %178 = sbr.rel (0) target = $region145
    $region144: #{conv_layer_forward.1} parent=1 // pred_region
      _
    $region145: #{conv_layer_forward.1} parent=1 // pred_fallthru
      _
    // Predicated region
    $region146: #{conv_layer_forward.1} parent=1 // pred_check
      _
    $region147: #{conv_layer_forward.1} parent=1 // pred_check_branch
      %180 = sbr.rel (0) target = $region149
    $region148: #{conv_layer_forward.1} parent=1 // pred_region
      _
    $region149: #{conv_layer_forward.1} parent=1 // pred_fallthru
      _
    // Predicated region
    $region150: #{conv_layer_forward.1} parent=1 // pred_check
      _
    $region151: #{conv_layer_forward.1} parent=1 // pred_check_branch
      %182 = sbr.rel (0) target = $region153
    $region152: #{conv_layer_forward.1} parent=1 // pred_region
      _
    $region153: #{conv_layer_forward.1} parent=1 // pred_fallthru
      _
    // Predicated region
    $region154: #{conv_layer_forward.1} parent=1 // pred_check
      _
    $region155: #{conv_layer_forward.1} parent=1 // pred_check_branch
      %184 = sbr.rel (0) target = $region157
    $region156: #{conv_layer_forward.1} parent=1 // pred_region
      _
    $region157: #{conv_layer_forward.1} parent=1 // pred_fallthru
      _
    // Predicated region
    $region158: #{conv_layer_forward.1} parent=1 // pred_check
      _
    $region159: #{conv_layer_forward.1} parent=1 // pred_check_branch
      %186 = sbr.rel (0) target = $region161
    $region160: #{conv_layer_forward.1} parent=1 // pred_region
      _
    $region161: #{conv_layer_forward.1} parent=1 // pred_fallthru
      _
    // Predicated region
    $region162: #{conv_layer_forward.1} parent=1 // pred_check
      _
    $region163: #{conv_layer_forward.1} parent=1 // pred_check_branch
      %188 = sbr.rel (0) target = $region165
    $region164: #{conv_layer_forward.1} parent=1 // pred_region
      _
    $region165: #{conv_layer_forward.1} parent=1 // pred_fallthru
      _
    // Predicated region
    $region166: #{conv_layer_forward.1} parent=1 // pred_check
      _
    $region167: #{conv_layer_forward.1} parent=1 // pred_check_branch
      %190 = sbr.rel (0) target = $region169
    $region168: #{conv_layer_forward.1} parent=1 // pred_region
      _
    $region169: #{conv_layer_forward.1} parent=1 // pred_fallthru
      _
    // Predicated region
    $region170: #{conv_layer_forward.1} parent=1 // pred_check
      _
    $region171: #{conv_layer_forward.1} parent=1 // pred_check_branch
      %192 = sbr.rel (0) target = $region173
    $region172: #{conv_layer_forward.1} parent=1 // pred_region
      _
    $region173: #{conv_layer_forward.1} parent=1 // pred_fallthru
      _
    // Predicated region
    $region174: #{conv_layer_forward.1} parent=1 // pred_check
      _
    $region175: #{conv_layer_forward.1} parent=1 // pred_check_branch
      %194 = sbr.rel (0) target = $region177
    $region176: #{conv_layer_forward.1} parent=1 // pred_region
      _
    $region177: #{conv_layer_forward.1} parent=1 // pred_fallthru
      _
    // Predicated region
    $region178: #{conv_layer_forward.1} parent=1 // pred_check
      _
    $region179: #{conv_layer_forward.1} parent=1 // pred_check_branch
      %196 = sbr.rel (0) target = $region181
    $region180: #{conv_layer_forward.1} parent=1 // pred_region
      _
    $region181: #{conv_layer_forward.1} parent=1 // pred_fallthru
      _
    // Predicated region
    $region182: #{conv_layer_forward.1} parent=1 // pred_check
      _
    $region183: #{conv_layer_forward.1} parent=1 // pred_check_branch
      %198 = sbr.rel (0) target = $region185
    $region184: #{conv_layer_forward.1} parent=1 // pred_region
      _
    $region185: #{conv_layer_forward.1} parent=1 // pred_fallthru
      _
    // Predicated region
    $region186: #{conv_layer_forward.1} parent=1 // pred_check
      _
    $region187: #{conv_layer_forward.1} parent=1 // pred_check_branch
      %200 = sbr.rel (0) target = $region189
    $region188: #{conv_layer_forward.1} parent=1 // pred_region
      _
    $region189: #{conv_layer_forward.1} parent=1 // pred_fallthru
      _
    %v201 = vld [vmem:[%s1] sm:$0xff]
    %v202 = vld [vmem:[%s1 + $0x8] sm:$0xff]
    %v203 = vld [vmem:[%s3] sm:$0xff]
    %v204 = vld [vmem:[%s3 + $0x8] sm:$0xff]
    %v205 = vld [vmem:[%s3 + $0x10] sm:$0xff]
    %v206 = vld [vmem:[%s5] sm:$0xff]
    %v207 = vld [vmem:[%s5 + $0x8] sm:$0xff]
    %v208 = vld [vmem:[%s5 + $0x10] sm:$0xff]
    %v209 = vld [vmem:[%s5 + $0x18] sm:$0x7]
    %v210 = vld [vmem:[%s7] sm:$0xff]
    %v211 = vld [vmem:[%s7 + $0x8] sm:$0xff]
    %v212 = vld [vmem:[%s7 + $0x10] sm:$0xff]
    %vm213 = vcmask 130048
    %v215 = vsel %vm213, %v210, 0
    %v218 = vsel %vm213, %v211, 0
    %v221 = vsel %vm213, %v212, 0
    %223 = vmatprep.subr.mxu0 0.0
    %224 = vmatpush1.msra.mxu0 %v201
    %225 = vmatprep.subr.mxu0 0.0
    %226 = vmatpush1.msra.mxu0 %v202
    %227 = vmatprep.subr.mxu0 0.0
    %228 = vmatpush1.msra.mxu0 0.0
    %229 = vmatprep.subr.mxu0 0.0
    %230 = vmatpush1.msra.mxu0 0.0
    %231 = vmatprep.subr.mxu0 0.0
    %232 = vmatpush1.msra.mxu0 0.0
    %233 = vmatprep.subr.mxu0 0.0
    %234 = vmatpush1.msra.mxu0 0.0
    %235 = vmatprep.subr.mxu0 0.0
    %236 = vmatpush1.msra.mxu0 0.0
    %237 = vmatprep.subr.mxu0 0.0
    %238 = vmatpush1.msra.mxu0 0.0
    %239 = vmatprep.subr.mxu0 0.0
    %240 = vmatpush1.msra.mxu0 0.0
    %241 = vmatprep.subr.mxu0 0.0
    %242 = vmatpush1.msra.mxu0 0.0
    %243 = vmatprep.subr.mxu0 0.0
    %244 = vmatpush1.msra.mxu0 0.0
    %245 = vmatprep.subr.mxu0 0.0
    %246 = vmatpush1.msra.mxu0 0.0
    %247 = vmatprep.subr.mxu0 0.0
    %248 = vmatpush1.msra.mxu0 0.0
    %249 = vmatprep.subr.mxu0 0.0
    %250 = vmatpush1.msra.mxu0 0.0
    %251 = vmatprep.subr.mxu0 0.0
    %252 = vmatpush1.msra.mxu0 0.0
    %253 = vmatprep.subr.mxu0 0.0
    %254 = vmatpush1.msra.mxu0 0.0
    %255 = vmatprep.subr.mxu0 0.0
    %256 = vmatpush1.msra.mxu0 0.0
    %257 = vmatprep.subr.mxu0 0.0
    %258 = vmatpush1.msra.mxu0 0.0
    %259 = vmatprep.subr.mxu0 0.0
    %260 = vmatpush1.msra.mxu0 0.0
    %261 = vmatprep.subr.mxu0 0.0
    %262 = vmatpush1.msra.mxu0 0.0
    %263 = vmatprep.subr.mxu0 0.0
    %264 = vmatpush1.msra.mxu0 0.0
    %265 = vmatprep.subr.mxu0 0.0
    %266 = vmatpush1.msra.mxu0 0.0
    %267 = vmatprep.subr.mxu0 0.0
    %268 = vmatpush1.msra.mxu0 0.0
    %269 = vmatprep.subr.mxu0 0.0
    %270 = vmatpush1.msra.mxu0 0.0
    %271 = vmatprep.subr.mxu0 0.0
    %272 = vmatpush1.msra.mxu0 0.0
    %273 = vmatprep.subr.mxu0 0.0
    %274 = vmatpush1.msra.mxu0 0.0
    %275 = vmatprep.subr.mxu0 0.0
    %276 = vmatpush1.msra.mxu0 0.0
    %277 = vmatprep.subr.mxu0 0.0
    %278 = vmatpush1.msra.mxu0 0.0
    %279 = vmatprep.subr.mxu0 0.0
    %280 = vmatpush1.msra.mxu0 0.0
    %281 = vmatprep.subr.mxu0 0.0
    %282 = vmatpush1.msra.mxu0 0.0
    %283 = vmatprep.subr.mxu0 0.0
    %284 = vmatpush1.msra.mxu0 0.0
    %285 = vmatprep.subr.mxu0 0.0
    %286 = vmatpush1.msra.mxu0 0.0
    %287 = vmatprep.mubr.f32.mxu0 0.0
    %288 = vmatmul.mubr.f32.gmra.mrb[0].mxu0 %v215
    %v289 = vpop.f32.mrb[0].mxu0
    %v290 = vadd.f32 0.0, %v289
    %v291 = vpop.f32.mrb[0].mxu0
    %292 = vmatprep.mubr.f32.mxu0 0.0
    %293 = vmatmul.mubr.f32.gmra.mrb[0].mxu0 %v218
    %v294 = vpop.f32.mrb[0].mxu0
    %v295 = vadd.f32 0.0, %v294
    %v296 = vpop.f32.mrb[0].mxu0
    %297 = vmatprep.mubr.f32.mxu0 0.0
    %298 = vmatmul.mubr.f32.gmra.mrb[0].mxu0 %v221
    %v299 = vpop.f32.mrb[0].mxu0
    %v300 = vadd.f32 0.0, %v299
    %v301 = vpop.f32.mrb[0].mxu0
    %302 = vdwg.mxu0
    %v303 = vld [vmem:[%s23] sm:$0x1]
    %v304 = vld [vmem:[%s19] sm:$0xff]
    %v305 = vld [vmem:[%s19 + $0x8] sm:$0xff]
    %v306 = vld [vmem:[%s19 + $0x10] sm:$0xff]
    %v307 = vld [vmem:[%s19 + $0x18] sm:$0xff]
    %vm308 = vcmask 261120
    %v310 = vsel %vm308, %v203, 0
    %v313 = vsel %vm308, %v204, 0
    %v316 = vsel %vm308, %v205, 0
    %318 = vmatprep.subr.mxu0 0.0
    %319 = vmatpush1.msra.mxu0 %v304
    %320 = vmatprep.subr.mxu0 0.0
    %321 = vmatpush1.msra.mxu0 %v305
    %322 = vmatprep.subr.mxu0 0.0
    %323 = vmatpush1.msra.mxu0 %v306
    %324 = vmatprep.subr.mxu0 0.0
    %325 = vmatpush1.msra.mxu0 %v307
    %326 = vmatprep.subr.mxu0 0.0
    %327 = vmatpush1.msra.mxu0 0.0
    %328 = vmatprep.subr.mxu0 0.0
    %329 = vmatpush1.msra.mxu0 0.0
    %330 = vmatprep.subr.mxu0 0.0
    %331 = vmatpush1.msra.mxu0 0.0
    %332 = vmatprep.subr.mxu0 0.0
    %333 = vmatpush1.msra.mxu0 0.0
    %334 = vmatprep.subr.mxu0 0.0
    %335 = vmatpush1.msra.mxu0 0.0
    %336 = vmatprep.subr.mxu0 0.0
    %337 = vmatpush1.msra.mxu0 0.0
    %338 = vmatprep.subr.mxu0 0.0
    %339 = vmatpush1.msra.mxu0 0.0
    %340 = vmatprep.subr.mxu0 0.0
    %341 = vmatpush1.msra.mxu0 0.0
    %342 = vmatprep.subr.mxu0 0.0
    %343 = vmatpush1.msra.mxu0 0.0
    %344 = vmatprep.subr.mxu0 0.0
    %345 = vmatpush1.msra.mxu0 0.0
    %346 = vmatprep.subr.mxu0 0.0
    %347 = vmatpush1.msra.mxu0 0.0
    %348 = vmatprep.subr.mxu0 0.0
    %349 = vmatpush1.msra.mxu0 0.0
    %350 = vmatprep.subr.mxu0 0.0
    %351 = vmatpush1.msra.mxu0 0.0
    %352 = vmatprep.subr.mxu0 0.0
    %353 = vmatpush1.msra.mxu0 0.0
    %354 = vmatprep.subr.mxu0 0.0
    %355 = vmatpush1.msra.mxu0 0.0
    %356 = vmatprep.subr.mxu0 0.0
    %357 = vmatpush1.msra.mxu0 0.0
    %358 = vmatprep.subr.mxu0 0.0
    %359 = vmatpush1.msra.mxu0 0.0
    %360 = vmatprep.subr.mxu0 0.0
    %361 = vmatpush1.msra.mxu0 0.0
    %362 = vmatprep.subr.mxu0 0.0
    %363 = vmatpush1.msra.mxu0 0.0
    %364 = vmatprep.subr.mxu0 0.0
    %365 = vmatpush1.msra.mxu0 0.0
    %366 = vmatprep.subr.mxu0 0.0
    %367 = vmatpush1.msra.mxu0 0.0
    %368 = vmatprep.subr.mxu0 0.0
    %369 = vmatpush1.msra.mxu0 0.0
    %370 = vmatprep.subr.mxu0 0.0
    %371 = vmatpush1.msra.mxu0 0.0
    %372 = vmatprep.subr.mxu0 0.0
    %373 = vmatpush1.msra.mxu0 0.0
    %374 = vmatprep.subr.mxu0 0.0
    %375 = vmatpush1.msra.mxu0 0.0
    %376 = vmatprep.subr.mxu0 0.0
    %377 = vmatpush1.msra.mxu0 0.0
    %378 = vmatprep.subr.mxu0 0.0
    %379 = vmatpush1.msra.mxu0 0.0
    %380 = vmatprep.subr.mxu0 0.0
    %381 = vmatpush1.msra.mxu0 0.0
    %382 = vmatprep.mubr.f32.mxu0 0.0
    %383 = vmatmul.mubr.f32.gmra.mrb[0].mxu0 %v310
    %v384 = vpop.f32.mrb[0].mxu0
    %v385 = vadd.f32 0.0, %v384
    %v386 = vpop.f32.mrb[0].mxu0
    %387 = vmatprep.mubr.f32.mxu0 0.0
    %388 = vmatmul.mubr.f32.gmra.mrb[0].mxu0 %v313
    %v389 = vpop.f32.mrb[0].mxu0
    %v390 = vadd.f32 0.0, %v389
    %v391 = vpop.f32.mrb[0].mxu0
    %392 = vmatprep.mubr.f32.mxu0 0.0
    %393 = vmatmul.mubr.f32.gmra.mrb[0].mxu0 %v316
    %v394 = vpop.f32.mrb[0].mxu0
    %v395 = vadd.f32 0.0, %v394
    %v396 = vpop.f32.mrb[0].mxu0
    %397 = vdwg.mxu0
    %v399 = vlaneseq
    %v400 = vshrl.u32 %v399, 7
    %v401 = vsub.s32 0, %v400
    %v402 = vrot.slane %v303, %v401
    %v404 = vadd.f32 %v402, %v385
    %v405 = vadd.f32 %v402, %v390
    %v406 = vadd.f32 %v402, %v395
    %v407 = vld [vmem:[%s21] sm:$0xff]
    %v408 = vld [vmem:[%s21 + $0x8] sm:$0xff]
    %v409 = vld [vmem:[%s21 + $0x10] sm:$0xff]
    %v410 = vld [vmem:[%s21 + $0x18] sm:$0xff]
    %v412 = vsel %vm308, %v290, 0
    %v415 = vsel %vm308, %v295, 0
    %v418 = vsel %vm308, %v300, 0
    %420 = vmatprep.subr.mxu0 0.0
    %421 = vmatpush1.msra.mxu0 %v407
    %422 = vmatprep.subr.mxu0 0.0
    %423 = vmatpush1.msra.mxu0 %v408
    %424 = vmatprep.subr.mxu0 0.0
    %425 = vmatpush1.msra.mxu0 %v409
    %426 = vmatprep.subr.mxu0 0.0
    %427 = vmatpush1.msra.mxu0 %v410
    %428 = vmatprep.subr.mxu0 0.0
    %429 = vmatpush1.msra.mxu0 0.0
    %430 = vmatprep.subr.mxu0 0.0
    %431 = vmatpush1.msra.mxu0 0.0
    %432 = vmatprep.subr.mxu0 0.0
    %433 = vmatpush1.msra.mxu0 0.0
    %434 = vmatprep.subr.mxu0 0.0
    %435 = vmatpush1.msra.mxu0 0.0
    %436 = vmatprep.subr.mxu0 0.0
    %437 = vmatpush1.msra.mxu0 0.0
    %438 = vmatprep.subr.mxu0 0.0
    %439 = vmatpush1.msra.mxu0 0.0
    %440 = vmatprep.subr.mxu0 0.0
    %441 = vmatpush1.msra.mxu0 0.0
    %442 = vmatprep.subr.mxu0 0.0
    %443 = vmatpush1.msra.mxu0 0.0
    %444 = vmatprep.subr.mxu0 0.0
    %445 = vmatpush1.msra.mxu0 0.0
    %446 = vmatprep.subr.mxu0 0.0
    %447 = vmatpush1.msra.mxu0 0.0
    %448 = vmatprep.subr.mxu0 0.0
    %449 = vmatpush1.msra.mxu0 0.0
    %450 = vmatprep.subr.mxu0 0.0
    %451 = vmatpush1.msra.mxu0 0.0
    %452 = vmatprep.subr.mxu0 0.0
    %453 = vmatpush1.msra.mxu0 0.0
    %454 = vmatprep.subr.mxu0 0.0
    %455 = vmatpush1.msra.mxu0 0.0
    %456 = vmatprep.subr.mxu0 0.0
    %457 = vmatpush1.msra.mxu0 0.0
    %458 = vmatprep.subr.mxu0 0.0
    %459 = vmatpush1.msra.mxu0 0.0
    %460 = vmatprep.subr.mxu0 0.0
    %461 = vmatpush1.msra.mxu0 0.0
    %462 = vmatprep.subr.mxu0 0.0
    %463 = vmatpush1.msra.mxu0 0.0
    %464 = vmatprep.subr.mxu0 0.0
    %465 = vmatpush1.msra.mxu0 0.0
    %466 = vmatprep.subr.mxu0 0.0
    %467 = vmatpush1.msra.mxu0 0.0
    %468 = vmatprep.subr.mxu0 0.0
    %469 = vmatpush1.msra.mxu0 0.0
    %470 = vmatprep.subr.mxu0 0.0
    %471 = vmatpush1.msra.mxu0 0.0
    %472 = vmatprep.subr.mxu0 0.0
    %473 = vmatpush1.msra.mxu0 0.0
    %474 = vmatprep.subr.mxu0 0.0
    %475 = vmatpush1.msra.mxu0 0.0
    %476 = vmatprep.subr.mxu0 0.0
    %477 = vmatpush1.msra.mxu0 0.0
    %478 = vmatprep.subr.mxu0 0.0
    %479 = vmatpush1.msra.mxu0 0.0
    %480 = vmatprep.subr.mxu0 0.0
    %481 = vmatpush1.msra.mxu0 0.0
    %482 = vmatprep.subr.mxu0 0.0
    %483 = vmatpush1.msra.mxu0 0.0
    %484 = vmatprep.mubr.f32.mxu0 0.0
    %485 = vmatmul.mubr.f32.gmra.mrb[0].mxu0 %v412
    %v486 = vpop.f32.mrb[0].mxu0
    %v487 = vadd.f32 0.0, %v486
    %v488 = vpop.f32.mrb[0].mxu0
    %489 = vmatprep.mubr.f32.mxu0 0.0
    %490 = vmatmul.mubr.f32.gmra.mrb[0].mxu0 %v415
    %v491 = vpop.f32.mrb[0].mxu0
    %v492 = vadd.f32 0.0, %v491
    %v493 = vpop.f32.mrb[0].mxu0
    %494 = vmatprep.mubr.f32.mxu0 0.0
    %495 = vmatmul.mubr.f32.gmra.mrb[0].mxu0 %v418
    %v496 = vpop.f32.mrb[0].mxu0
    %v497 = vadd.f32 0.0, %v496
    %v498 = vpop.f32.mrb[0].mxu0
    %499 = vdwg.mxu0
    %v500 = vadd.f32 %v404, %v487
    %v501 = vadd.f32 %v405, %v492
    %v502 = vadd.f32 %v406, %v497
    %v503 = vmax.f32 %v500, 0.0
    %v504 = vmax.f32 %v501, 0.0
    %v505 = vmax.f32 %v502, 0.0
    %v506 = vld [vmem:[%s27] sm:$0x1]
    %v507 = vld [vmem:[%s25] sm:$0xff]
    %v508 = vld [vmem:[%s25 + $0x8] sm:$0xff]
    %v509 = vld [vmem:[%s25 + $0x10] sm:$0xff]
    %v510 = vld [vmem:[%s25 + $0x18] sm:$0xff]
    %v511 = vld [vmem:[%s25 + $0x20] sm:$0xff]
    %v512 = vld [vmem:[%s25 + $0x28] sm:$0xff]
    %v513 = vld [vmem:[%s25 + $0x30] sm:$0xff]
    %v514 = vld [vmem:[%s25 + $0x38] sm:$0xff]
    %vm515 = vcmask 523264
    %v517 = vsel %vm515, %v503, 0
    %v520 = vsel %vm515, %v504, 0
    %v523 = vsel %vm515, %v505, 0
    %525 = vmatprep.subr.mxu0 0.0
    %526 = vmatpush1.msra.mxu0 %v507
    %527 = vmatprep.subr.mxu0 0.0
    %528 = vmatpush1.msra.mxu0 %v508
    %529 = vmatprep.subr.mxu0 0.0
    %530 = vmatpush1.msra.mxu0 %v509
    %531 = vmatprep.subr.mxu0 0.0
    %532 = vmatpush1.msra.mxu0 %v510
    %533 = vmatprep.subr.mxu0 0.0
    %534 = vmatpush1.msra.mxu0 %v511
    %535 = vmatprep.subr.mxu0 0.0
    %536 = vmatpush1.msra.mxu0 %v512
    %537 = vmatprep.subr.mxu0 0.0
    %538 = vmatpush1.msra.mxu0 %v513
    %539 = vmatprep.subr.mxu0 0.0
    %540 = vmatpush1.msra.mxu0 %v514
    %541 = vmatprep.subr.mxu0 0.0
    %542 = vmatpush1.msra.mxu0 0.0
    %543 = vmatprep.subr.mxu0 0.0
    %544 = vmatpush1.msra.mxu0 0.0
    %545 = vmatprep.subr.mxu0 0.0
    %546 = vmatpush1.msra.mxu0 0.0
    %547 = vmatprep.subr.mxu0 0.0
    %548 = vmatpush1.msra.mxu0 0.0
    %549 = vmatprep.subr.mxu0 0.0
    %550 = vmatpush1.msra.mxu0 0.0
    %551 = vmatprep.subr.mxu0 0.0
    %552 = vmatpush1.msra.mxu0 0.0
    %553 = vmatprep.subr.mxu0 0.0
    %554 = vmatpush1.msra.mxu0 0.0
    %555 = vmatprep.subr.mxu0 0.0
    %556 = vmatpush1.msra.mxu0 0.0
    %557 = vmatprep.subr.mxu0 0.0
    %558 = vmatpush1.msra.mxu0 0.0
    %559 = vmatprep.subr.mxu0 0.0
    %560 = vmatpush1.msra.mxu0 0.0
    %561 = vmatprep.subr.mxu0 0.0
    %562 = vmatpush1.msra.mxu0 0.0
    %563 = vmatprep.subr.mxu0 0.0
    %564 = vmatpush1.msra.mxu0 0.0
    %565 = vmatprep.subr.mxu0 0.0
    %566 = vmatpush1.msra.mxu0 0.0
    %567 = vmatprep.subr.mxu0 0.0
    %568 = vmatpush1.msra.mxu0 0.0
    %569 = vmatprep.subr.mxu0 0.0
    %570 = vmatpush1.msra.mxu0 0.0
    %571 = vmatprep.subr.mxu0 0.0
    %572 = vmatpush1.msra.mxu0 0.0
    %573 = vmatprep.subr.mxu0 0.0
    %574 = vmatpush1.msra.mxu0 0.0
    %575 = vmatprep.subr.mxu0 0.0
    %576 = vmatpush1.msra.mxu0 0.0
    %577 = vmatprep.subr.mxu0 0.0
    %578 = vmatpush1.msra.mxu0 0.0
    %579 = vmatprep.subr.mxu0 0.0
    %580 = vmatpush1.msra.mxu0 0.0
    %581 = vmatprep.subr.mxu0 0.0
    %582 = vmatpush1.msra.mxu0 0.0
    %583 = vmatprep.subr.mxu0 0.0
    %584 = vmatpush1.msra.mxu0 0.0
    %585 = vmatprep.subr.mxu0 0.0
    %586 = vmatpush1.msra.mxu0 0.0
    %587 = vmatprep.subr.mxu0 0.0
    %588 = vmatpush1.msra.mxu0 0.0
    %589 = vmatprep.mubr.f32.mxu0 0.0
    %590 = vmatmul.mubr.f32.gmra.mrb[0].mxu0 %v517
    %v591 = vpop.f32.mrb[0].mxu0
    %v592 = vadd.f32 0.0, %v591
    %v593 = vpop.f32.mrb[0].mxu0
    %594 = vmatprep.mubr.f32.mxu0 0.0
    %595 = vmatmul.mubr.f32.gmra.mrb[0].mxu0 %v520
    %v596 = vpop.f32.mrb[0].mxu0
    %v597 = vadd.f32 0.0, %v596
    %v598 = vpop.f32.mrb[0].mxu0
    %599 = vmatprep.mubr.f32.mxu0 0.0
    %600 = vmatmul.mubr.f32.gmra.mrb[0].mxu0 %v523
    %v601 = vpop.f32.mrb[0].mxu0
    %v602 = vadd.f32 0.0, %v601
    %v603 = vpop.f32.mrb[0].mxu0
    %604 = vdwg.mxu0
    %v606 = vlaneseq
    %v607 = vshrl.u32 %v606, 7
    %v608 = vsub.s32 0, %v607
    %v609 = vrot.slane %v506, %v608
    %v611 = vadd.f32 %v609, %v592
    %v612 = vadd.f32 %v609, %v597
    %v613 = vadd.f32 %v609, %v602
    %v614 = vld [vmem:[%s9] sm:$0xff]
    %v615 = vld [vmem:[%s9 + $0x8] sm:$0xff]
    %vm616 = vcmask 195584
    %v618 = vsel %vm616, %v614, 0
    %v621 = vsel %vm616, %v615, 0
    %623 = vmatprep.subr.mxu0 0.0
    %624 = vmatpush1.msra.mxu0 %v611
    %625 = vmatprep.subr.mxu0 0.0
    %626 = vmatpush1.msra.mxu0 %v612
    %627 = vmatprep.subr.mxu0 0.0
    %628 = vmatpush1.msra.mxu0 %v613
    %629 = vmatprep.subr.mxu0 0.0
    %630 = vmatpush1.msra.mxu0 0.0
    %631 = vmatprep.subr.mxu0 0.0
    %632 = vmatpush1.msra.mxu0 0.0
    %633 = vmatprep.subr.mxu0 0.0
    %634 = vmatpush1.msra.mxu0 0.0
    %635 = vmatprep.subr.mxu0 0.0
    %636 = vmatpush1.msra.mxu0 0.0
    %637 = vmatprep.subr.mxu0 0.0
    %638 = vmatpush1.msra.mxu0 0.0
    %639 = vmatprep.subr.mxu0 0.0
    %640 = vmatpush1.msra.mxu0 0.0
    %641 = vmatprep.subr.mxu0 0.0
    %642 = vmatpush1.msra.mxu0 0.0
    %643 = vmatprep.subr.mxu0 0.0
    %644 = vmatpush1.msra.mxu0 0.0
    %645 = vmatprep.subr.mxu0 0.0
    %646 = vmatpush1.msra.mxu0 0.0
    %647 = vmatprep.subr.mxu0 0.0
    %648 = vmatpush1.msra.mxu0 0.0
    %649 = vmatprep.subr.mxu0 0.0
    %650 = vmatpush1.msra.mxu0 0.0
    %651 = vmatprep.subr.mxu0 0.0
    %652 = vmatpush1.msra.mxu0 0.0
    %653 = vmatprep.subr.mxu0 0.0
    %654 = vmatpush1.msra.mxu0 0.0
    %655 = vmatprep.subr.mxu0 0.0
    %656 = vmatpush1.msra.mxu0 0.0
    %657 = vmatprep.subr.mxu0 0.0
    %658 = vmatpush1.msra.mxu0 0.0
    %659 = vmatprep.subr.mxu0 0.0
    %660 = vmatpush1.msra.mxu0 0.0
    %661 = vmatprep.subr.mxu0 0.0
    %662 = vmatpush1.msra.mxu0 0.0
    %663 = vmatprep.subr.mxu0 0.0
    %664 = vmatpush1.msra.mxu0 0.0
    %665 = vmatprep.subr.mxu0 0.0
    %666 = vmatpush1.msra.mxu0 0.0
    %667 = vmatprep.subr.mxu0 0.0
    %668 = vmatpush1.msra.mxu0 0.0
    %669 = vmatprep.subr.mxu0 0.0
    %670 = vmatpush1.msra.mxu0 0.0
    %671 = vmatprep.subr.mxu0 0.0
    %672 = vmatpush1.msra.mxu0 0.0
    %673 = vmatprep.subr.mxu0 0.0
    %674 = vmatpush1.msra.mxu0 0.0
    %675 = vmatprep.subr.mxu0 0.0
    %676 = vmatpush1.msra.mxu0 0.0
    %677 = vmatprep.subr.mxu0 0.0
    %678 = vmatpush1.msra.mxu0 0.0
    %679 = vmatprep.subr.mxu0 0.0
    %680 = vmatpush1.msra.mxu0 0.0
    %681 = vmatprep.subr.mxu0 0.0
    %682 = vmatpush1.msra.mxu0 0.0
    %683 = vmatprep.subr.mxu0 0.0
    %684 = vmatpush1.msra.mxu0 0.0
    %685 = vmatprep.subr.mxu0 0.0
    %686 = vmatpush1.msra.mxu0 0.0
    %687 = vmatprep.mubr.f32.mxu0 0.0
    %688 = vmatmul.mubr.f32.gmra.mrb[0].mxu0 %v618
    %v689 = vpop.f32.mrb[0].mxu0
    %v690 = vadd.f32 0.0, %v689
    %v691 = vpop.f32.mrb[0].mxu0
    %692 = vmatprep.mubr.f32.mxu0 0.0
    %693 = vmatmul.mubr.f32.gmra.mrb[0].mxu0 %v621
    %v694 = vpop.f32.mrb[0].mxu0
    %v695 = vadd.f32 0.0, %v694
    %v696 = vpop.f32.mrb[0].mxu0
    %697 = vdwg.mxu0
    %v698 = vld [vmem:[%s33] sm:$0x1]
    %v699 = vld [vmem:[%s29] sm:$0xff]
    %v700 = vld [vmem:[%s29 + $0x8] sm:$0xff]
    %v701 = vld [vmem:[%s29 + $0x10] sm:$0xff]
    %v702 = vld [vmem:[%s29 + $0x18] sm:$0xff]
    %v704 = vsel %vm308, %v201, 0
    %v707 = vsel %vm308, %v202, 0
    %709 = vmatprep.subr.mxu0 0.0
    %710 = vmatpush1.msra.mxu0 %v699
    %711 = vmatprep.subr.mxu0 0.0
    %712 = vmatpush1.msra.mxu0 %v700
    %713 = vmatprep.subr.mxu0 0.0
    %714 = vmatpush1.msra.mxu0 %v701
    %715 = vmatprep.subr.mxu0 0.0
    %716 = vmatpush1.msra.mxu0 %v702
    %717 = vmatprep.subr.mxu0 0.0
    %718 = vmatpush1.msra.mxu0 0.0
    %719 = vmatprep.subr.mxu0 0.0
    %720 = vmatpush1.msra.mxu0 0.0
    %721 = vmatprep.subr.mxu0 0.0
    %722 = vmatpush1.msra.mxu0 0.0
    %723 = vmatprep.subr.mxu0 0.0
    %724 = vmatpush1.msra.mxu0 0.0
    %725 = vmatprep.subr.mxu0 0.0
    %726 = vmatpush1.msra.mxu0 0.0
    %727 = vmatprep.subr.mxu0 0.0
    %728 = vmatpush1.msra.mxu0 0.0
    %729 = vmatprep.subr.mxu0 0.0
    %730 = vmatpush1.msra.mxu0 0.0
    %731 = vmatprep.subr.mxu0 0.0
    %732 = vmatpush1.msra.mxu0 0.0
    %733 = vmatprep.subr.mxu0 0.0
    %734 = vmatpush1.msra.mxu0 0.0
    %735 = vmatprep.subr.mxu0 0.0
    %736 = vmatpush1.msra.mxu0 0.0
    %737 = vmatprep.subr.mxu0 0.0
    %738 = vmatpush1.msra.mxu0 0.0
    %739 = vmatprep.subr.mxu0 0.0
    %740 = vmatpush1.msra.mxu0 0.0
    %741 = vmatprep.subr.mxu0 0.0
    %742 = vmatpush1.msra.mxu0 0.0
    %743 = vmatprep.subr.mxu0 0.0
    %744 = vmatpush1.msra.mxu0 0.0
    %745 = vmatprep.subr.mxu0 0.0
    %746 = vmatpush1.msra.mxu0 0.0
    %747 = vmatprep.subr.mxu0 0.0
    %748 = vmatpush1.msra.mxu0 0.0
    %749 = vmatprep.subr.mxu0 0.0
    %750 = vmatpush1.msra.mxu0 0.0
    %751 = vmatprep.subr.mxu0 0.0
    %752 = vmatpush1.msra.mxu0 0.0
    %753 = vmatprep.subr.mxu0 0.0
    %754 = vmatpush1.msra.mxu0 0.0
    %755 = vmatprep.subr.mxu0 0.0
    %756 = vmatpush1.msra.mxu0 0.0
    %757 = vmatprep.subr.mxu0 0.0
    %758 = vmatpush1.msra.mxu0 0.0
    %759 = vmatprep.subr.mxu0 0.0
    %760 = vmatpush1.msra.mxu0 0.0
    %761 = vmatprep.subr.mxu0 0.0
    %762 = vmatpush1.msra.mxu0 0.0
    %763 = vmatprep.subr.mxu0 0.0
    %764 = vmatpush1.msra.mxu0 0.0
    %765 = vmatprep.subr.mxu0 0.0
    %766 = vmatpush1.msra.mxu0 0.0
    %767 = vmatprep.subr.mxu0 0.0
    %768 = vmatpush1.msra.mxu0 0.0
    %769 = vmatprep.subr.mxu0 0.0
    %770 = vmatpush1.msra.mxu0 0.0
    %771 = vmatprep.subr.mxu0 0.0
    %772 = vmatpush1.msra.mxu0 0.0
    %773 = vmatprep.mubr.f32.mxu0 0.0
    %774 = vmatmul.mubr.f32.gmra.mrb[0].mxu0 %v704
    %v775 = vpop.f32.mrb[0].mxu0
    %v776 = vadd.f32 0.0, %v775
    %v777 = vpop.f32.mrb[0].mxu0
    %778 = vmatprep.mubr.f32.mxu0 0.0
    %779 = vmatmul.mubr.f32.gmra.mrb[0].mxu0 %v707
    %v780 = vpop.f32.mrb[0].mxu0
    %v781 = vadd.f32 0.0, %v780
    %v782 = vpop.f32.mrb[0].mxu0
    %783 = vdwg.mxu0
    %v785 = vlaneseq
    %v786 = vshrl.u32 %v785, 7
    %v787 = vsub.s32 0, %v786
    %v788 = vrot.slane %v698, %v787
    %v790 = vadd.f32 %v788, %v776
    %v791 = vadd.f32 %v788, %v781
    %v792 = vld [vmem:[%s31] sm:$0xff]
    %v793 = vld [vmem:[%s31 + $0x8] sm:$0xff]
    %v794 = vld [vmem:[%s31 + $0x10] sm:$0xff]
    %v795 = vld [vmem:[%s31 + $0x18] sm:$0xff]
    %v797 = vsel %vm308, %v690, 0
    %v800 = vsel %vm308, %v695, 0
    %802 = vmatprep.subr.mxu0 0.0
    %803 = vmatpush1.msra.mxu0 %v792
    %804 = vmatprep.subr.mxu0 0.0
    %805 = vmatpush1.msra.mxu0 %v793
    %806 = vmatprep.subr.mxu0 0.0
    %807 = vmatpush1.msra.mxu0 %v794
    %808 = vmatprep.subr.mxu0 0.0
    %809 = vmatpush1.msra.mxu0 %v795
    %810 = vmatprep.subr.mxu0 0.0
    %811 = vmatpush1.msra.mxu0 0.0
    %812 = vmatprep.subr.mxu0 0.0
    %813 = vmatpush1.msra.mxu0 0.0
    %814 = vmatprep.subr.mxu0 0.0
    %815 = vmatpush1.msra.mxu0 0.0
    %816 = vmatprep.subr.mxu0 0.0
    %817 = vmatpush1.msra.mxu0 0.0
    %818 = vmatprep.subr.mxu0 0.0
    %819 = vmatpush1.msra.mxu0 0.0
    %820 = vmatprep.subr.mxu0 0.0
    %821 = vmatpush1.msra.mxu0 0.0
    %822 = vmatprep.subr.mxu0 0.0
    %823 = vmatpush1.msra.mxu0 0.0
    %824 = vmatprep.subr.mxu0 0.0
    %825 = vmatpush1.msra.mxu0 0.0
    %826 = vmatprep.subr.mxu0 0.0
    %827 = vmatpush1.msra.mxu0 0.0
    %828 = vmatprep.subr.mxu0 0.0
    %829 = vmatpush1.msra.mxu0 0.0
    %830 = vmatprep.subr.mxu0 0.0
    %831 = vmatpush1.msra.mxu0 0.0
    %832 = vmatprep.subr.mxu0 0.0
    %833 = vmatpush1.msra.mxu0 0.0
    %834 = vmatprep.subr.mxu0 0.0
    %835 = vmatpush1.msra.mxu0 0.0
    %836 = vmatprep.subr.mxu0 0.0
    %837 = vmatpush1.msra.mxu0 0.0
    %838 = vmatprep.subr.mxu0 0.0
    %839 = vmatpush1.msra.mxu0 0.0
    %840 = vmatprep.subr.mxu0 0.0
    %841 = vmatpush1.msra.mxu0 0.0
    %842 = vmatprep.subr.mxu0 0.0
    %843 = vmatpush1.msra.mxu0 0.0
    %844 = vmatprep.subr.mxu0 0.0
    %845 = vmatpush1.msra.mxu0 0.0
    %846 = vmatprep.subr.mxu0 0.0
    %847 = vmatpush1.msra.mxu0 0.0
    %848 = vmatprep.subr.mxu0 0.0
    %849 = vmatpush1.msra.mxu0 0.0
    %850 = vmatprep.subr.mxu0 0.0
    %851 = vmatpush1.msra.mxu0 0.0
    %852 = vmatprep.subr.mxu0 0.0
    %853 = vmatpush1.msra.mxu0 0.0
    %854 = vmatprep.subr.mxu0 0.0
    %855 = vmatpush1.msra.mxu0 0.0
    %856 = vmatprep.subr.mxu0 0.0
    %857 = vmatpush1.msra.mxu0 0.0
    %858 = vmatprep.subr.mxu0 0.0
    %859 = vmatpush1.msra.mxu0 0.0
    %860 = vmatprep.subr.mxu0 0.0
    %861 = vmatpush1.msra.mxu0 0.0
    %862 = vmatprep.subr.mxu0 0.0
    %863 = vmatpush1.msra.mxu0 0.0
    %864 = vmatprep.subr.mxu0 0.0
    %865 = vmatpush1.msra.mxu0 0.0
    %866 = vmatprep.mubr.f32.mxu0 0.0
    %867 = vmatmul.mubr.f32.gmra.mrb[0].mxu0 %v797
    %v868 = vpop.f32.mrb[0].mxu0
    %v869 = vadd.f32 0.0, %v868
    %v870 = vpop.f32.mrb[0].mxu0
    %871 = vmatprep.mubr.f32.mxu0 0.0
    %872 = vmatmul.mubr.f32.gmra.mrb[0].mxu0 %v800
    %v873 = vpop.f32.mrb[0].mxu0
    %v874 = vadd.f32 0.0, %v873
    %v875 = vpop.f32.mrb[0].mxu0
    %876 = vdwg.mxu0
    %v877 = vadd.f32 %v790, %v869
    %v878 = vadd.f32 %v791, %v874
    %v879 = vmax.f32 %v877, 0.0
    %v880 = vmax.f32 %v878, 0.0
    %v881 = vld [vmem:[%s37] sm:$0x1]
    %v882 = vld [vmem:[%s35] sm:$0xff]
    %v883 = vld [vmem:[%s35 + $0x8] sm:$0xff]
    %v884 = vld [vmem:[%s35 + $0x10] sm:$0xff]
    %v885 = vld [vmem:[%s35 + $0x18] sm:$0xff]
    %v886 = vld [vmem:[%s35 + $0x20] sm:$0xff]
    %v887 = vld [vmem:[%s35 + $0x28] sm:$0xff]
    %v888 = vld [vmem:[%s35 + $0x30] sm:$0xff]
    %v889 = vld [vmem:[%s35 + $0x38] sm:$0xff]
    %v891 = vsel %vm515, %v879, 0
    %v894 = vsel %vm515, %v880, 0
    %896 = vmatprep.subr.mxu0 0.0
    %897 = vmatpush1.msra.mxu0 %v882
    %898 = vmatprep.subr.mxu0 0.0
    %899 = vmatpush1.msra.mxu0 %v883
    %900 = vmatprep.subr.mxu0 0.0
    %901 = vmatpush1.msra.mxu0 %v884
    %902 = vmatprep.subr.mxu0 0.0
    %903 = vmatpush1.msra.mxu0 %v885
    %904 = vmatprep.subr.mxu0 0.0
    %905 = vmatpush1.msra.mxu0 %v886
    %906 = vmatprep.subr.mxu0 0.0
    %907 = vmatpush1.msra.mxu0 %v887
    %908 = vmatprep.subr.mxu0 0.0
    %909 = vmatpush1.msra.mxu0 %v888
    %910 = vmatprep.subr.mxu0 0.0
    %911 = vmatpush1.msra.mxu0 %v889
    %912 = vmatprep.subr.mxu0 0.0
    %913 = vmatpush1.msra.mxu0 0.0
    %914 = vmatprep.subr.mxu0 0.0
    %915 = vmatpush1.msra.mxu0 0.0
    %916 = vmatprep.subr.mxu0 0.0
    %917 = vmatpush1.msra.mxu0 0.0
    %918 = vmatprep.subr.mxu0 0.0
    %919 = vmatpush1.msra.mxu0 0.0
    %920 = vmatprep.subr.mxu0 0.0
    %921 = vmatpush1.msra.mxu0 0.0
    %922 = vmatprep.subr.mxu0 0.0
    %923 = vmatpush1.msra.mxu0 0.0
    %924 = vmatprep.subr.mxu0 0.0
    %925 = vmatpush1.msra.mxu0 0.0
    %926 = vmatprep.subr.mxu0 0.0
    %927 = vmatpush1.msra.mxu0 0.0
    %928 = vmatprep.subr.mxu0 0.0
    %929 = vmatpush1.msra.mxu0 0.0
    %930 = vmatprep.subr.mxu0 0.0
    %931 = vmatpush1.msra.mxu0 0.0
    %932 = vmatprep.subr.mxu0 0.0
    %933 = vmatpush1.msra.mxu0 0.0
    %934 = vmatprep.subr.mxu0 0.0
    %935 = vmatpush1.msra.mxu0 0.0
    %936 = vmatprep.subr.mxu0 0.0
    %937 = vmatpush1.msra.mxu0 0.0
    %938 = vmatprep.subr.mxu0 0.0
    %939 = vmatpush1.msra.mxu0 0.0
    %940 = vmatprep.subr.mxu0 0.0
    %941 = vmatpush1.msra.mxu0 0.0
    %942 = vmatprep.subr.mxu0 0.0
    %943 = vmatpush1.msra.mxu0 0.0
    %944 = vmatprep.subr.mxu0 0.0
    %945 = vmatpush1.msra.mxu0 0.0
    %946 = vmatprep.subr.mxu0 0.0
    %947 = vmatpush1.msra.mxu0 0.0
    %948 = vmatprep.subr.mxu0 0.0
    %949 = vmatpush1.msra.mxu0 0.0
    %950 = vmatprep.subr.mxu0 0.0
    %951 = vmatpush1.msra.mxu0 0.0
    %952 = vmatprep.subr.mxu0 0.0
    %953 = vmatpush1.msra.mxu0 0.0
    %954 = vmatprep.subr.mxu0 0.0
    %955 = vmatpush1.msra.mxu0 0.0
    %956 = vmatprep.subr.mxu0 0.0
    %957 = vmatpush1.msra.mxu0 0.0
    %958 = vmatprep.subr.mxu0 0.0
    %959 = vmatpush1.msra.mxu0 0.0
    %960 = vmatprep.mubr.f32.mxu0 0.0
    %961 = vmatmul.mubr.f32.gmra.mrb[0].mxu0 %v891
    %v962 = vpop.f32.mrb[0].mxu0
    %v963 = vadd.f32 0.0, %v962
    %v964 = vpop.f32.mrb[0].mxu0
    %965 = vmatprep.mubr.f32.mxu0 0.0
    %966 = vmatmul.mubr.f32.gmra.mrb[0].mxu0 %v894
    %v967 = vpop.f32.mrb[0].mxu0
    %v968 = vadd.f32 0.0, %v967
    %v969 = vpop.f32.mrb[0].mxu0
    %970 = vdwg.mxu0
    %v972 = vlaneseq
    %v973 = vshrl.u32 %v972, 7
    %v974 = vsub.s32 0, %v973
    %v975 = vrot.slane %v881, %v974
    %v977 = vadd.f32 %v975, %v963
    %v978 = vadd.f32 %v975, %v968
    %v979 = vld [vmem:[%s11] sm:$0xff]
    %v980 = vld [vmem:[%s11 + $0x8] sm:$0xff]
    %v981 = vld [vmem:[%s11 + $0x10] sm:$0xff]
    %v982 = vld [vmem:[%s11 + $0x18] sm:$0x7]
    %v984 = vsel %vm616, %v979, 0
    %v987 = vsel %vm616, %v980, 0
    %v990 = vsel %vm616, %v981, 0
    %v993 = vsel %vm616, %v982, 0
    %995 = vmatprep.subr.mxu0 0.0
    %996 = vmatpush1.msra.mxu0 %v203
    %997 = vmatprep.subr.mxu0 0.0
    %998 = vmatpush1.msra.mxu0 %v204
    %999 = vmatprep.subr.mxu0 0.0
    %1000 = vmatpush1.msra.mxu0 %v205
    %1001 = vmatprep.subr.mxu0 0.0
    %1002 = vmatpush1.msra.mxu0 0.0
    %1003 = vmatprep.subr.mxu0 0.0
    %1004 = vmatpush1.msra.mxu0 0.0
    %1005 = vmatprep.subr.mxu0 0.0
    %1006 = vmatpush1.msra.mxu0 0.0
    %1007 = vmatprep.subr.mxu0 0.0
    %1008 = vmatpush1.msra.mxu0 0.0
    %1009 = vmatprep.subr.mxu0 0.0
    %1010 = vmatpush1.msra.mxu0 0.0
    %1011 = vmatprep.subr.mxu0 0.0
    %1012 = vmatpush1.msra.mxu0 0.0
    %1013 = vmatprep.subr.mxu0 0.0
    %1014 = vmatpush1.msra.mxu0 0.0
    %1015 = vmatprep.subr.mxu0 0.0
    %1016 = vmatpush1.msra.mxu0 0.0
    %1017 = vmatprep.subr.mxu0 0.0
    %1018 = vmatpush1.msra.mxu0 0.0
    %1019 = vmatprep.subr.mxu0 0.0
    %1020 = vmatpush1.msra.mxu0 0.0
    %1021 = vmatprep.subr.mxu0 0.0
    %1022 = vmatpush1.msra.mxu0 0.0
    %1023 = vmatprep.subr.mxu0 0.0
    %1024 = vmatpush1.msra.mxu0 0.0
    %1025 = vmatprep.subr.mxu0 0.0
    %1026 = vmatpush1.msra.mxu0 0.0
    %1027 = vmatprep.subr.mxu0 0.0
    %1028 = vmatpush1.msra.mxu0 0.0
    %1029 = vmatprep.subr.mxu0 0.0
    %1030 = vmatpush1.msra.mxu0 0.0
    %1031 = vmatprep.subr.mxu0 0.0
    %1032 = vmatpush1.msra.mxu0 0.0
    %1033 = vmatprep.subr.mxu0 0.0
    %1034 = vmatpush1.msra.mxu0 0.0
    %1035 = vmatprep.subr.mxu0 0.0
    %1036 = vmatpush1.msra.mxu0 0.0
    %1037 = vmatprep.subr.mxu0 0.0
    %1038 = vmatpush1.msra.mxu0 0.0
    %1039 = vmatprep.subr.mxu0 0.0
    %1040 = vmatpush1.msra.mxu0 0.0
    %1041 = vmatprep.subr.mxu0 0.0
    %1042 = vmatpush1.msra.mxu0 0.0
    %1043 = vmatprep.subr.mxu0 0.0
    %1044 = vmatpush1.msra.mxu0 0.0
    %1045 = vmatprep.subr.mxu0 0.0
    %1046 = vmatpush1.msra.mxu0 0.0
    %1047 = vmatprep.subr.mxu0 0.0
    %1048 = vmatpush1.msra.mxu0 0.0
    %1049 = vmatprep.subr.mxu0 0.0
    %1050 = vmatpush1.msra.mxu0 0.0
    %1051 = vmatprep.subr.mxu0 0.0
    %1052 = vmatpush1.msra.mxu0 0.0
    %1053 = vmatprep.subr.mxu0 0.0
    %1054 = vmatpush1.msra.mxu0 0.0
    %1055 = vmatprep.subr.mxu0 0.0
    %1056 = vmatpush1.msra.mxu0 0.0
    %1057 = vmatprep.subr.mxu0 0.0
    %1058 = vmatpush1.msra.mxu0 0.0
    %1059 = vmatprep.mubr.f32.mxu0 0.0
    %1060 = vmatmul.mubr.f32.gmra.mrb[0].mxu0 %v984
    %v1061 = vpop.f32.mrb[0].mxu0
    %v1062 = vadd.f32 0.0, %v1061
    %v1063 = vpop.f32.mrb[0].mxu0
    %1064 = vmatprep.mubr.f32.mxu0 0.0
    %1065 = vmatmul.mubr.f32.gmra.mrb[0].mxu0 %v987
    %v1066 = vpop.f32.mrb[0].mxu0
    %v1067 = vadd.f32 0.0, %v1066
    %v1068 = vpop.f32.mrb[0].mxu0
    %1069 = vmatprep.mubr.f32.mxu0 0.0
    %1070 = vmatmul.mubr.f32.gmra.mrb[0].mxu0 %v990
    %v1071 = vpop.f32.mrb[0].mxu0
    %v1072 = vadd.f32 0.0, %v1071
    %v1073 = vpop.f32.mrb[0].mxu0
    %1074 = vmatprep.mubr.f32.mxu0 0.0
    %1075 = vmatmul.mubr.f32.gmra.mrb[0].mxu0 %v993
    %v1076 = vpop.f32.mrb[0].mxu0
    %v1077 = vadd.f32 0.0, %v1076
    %v1078 = vpop.f32.mrb[0].mxu0
    %1079 = vdwg.mxu0
    %v1080 = vld [vmem:[%s13] sm:$0xff]
    %v1081 = vld [vmem:[%s13 + $0x8] sm:$0xff]
    %v1082 = vld [vmem:[%s13 + $0x10] sm:$0xff]
    %v1083 = vld [vmem:[%s13 + $0x18] sm:$0x7]
    %v1085 = vsel %vm616, %v1080, 0
    %v1088 = vsel %vm616, %v1081, 0
    %v1091 = vsel %vm616, %v1082, 0
    %v1094 = vsel %vm616, %v1083, 0
    %1096 = vmatprep.subr.mxu0 0.0
    %1097 = vmatpush1.msra.mxu0 %v203
    %1098 = vmatprep.subr.mxu0 0.0
    %1099 = vmatpush1.msra.mxu0 %v204
    %1100 = vmatprep.subr.mxu0 0.0
    %1101 = vmatpush1.msra.mxu0 %v205
    %1102 = vmatprep.subr.mxu0 0.0
    %1103 = vmatpush1.msra.mxu0 0.0
    %1104 = vmatprep.subr.mxu0 0.0
    %1105 = vmatpush1.msra.mxu0 0.0
    %1106 = vmatprep.subr.mxu0 0.0
    %1107 = vmatpush1.msra.mxu0 0.0
    %1108 = vmatprep.subr.mxu0 0.0
    %1109 = vmatpush1.msra.mxu0 0.0
    %1110 = vmatprep.subr.mxu0 0.0
    %1111 = vmatpush1.msra.mxu0 0.0
    %1112 = vmatprep.subr.mxu0 0.0
    %1113 = vmatpush1.msra.mxu0 0.0
    %1114 = vmatprep.subr.mxu0 0.0
    %1115 = vmatpush1.msra.mxu0 0.0
    %1116 = vmatprep.subr.mxu0 0.0
    %1117 = vmatpush1.msra.mxu0 0.0
    %1118 = vmatprep.subr.mxu0 0.0
    %1119 = vmatpush1.msra.mxu0 0.0
    %1120 = vmatprep.subr.mxu0 0.0
    %1121 = vmatpush1.msra.mxu0 0.0
    %1122 = vmatprep.subr.mxu0 0.0
    %1123 = vmatpush1.msra.mxu0 0.0
    %1124 = vmatprep.subr.mxu0 0.0
    %1125 = vmatpush1.msra.mxu0 0.0
    %1126 = vmatprep.subr.mxu0 0.0
    %1127 = vmatpush1.msra.mxu0 0.0
    %1128 = vmatprep.subr.mxu0 0.0
    %1129 = vmatpush1.msra.mxu0 0.0
    %1130 = vmatprep.subr.mxu0 0.0
    %1131 = vmatpush1.msra.mxu0 0.0
    %1132 = vmatprep.subr.mxu0 0.0
    %1133 = vmatpush1.msra.mxu0 0.0
    %1134 = vmatprep.subr.mxu0 0.0
    %1135 = vmatpush1.msra.mxu0 0.0
    %1136 = vmatprep.subr.mxu0 0.0
    %1137 = vmatpush1.msra.mxu0 0.0
    %1138 = vmatprep.subr.mxu0 0.0
    %1139 = vmatpush1.msra.mxu0 0.0
    %1140 = vmatprep.subr.mxu0 0.0
    %1141 = vmatpush1.msra.mxu0 0.0
    %1142 = vmatprep.subr.mxu0 0.0
    %1143 = vmatpush1.msra.mxu0 0.0
    %1144 = vmatprep.subr.mxu0 0.0
    %1145 = vmatpush1.msra.mxu0 0.0
    %1146 = vmatprep.subr.mxu0 0.0
    %1147 = vmatpush1.msra.mxu0 0.0
    %1148 = vmatprep.subr.mxu0 0.0
    %1149 = vmatpush1.msra.mxu0 0.0
    %1150 = vmatprep.subr.mxu0 0.0
    %1151 = vmatpush1.msra.mxu0 0.0
    %1152 = vmatprep.subr.mxu0 0.0
    %1153 = vmatpush1.msra.mxu0 0.0
    %1154 = vmatprep.subr.mxu0 0.0
    %1155 = vmatpush1.msra.mxu0 0.0
    %1156 = vmatprep.subr.mxu0 0.0
    %1157 = vmatpush1.msra.mxu0 0.0
    %1158 = vmatprep.subr.mxu0 0.0
    %1159 = vmatpush1.msra.mxu0 0.0
    %1160 = vmatprep.mubr.f32.mxu0 0.0
    %1161 = vmatmul.mubr.f32.gmra.mrb[0].mxu0 %v1085
    %v1162 = vpop.f32.mrb[0].mxu0
    %v1163 = vadd.f32 0.0, %v1162
    %v1164 = vpop.f32.mrb[0].mxu0
    %1165 = vmatprep.mubr.f32.mxu0 0.0
    %1166 = vmatmul.mubr.f32.gmra.mrb[0].mxu0 %v1088
    %v1167 = vpop.f32.mrb[0].mxu0
    %v1168 = vadd.f32 0.0, %v1167
    %v1169 = vpop.f32.mrb[0].mxu0
    %1170 = vmatprep.mubr.f32.mxu0 0.0
    %1171 = vmatmul.mubr.f32.gmra.mrb[0].mxu0 %v1091
    %v1172 = vpop.f32.mrb[0].mxu0
    %v1173 = vadd.f32 0.0, %v1172
    %v1174 = vpop.f32.mrb[0].mxu0
    %1175 = vmatprep.mubr.f32.mxu0 0.0
    %1176 = vmatmul.mubr.f32.gmra.mrb[0].mxu0 %v1094
    %v1177 = vpop.f32.mrb[0].mxu0
    %v1178 = vadd.f32 0.0, %v1177
    %v1179 = vpop.f32.mrb[0].mxu0
    %1180 = vdwg.mxu0
    %v1181 = vld [vmem:[%s87] sm:$0xff]
    %v1182 = vld [vmem:[%s87 + $0x8] sm:$0xff]
    %v1183 = vld [vmem:[%s87 + $0x10] sm:$0xff]
    %v1184 = vld [vmem:[%s87 + $0x18] sm:$0x7]
    %v1185 = vld [vmem:[%s83] sm:$0xff]
    %v1186 = vld [vmem:[%s83 + $0x8] sm:$0xff]
    %v1187 = vld [vmem:[%s83 + $0x10] sm:$0xff]
    %v1188 = vld [vmem:[%s83 + $0x18] sm:$0xff]
    %v1189 = vld [vmem:[%s85] sm:$0x1]
    %v1191 = vlaneseq
    %v1192 = vshrl.u32 %v1191, 7
    %v1193 = vsub.s32 0, %v1192
    %v1194 = vrot.slane %v1189, %v1193
    %v1197 = vsel %vm308, %v1062, 0
    %v1200 = vsel %vm308, %v1067, 0
    %v1203 = vsel %vm308, %v1072, 0
    %v1206 = vsel %vm308, %v1077, 0
    %1208 = vmatprep.subr.mxu0 0.0
    %1209 = vmatpush1.msra.mxu0 %v1185
    %1210 = vmatprep.subr.mxu0 0.0
    %1211 = vmatpush1.msra.mxu0 %v1186
    %1212 = vmatprep.subr.mxu0 0.0
    %1213 = vmatpush1.msra.mxu0 %v1187
    %1214 = vmatprep.subr.mxu0 0.0
    %1215 = vmatpush1.msra.mxu0 %v1188
    %1216 = vmatprep.subr.mxu0 0.0
    %1217 = vmatpush1.msra.mxu0 0.0
    %1218 = vmatprep.subr.mxu0 0.0
    %1219 = vmatpush1.msra.mxu0 0.0
    %1220 = vmatprep.subr.mxu0 0.0
    %1221 = vmatpush1.msra.mxu0 0.0
    %1222 = vmatprep.subr.mxu0 0.0
    %1223 = vmatpush1.msra.mxu0 0.0
    %1224 = vmatprep.subr.mxu0 0.0
    %1225 = vmatpush1.msra.mxu0 0.0
    %1226 = vmatprep.subr.mxu0 0.0
    %1227 = vmatpush1.msra.mxu0 0.0
    %1228 = vmatprep.subr.mxu0 0.0
    %1229 = vmatpush1.msra.mxu0 0.0
    %1230 = vmatprep.subr.mxu0 0.0
    %1231 = vmatpush1.msra.mxu0 0.0
    %1232 = vmatprep.subr.mxu0 0.0
    %1233 = vmatpush1.msra.mxu0 0.0
    %1234 = vmatprep.subr.mxu0 0.0
    %1235 = vmatpush1.msra.mxu0 0.0
    %1236 = vmatprep.subr.mxu0 0.0
    %1237 = vmatpush1.msra.mxu0 0.0
    %1238 = vmatprep.subr.mxu0 0.0
    %1239 = vmatpush1.msra.mxu0 0.0
    %1240 = vmatprep.subr.mxu0 0.0
    %1241 = vmatpush1.msra.mxu0 0.0
    %1242 = vmatprep.subr.mxu0 0.0
    %1243 = vmatpush1.msra.mxu0 0.0
    %1244 = vmatprep.subr.mxu0 0.0
    %1245 = vmatpush1.msra.mxu0 0.0
    %1246 = vmatprep.subr.mxu0 0.0
    %1247 = vmatpush1.msra.mxu0 0.0
    %1248 = vmatprep.subr.mxu0 0.0
    %1249 = vmatpush1.msra.mxu0 0.0
    %1250 = vmatprep.subr.mxu0 0.0
    %1251 = vmatpush1.msra.mxu0 0.0
    %1252 = vmatprep.subr.mxu0 0.0
    %1253 = vmatpush1.msra.mxu0 0.0
    %1254 = vmatprep.subr.mxu0 0.0
    %1255 = vmatpush1.msra.mxu0 0.0
    %1256 = vmatprep.subr.mxu0 0.0
    %1257 = vmatpush1.msra.mxu0 0.0
    %1258 = vmatprep.subr.mxu0 0.0
    %1259 = vmatpush1.msra.mxu0 0.0
    %1260 = vmatprep.subr.mxu0 0.0
    %1261 = vmatpush1.msra.mxu0 0.0
    %1262 = vmatprep.subr.mxu0 0.0
    %1263 = vmatpush1.msra.mxu0 0.0
    %1264 = vmatprep.subr.mxu0 0.0
    %1265 = vmatpush1.msra.mxu0 0.0
    %1266 = vmatprep.subr.mxu0 0.0
    %1267 = vmatpush1.msra.mxu0 0.0
    %1268 = vmatprep.subr.mxu0 0.0
    %1269 = vmatpush1.msra.mxu0 0.0
    %1270 = vmatprep.subr.mxu0 0.0
    %1271 = vmatpush1.msra.mxu0 0.0
    %1272 = vmatprep.mubr.f32.mxu0 0.0
    %1273 = vmatmul.mubr.f32.gmra.mrb[0].mxu0 %v1197
    %v1274 = vpop.f32.mrb[0].mxu0
    %v1275 = vadd.f32 %v1194, %v1274
    %v1276 = vpop.f32.mrb[0].mxu0
    %1277 = vmatprep.mubr.f32.mxu0 0.0
    %1278 = vmatmul.mubr.f32.gmra.mrb[0].mxu0 %v1200
    %v1279 = vpop.f32.mrb[0].mxu0
    %v1280 = vadd.f32 %v1194, %v1279
    %v1281 = vpop.f32.mrb[0].mxu0
    %1282 = vmatprep.mubr.f32.mxu0 0.0
    %1283 = vmatmul.mubr.f32.gmra.mrb[0].mxu0 %v1203
    %v1284 = vpop.f32.mrb[0].mxu0
    %v1285 = vadd.f32 %v1194, %v1284
    %v1286 = vpop.f32.mrb[0].mxu0
    %1287 = vmatprep.mubr.f32.mxu0 0.0
    %1288 = vmatmul.mubr.f32.gmra.mrb[0].mxu0 %v1206
    %v1289 = vpop.f32.mrb[0].mxu0
    %v1290 = vadd.f32 %v1194, %v1289
    %v1291 = vpop.f32.mrb[0].mxu0
    %1292 = vdwg.mxu0
    %1294 = vset.pattern.permute.xlu0 0
    %1295 = vperm.xlu0 %1294, %v1181
    %v1296 = vpop.permute.xlu0 %1295
    %1299 = vset.pattern.permute.xlu0 0
    %1300 = vperm.xlu0 %1299, %v1182
    %v1301 = vpop.permute.xlu0 %1300
    %1304 = vset.pattern.permute.xlu0 0
    %1305 = vperm.xlu0 %1304, %v1183
    %v1306 = vpop.permute.xlu0 %1305
    %1309 = vset.pattern.permute.xlu0 0
    %1310 = vperm.xlu0 %1309, %v1184
    %v1311 = vpop.permute.xlu0 %1310
    %v1313 = vmul.f32 %v1296, %v1275
    %v1314 = vmul.f32 %v1301, %v1280
    %v1315 = vmul.f32 %v1306, %v1285
    %v1316 = vmul.f32 %v1311, %v1290
    %v1317 = vld [vmem:[%s93] sm:$0xff]
    %v1318 = vld [vmem:[%s93 + $0x8] sm:$0xff]
    %v1319 = vld [vmem:[%s93 + $0x10] sm:$0xff]
    %v1320 = vld [vmem:[%s93 + $0x18] sm:$0x7]
    %v1321 = vld [vmem:[%s89] sm:$0xff]
    %v1322 = vld [vmem:[%s89 + $0x8] sm:$0xff]
    %v1323 = vld [vmem:[%s89 + $0x10] sm:$0xff]
    %v1324 = vld [vmem:[%s89 + $0x18] sm:$0xff]
    %v1325 = vld [vmem:[%s91] sm:$0x1]
    %v1327 = vlaneseq
    %v1328 = vshrl.u32 %v1327, 7
    %v1329 = vsub.s32 0, %v1328
    %v1330 = vrot.slane %v1325, %v1329
    %1332 = vmatprep.subr.mxu0 0.0
    %1333 = vmatpush1.msra.mxu0 %v1321
    %1334 = vmatprep.subr.mxu0 0.0
    %1335 = vmatpush1.msra.mxu0 %v1322
    %1336 = vmatprep.subr.mxu0 0.0
    %1337 = vmatpush1.msra.mxu0 %v1323
    %1338 = vmatprep.subr.mxu0 0.0
    %1339 = vmatpush1.msra.mxu0 %v1324
    %1340 = vmatprep.subr.mxu0 0.0
    %1341 = vmatpush1.msra.mxu0 0.0
    %1342 = vmatprep.subr.mxu0 0.0
    %1343 = vmatpush1.msra.mxu0 0.0
    %1344 = vmatprep.subr.mxu0 0.0
    %1345 = vmatpush1.msra.mxu0 0.0
    %1346 = vmatprep.subr.mxu0 0.0
    %1347 = vmatpush1.msra.mxu0 0.0
    %1348 = vmatprep.subr.mxu0 0.0
    %1349 = vmatpush1.msra.mxu0 0.0
    %1350 = vmatprep.subr.mxu0 0.0
    %1351 = vmatpush1.msra.mxu0 0.0
    %1352 = vmatprep.subr.mxu0 0.0
    %1353 = vmatpush1.msra.mxu0 0.0
    %1354 = vmatprep.subr.mxu0 0.0
    %1355 = vmatpush1.msra.mxu0 0.0
    %1356 = vmatprep.subr.mxu0 0.0
    %1357 = vmatpush1.msra.mxu0 0.0
    %1358 = vmatprep.subr.mxu0 0.0
    %1359 = vmatpush1.msra.mxu0 0.0
    %1360 = vmatprep.subr.mxu0 0.0
    %1361 = vmatpush1.msra.mxu0 0.0
    %1362 = vmatprep.subr.mxu0 0.0
    %1363 = vmatpush1.msra.mxu0 0.0
    %1364 = vmatprep.subr.mxu0 0.0
    %1365 = vmatpush1.msra.mxu0 0.0
    %1366 = vmatprep.subr.mxu0 0.0
    %1367 = vmatpush1.msra.mxu0 0.0
    %1368 = vmatprep.subr.mxu0 0.0
    %1369 = vmatpush1.msra.mxu0 0.0
    %1370 = vmatprep.subr.mxu0 0.0
    %1371 = vmatpush1.msra.mxu0 0.0
    %1372 = vmatprep.subr.mxu0 0.0
    %1373 = vmatpush1.msra.mxu0 0.0
    %1374 = vmatprep.subr.mxu0 0.0
    %1375 = vmatpush1.msra.mxu0 0.0
    %1376 = vmatprep.subr.mxu0 0.0
    %1377 = vmatpush1.msra.mxu0 0.0
    %1378 = vmatprep.subr.mxu0 0.0
    %1379 = vmatpush1.msra.mxu0 0.0
    %1380 = vmatprep.subr.mxu0 0.0
    %1381 = vmatpush1.msra.mxu0 0.0
    %1382 = vmatprep.subr.mxu0 0.0
    %1383 = vmatpush1.msra.mxu0 0.0
    %1384 = vmatprep.subr.mxu0 0.0
    %1385 = vmatpush1.msra.mxu0 0.0
    %1386 = vmatprep.subr.mxu0 0.0
    %1387 = vmatpush1.msra.mxu0 0.0
    %1388 = vmatprep.subr.mxu0 0.0
    %1389 = vmatpush1.msra.mxu0 0.0
    %1390 = vmatprep.subr.mxu0 0.0
    %1391 = vmatpush1.msra.mxu0 0.0
    %1392 = vmatprep.subr.mxu0 0.0
    %1393 = vmatpush1.msra.mxu0 0.0
    %1394 = vmatprep.subr.mxu0 0.0
    %1395 = vmatpush1.msra.mxu0 0.0
    %1396 = vmatprep.mubr.f32.mxu0 0.0
    %1397 = vmatmul.mubr.f32.gmra.mrb[0].mxu0 %v1197
    %v1398 = vpop.f32.mrb[0].mxu0
    %v1399 = vadd.f32 %v1330, %v1398
    %v1400 = vpop.f32.mrb[0].mxu0
    %1401 = vmatprep.mubr.f32.mxu0 0.0
    %1402 = vmatmul.mubr.f32.gmra.mrb[0].mxu0 %v1200
    %v1403 = vpop.f32.mrb[0].mxu0
    %v1404 = vadd.f32 %v1330, %v1403
    %v1405 = vpop.f32.mrb[0].mxu0
    %1406 = vmatprep.mubr.f32.mxu0 0.0
    %1407 = vmatmul.mubr.f32.gmra.mrb[0].mxu0 %v1203
    %v1408 = vpop.f32.mrb[0].mxu0
    %v1409 = vadd.f32 %v1330, %v1408
    %v1410 = vpop.f32.mrb[0].mxu0
    %1411 = vmatprep.mubr.f32.mxu0 0.0
    %1412 = vmatmul.mubr.f32.gmra.mrb[0].mxu0 %v1206
    %v1413 = vpop.f32.mrb[0].mxu0
    %v1414 = vadd.f32 %v1330, %v1413
    %v1415 = vpop.f32.mrb[0].mxu0
    %1416 = vdwg.mxu0
    %1418 = vset.pattern.permute.xlu0 0
    %1419 = vperm.xlu0 %1418, %v1317
    %v1420 = vpop.permute.xlu0 %1419
    %1423 = vset.pattern.permute.xlu0 0
    %1424 = vperm.xlu0 %1423, %v1318
    %v1425 = vpop.permute.xlu0 %1424
    %1428 = vset.pattern.permute.xlu0 0
    %1429 = vperm.xlu0 %1428, %v1319
    %v1430 = vpop.permute.xlu0 %1429
    %1433 = vset.pattern.permute.xlu0 0
    %1434 = vperm.xlu0 %1433, %v1320
    %v1435 = vpop.permute.xlu0 %1434
    %v1437 = vmul.f32 %v1420, %v1399
    %v1438 = vmul.f32 %v1425, %v1404
    %v1439 = vmul.f32 %v1430, %v1409
    %v1440 = vmul.f32 %v1435, %v1414
    %v1441 = vadd.f32 %v1313, %v1437
    %v1442 = vadd.f32 %v1314, %v1438
    %v1443 = vadd.f32 %v1315, %v1439
    %v1444 = vadd.f32 %v1316, %v1440
    %v1445 = vld [vmem:[%s47] sm:$0x1]
    %v1446 = vld [vmem:[%s39] sm:$0xff]
    %v1447 = vld [vmem:[%s39 + $0x8] sm:$0xff]
    %v1448 = vld [vmem:[%s39 + $0x10] sm:$0xff]
    %v1449 = vld [vmem:[%s39 + $0x18] sm:$0xff]
    %v1451 = vsel %vm308, %v206, 0
    %v1454 = vsel %vm308, %v207, 0
    %v1457 = vsel %vm308, %v208, 0
    %v1460 = vsel %vm308, %v209, 0
    %1462 = vmatprep.subr.mxu0 0.0
    %1463 = vmatpush1.msra.mxu0 %v1446
    %1464 = vmatprep.subr.mxu0 0.0
    %1465 = vmatpush1.msra.mxu0 %v1447
    %1466 = vmatprep.subr.mxu0 0.0
    %1467 = vmatpush1.msra.mxu0 %v1448
    %1468 = vmatprep.subr.mxu0 0.0
    %1469 = vmatpush1.msra.mxu0 %v1449
    %1470 = vmatprep.subr.mxu0 0.0
    %1471 = vmatpush1.msra.mxu0 0.0
    %1472 = vmatprep.subr.mxu0 0.0
    %1473 = vmatpush1.msra.mxu0 0.0
    %1474 = vmatprep.subr.mxu0 0.0
    %1475 = vmatpush1.msra.mxu0 0.0
    %1476 = vmatprep.subr.mxu0 0.0
    %1477 = vmatpush1.msra.mxu0 0.0
    %1478 = vmatprep.subr.mxu0 0.0
    %1479 = vmatpush1.msra.mxu0 0.0
    %1480 = vmatprep.subr.mxu0 0.0
    %1481 = vmatpush1.msra.mxu0 0.0
    %1482 = vmatprep.subr.mxu0 0.0
    %1483 = vmatpush1.msra.mxu0 0.0
    %1484 = vmatprep.subr.mxu0 0.0
    %1485 = vmatpush1.msra.mxu0 0.0
    %1486 = vmatprep.subr.mxu0 0.0
    %1487 = vmatpush1.msra.mxu0 0.0
    %1488 = vmatprep.subr.mxu0 0.0
    %1489 = vmatpush1.msra.mxu0 0.0
    %1490 = vmatprep.subr.mxu0 0.0
    %1491 = vmatpush1.msra.mxu0 0.0
    %1492 = vmatprep.subr.mxu0 0.0
    %1493 = vmatpush1.msra.mxu0 0.0
    %1494 = vmatprep.subr.mxu0 0.0
    %1495 = vmatpush1.msra.mxu0 0.0
    %1496 = vmatprep.subr.mxu0 0.0
    %1497 = vmatpush1.msra.mxu0 0.0
    %1498 = vmatprep.subr.mxu0 0.0
    %1499 = vmatpush1.msra.mxu0 0.0
    %1500 = vmatprep.subr.mxu0 0.0
    %1501 = vmatpush1.msra.mxu0 0.0
    %1502 = vmatprep.subr.mxu0 0.0
    %1503 = vmatpush1.msra.mxu0 0.0
    %1504 = vmatprep.subr.mxu0 0.0
    %1505 = vmatpush1.msra.mxu0 0.0
    %1506 = vmatprep.subr.mxu0 0.0
    %1507 = vmatpush1.msra.mxu0 0.0
    %1508 = vmatprep.subr.mxu0 0.0
    %1509 = vmatpush1.msra.mxu0 0.0
    %1510 = vmatprep.subr.mxu0 0.0
    %1511 = vmatpush1.msra.mxu0 0.0
    %1512 = vmatprep.subr.mxu0 0.0
    %1513 = vmatpush1.msra.mxu0 0.0
    %1514 = vmatprep.subr.mxu0 0.0
    %1515 = vmatpush1.msra.mxu0 0.0
    %1516 = vmatprep.subr.mxu0 0.0
    %1517 = vmatpush1.msra.mxu0 0.0
    %1518 = vmatprep.subr.mxu0 0.0
    %1519 = vmatpush1.msra.mxu0 0.0
    %1520 = vmatprep.subr.mxu0 0.0
    %1521 = vmatpush1.msra.mxu0 0.0
    %1522 = vmatprep.subr.mxu0 0.0
    %1523 = vmatpush1.msra.mxu0 0.0
    %1524 = vmatprep.subr.mxu0 0.0
    %1525 = vmatpush1.msra.mxu0 0.0
    %1526 = vmatprep.mubr.f32.mxu0 0.0
    %1527 = vmatmul.mubr.f32.gmra.mrb[0].mxu0 %v1451
    %v1528 = vpop.f32.mrb[0].mxu0
    %v1529 = vadd.f32 0.0, %v1528
    %v1530 = vpop.f32.mrb[0].mxu0
    %1531 = vmatprep.mubr.f32.mxu0 0.0
    %1532 = vmatmul.mubr.f32.gmra.mrb[0].mxu0 %v1454
    %v1533 = vpop.f32.mrb[0].mxu0
    %v1534 = vadd.f32 0.0, %v1533
    %v1535 = vpop.f32.mrb[0].mxu0
    %1536 = vmatprep.mubr.f32.mxu0 0.0
    %1537 = vmatmul.mubr.f32.gmra.mrb[0].mxu0 %v1457
    %v1538 = vpop.f32.mrb[0].mxu0
    %v1539 = vadd.f32 0.0, %v1538
    %v1540 = vpop.f32.mrb[0].mxu0
    %1541 = vmatprep.mubr.f32.mxu0 0.0
    %1542 = vmatmul.mubr.f32.gmra.mrb[0].mxu0 %v1460
    %v1543 = vpop.f32.mrb[0].mxu0
    %v1544 = vadd.f32 0.0, %v1543
    %v1545 = vpop.f32.mrb[0].mxu0
    %1546 = vdwg.mxu0
    %v1548 = vlaneseq
    %v1549 = vshrl.u32 %v1548, 7
    %v1550 = vsub.s32 0, %v1549
    %v1551 = vrot.slane %v1445, %v1550
    %v1553 = vadd.f32 %v1551, %v1529
    %v1554 = vadd.f32 %v1551, %v1534
    %v1555 = vadd.f32 %v1551, %v1539
    %v1556 = vadd.f32 %v1551, %v1544
    %v1557 = vld [vmem:[%s41] sm:$0xff]
    %v1558 = vld [vmem:[%s41 + $0x8] sm:$0xff]
    %v1559 = vld [vmem:[%s41 + $0x10] sm:$0xff]
    %v1560 = vld [vmem:[%s41 + $0x18] sm:$0xff]
    %v1561 = vld [vmem:[%s41 + $0x20] sm:$0xff]
    %v1562 = vld [vmem:[%s41 + $0x28] sm:$0xff]
    %v1563 = vld [vmem:[%s41 + $0x30] sm:$0xff]
    %v1564 = vld [vmem:[%s41 + $0x38] sm:$0xff]
    %v1565 = vld [vmem:[%s41 + $0x40] sm:$0xff]
    %v1566 = vld [vmem:[%s41 + $0x48] sm:$0xff]
    %v1567 = vld [vmem:[%s41 + $0x50] sm:$0xff]
    %v1568 = vld [vmem:[%s41 + $0x58] sm:$0xff]
    %v1569 = vld [vmem:[%s41 + $0x60] sm:$0xff]
    %v1570 = vld [vmem:[%s41 + $0x68] sm:$0xff]
    %v1571 = vld [vmem:[%s41 + $0x70] sm:$0xff]
    %v1572 = vld [vmem:[%s41 + $0x78] sm:$0xff]
    %1573 = vmatprep.subr.mxu0 0.0
    %1574 = vmatpush1.msra.mxu0 %v1557
    %1575 = vmatprep.subr.mxu0 0.0
    %1576 = vmatpush1.msra.mxu0 %v1558
    %1577 = vmatprep.subr.mxu0 0.0
    %1578 = vmatpush1.msra.mxu0 %v1559
    %1579 = vmatprep.subr.mxu0 0.0
    %1580 = vmatpush1.msra.mxu0 %v1560
    %1581 = vmatprep.subr.mxu0 0.0
    %1582 = vmatpush1.msra.mxu0 %v1561
    %1583 = vmatprep.subr.mxu0 0.0
    %1584 = vmatpush1.msra.mxu0 %v1562
    %1585 = vmatprep.subr.mxu0 0.0
    %1586 = vmatpush1.msra.mxu0 %v1563
    %1587 = vmatprep.subr.mxu0 0.0
    %1588 = vmatpush1.msra.mxu0 %v1564
    %1589 = vmatprep.subr.mxu0 0.0
    %1590 = vmatpush1.msra.mxu0 %v1565
    %1591 = vmatprep.subr.mxu0 0.0
    %1592 = vmatpush1.msra.mxu0 %v1566
    %1593 = vmatprep.subr.mxu0 0.0
    %1594 = vmatpush1.msra.mxu0 %v1567
    %1595 = vmatprep.subr.mxu0 0.0
    %1596 = vmatpush1.msra.mxu0 %v1568
    %1597 = vmatprep.subr.mxu0 0.0
    %1598 = vmatpush1.msra.mxu0 %v1569
    %1599 = vmatprep.subr.mxu0 0.0
    %1600 = vmatpush1.msra.mxu0 %v1570
    %1601 = vmatprep.subr.mxu0 0.0
    %1602 = vmatpush1.msra.mxu0 %v1571
    %1603 = vmatprep.subr.mxu0 0.0
    %1604 = vmatpush1.msra.mxu0 %v1572
    %1605 = vmatprep.subr.mxu0 0.0
    %1606 = vmatpush1.msra.mxu0 0.0
    %1607 = vmatprep.subr.mxu0 0.0
    %1608 = vmatpush1.msra.mxu0 0.0
    %1609 = vmatprep.subr.mxu0 0.0
    %1610 = vmatpush1.msra.mxu0 0.0
    %1611 = vmatprep.subr.mxu0 0.0
    %1612 = vmatpush1.msra.mxu0 0.0
    %1613 = vmatprep.subr.mxu0 0.0
    %1614 = vmatpush1.msra.mxu0 0.0
    %1615 = vmatprep.subr.mxu0 0.0
    %1616 = vmatpush1.msra.mxu0 0.0
    %1617 = vmatprep.subr.mxu0 0.0
    %1618 = vmatpush1.msra.mxu0 0.0
    %1619 = vmatprep.subr.mxu0 0.0
    %1620 = vmatpush1.msra.mxu0 0.0
    %1621 = vmatprep.subr.mxu0 0.0
    %1622 = vmatpush1.msra.mxu0 0.0
    %1623 = vmatprep.subr.mxu0 0.0
    %1624 = vmatpush1.msra.mxu0 0.0
    %1625 = vmatprep.subr.mxu0 0.0
    %1626 = vmatpush1.msra.mxu0 0.0
    %1627 = vmatprep.subr.mxu0 0.0
    %1628 = vmatpush1.msra.mxu0 0.0
    %1629 = vmatprep.subr.mxu0 0.0
    %1630 = vmatpush1.msra.mxu0 0.0
    %1631 = vmatprep.subr.mxu0 0.0
    %1632 = vmatpush1.msra.mxu0 0.0
    %1633 = vmatprep.subr.mxu0 0.0
    %1634 = vmatpush1.msra.mxu0 0.0
    %1635 = vmatprep.subr.mxu0 0.0
    %1636 = vmatpush1.msra.mxu0 0.0
    %1637 = vmatprep.mubr.f32.mxu0 0.0
    %1638 = vmatmul.mubr.f32.gmra.mrb[0].mxu0 %v1441
    %v1639 = vpop.f32.mrb[0].mxu0
    %v1640 = vadd.f32 0.0, %v1639
    %v1641 = vpop.f32.mrb[0].mxu0
    %1642 = vmatprep.mubr.f32.mxu0 0.0
    %1643 = vmatmul.mubr.f32.gmra.mrb[0].mxu0 %v1442
    %v1644 = vpop.f32.mrb[0].mxu0
    %v1645 = vadd.f32 0.0, %v1644
    %v1646 = vpop.f32.mrb[0].mxu0
    %1647 = vmatprep.mubr.f32.mxu0 0.0
    %1648 = vmatmul.mubr.f32.gmra.mrb[0].mxu0 %v1443
    %v1649 = vpop.f32.mrb[0].mxu0
    %v1650 = vadd.f32 0.0, %v1649
    %v1651 = vpop.f32.mrb[0].mxu0
    %1652 = vmatprep.mubr.f32.mxu0 0.0
    %1653 = vmatmul.mubr.f32.gmra.mrb[0].mxu0 %v1444
    %v1654 = vpop.f32.mrb[0].mxu0
    %v1655 = vadd.f32 0.0, %v1654
    %v1656 = vpop.f32.mrb[0].mxu0
    %1657 = vdwg.mxu0
    %v1658 = vadd.f32 %v1553, %v1640
    %v1659 = vadd.f32 %v1554, %v1645
    %v1660 = vadd.f32 %v1555, %v1650
    %v1661 = vadd.f32 %v1556, %v1655
    %v1662 = vld [vmem:[%s43] sm:$0xff]
    %v1663 = vld [vmem:[%s43 + $0x8] sm:$0xff]
    %v1664 = vld [vmem:[%s43 + $0x10] sm:$0xff]
    %v1665 = vld [vmem:[%s43 + $0x18] sm:$0xff]
    %v1667 = vsel %vm308, %v1163, 0
    %v1670 = vsel %vm308, %v1168, 0
    %v1673 = vsel %vm308, %v1173, 0
    %v1676 = vsel %vm308, %v1178, 0
    %1678 = vmatprep.subr.mxu0 0.0
    %1679 = vmatpush1.msra.mxu0 %v1662
    %1680 = vmatprep.subr.mxu0 0.0
    %1681 = vmatpush1.msra.mxu0 %v1663
    %1682 = vmatprep.subr.mxu0 0.0
    %1683 = vmatpush1.msra.mxu0 %v1664
    %1684 = vmatprep.subr.mxu0 0.0
    %1685 = vmatpush1.msra.mxu0 %v1665
    %1686 = vmatprep.subr.mxu0 0.0
    %1687 = vmatpush1.msra.mxu0 0.0
    %1688 = vmatprep.subr.mxu0 0.0
    %1689 = vmatpush1.msra.mxu0 0.0
    %1690 = vmatprep.subr.mxu0 0.0
    %1691 = vmatpush1.msra.mxu0 0.0
    %1692 = vmatprep.subr.mxu0 0.0
    %1693 = vmatpush1.msra.mxu0 0.0
    %1694 = vmatprep.subr.mxu0 0.0
    %1695 = vmatpush1.msra.mxu0 0.0
    %1696 = vmatprep.subr.mxu0 0.0
    %1697 = vmatpush1.msra.mxu0 0.0
    %1698 = vmatprep.subr.mxu0 0.0
    %1699 = vmatpush1.msra.mxu0 0.0
    %1700 = vmatprep.subr.mxu0 0.0
    %1701 = vmatpush1.msra.mxu0 0.0
    %1702 = vmatprep.subr.mxu0 0.0
    %1703 = vmatpush1.msra.mxu0 0.0
    %1704 = vmatprep.subr.mxu0 0.0
    %1705 = vmatpush1.msra.mxu0 0.0
    %1706 = vmatprep.subr.mxu0 0.0
    %1707 = vmatpush1.msra.mxu0 0.0
    %1708 = vmatprep.subr.mxu0 0.0
    %1709 = vmatpush1.msra.mxu0 0.0
    %1710 = vmatprep.subr.mxu0 0.0
    %1711 = vmatpush1.msra.mxu0 0.0
    %1712 = vmatprep.subr.mxu0 0.0
    %1713 = vmatpush1.msra.mxu0 0.0
    %1714 = vmatprep.subr.mxu0 0.0
    %1715 = vmatpush1.msra.mxu0 0.0
    %1716 = vmatprep.subr.mxu0 0.0
    %1717 = vmatpush1.msra.mxu0 0.0
    %1718 = vmatprep.subr.mxu0 0.0
    %1719 = vmatpush1.msra.mxu0 0.0
    %1720 = vmatprep.subr.mxu0 0.0
    %1721 = vmatpush1.msra.mxu0 0.0
    %1722 = vmatprep.subr.mxu0 0.0
    %1723 = vmatpush1.msra.mxu0 0.0
    %1724 = vmatprep.subr.mxu0 0.0
    %1725 = vmatpush1.msra.mxu0 0.0
    %1726 = vmatprep.subr.mxu0 0.0
    %1727 = vmatpush1.msra.mxu0 0.0
    %1728 = vmatprep.subr.mxu0 0.0
    %1729 = vmatpush1.msra.mxu0 0.0
    %1730 = vmatprep.subr.mxu0 0.0
    %1731 = vmatpush1.msra.mxu0 0.0
    %1732 = vmatprep.subr.mxu0 0.0
    %1733 = vmatpush1.msra.mxu0 0.0
    %1734 = vmatprep.subr.mxu0 0.0
    %1735 = vmatpush1.msra.mxu0 0.0
    %1736 = vmatprep.subr.mxu0 0.0
    %1737 = vmatpush1.msra.mxu0 0.0
    %1738 = vmatprep.subr.mxu0 0.0
    %1739 = vmatpush1.msra.mxu0 0.0
    %1740 = vmatprep.subr.mxu0 0.0
    %1741 = vmatpush1.msra.mxu0 0.0
    %1742 = vmatprep.mubr.f32.mxu0 0.0
    %1743 = vmatmul.mubr.f32.gmra.mrb[0].mxu0 %v1667
    %v1744 = vpop.f32.mrb[0].mxu0
    %v1745 = vadd.f32 0.0, %v1744
    %v1746 = vpop.f32.mrb[0].mxu0
    %1747 = vmatprep.mubr.f32.mxu0 0.0
    %1748 = vmatmul.mubr.f32.gmra.mrb[0].mxu0 %v1670
    %v1749 = vpop.f32.mrb[0].mxu0
    %v1750 = vadd.f32 0.0, %v1749
    %v1751 = vpop.f32.mrb[0].mxu0
    %1752 = vmatprep.mubr.f32.mxu0 0.0
    %1753 = vmatmul.mubr.f32.gmra.mrb[0].mxu0 %v1673
    %v1754 = vpop.f32.mrb[0].mxu0
    %v1755 = vadd.f32 0.0, %v1754
    %v1756 = vpop.f32.mrb[0].mxu0
    %1757 = vmatprep.mubr.f32.mxu0 0.0
    %1758 = vmatmul.mubr.f32.gmra.mrb[0].mxu0 %v1676
    %v1759 = vpop.f32.mrb[0].mxu0
    %v1760 = vadd.f32 0.0, %v1759
    %v1761 = vpop.f32.mrb[0].mxu0
    %1762 = vdwg.mxu0
    %v1763 = vadd.f32 %v1658, %v1745
    %v1764 = vadd.f32 %v1659, %v1750
    %v1765 = vadd.f32 %v1660, %v1755
    %v1766 = vadd.f32 %v1661, %v1760
    %v1767 = vld [vmem:[%s45] sm:$0xff]
    %v1768 = vld [vmem:[%s45 + $0x8] sm:$0xff]
    %v1769 = vld [vmem:[%s45 + $0x10] sm:$0xff]
    %v1770 = vld [vmem:[%s45 + $0x18] sm:$0xff]
    %1771 = vmatprep.subr.mxu0 0.0
    %1772 = vmatpush1.msra.mxu0 %v1767
    %1773 = vmatprep.subr.mxu0 0.0
    %1774 = vmatpush1.msra.mxu0 %v1768
    %1775 = vmatprep.subr.mxu0 0.0
    %1776 = vmatpush1.msra.mxu0 %v1769
    %1777 = vmatprep.subr.mxu0 0.0
    %1778 = vmatpush1.msra.mxu0 %v1770
    %1779 = vmatprep.subr.mxu0 0.0
    %1780 = vmatpush1.msra.mxu0 0.0
    %1781 = vmatprep.subr.mxu0 0.0
    %1782 = vmatpush1.msra.mxu0 0.0
    %1783 = vmatprep.subr.mxu0 0.0
    %1784 = vmatpush1.msra.mxu0 0.0
    %1785 = vmatprep.subr.mxu0 0.0
    %1786 = vmatpush1.msra.mxu0 0.0
    %1787 = vmatprep.subr.mxu0 0.0
    %1788 = vmatpush1.msra.mxu0 0.0
    %1789 = vmatprep.subr.mxu0 0.0
    %1790 = vmatpush1.msra.mxu0 0.0
    %1791 = vmatprep.subr.mxu0 0.0
    %1792 = vmatpush1.msra.mxu0 0.0
    %1793 = vmatprep.subr.mxu0 0.0
    %1794 = vmatpush1.msra.mxu0 0.0
    %1795 = vmatprep.subr.mxu0 0.0
    %1796 = vmatpush1.msra.mxu0 0.0
    %1797 = vmatprep.subr.mxu0 0.0
    %1798 = vmatpush1.msra.mxu0 0.0
    %1799 = vmatprep.subr.mxu0 0.0
    %1800 = vmatpush1.msra.mxu0 0.0
    %1801 = vmatprep.subr.mxu0 0.0
    %1802 = vmatpush1.msra.mxu0 0.0
    %1803 = vmatprep.subr.mxu0 0.0
    %1804 = vmatpush1.msra.mxu0 0.0
    %1805 = vmatprep.subr.mxu0 0.0
    %1806 = vmatpush1.msra.mxu0 0.0
    %1807 = vmatprep.subr.mxu0 0.0
    %1808 = vmatpush1.msra.mxu0 0.0
    %1809 = vmatprep.subr.mxu0 0.0
    %1810 = vmatpush1.msra.mxu0 0.0
    %1811 = vmatprep.subr.mxu0 0.0
    %1812 = vmatpush1.msra.mxu0 0.0
    %1813 = vmatprep.subr.mxu0 0.0
    %1814 = vmatpush1.msra.mxu0 0.0
    %1815 = vmatprep.subr.mxu0 0.0
    %1816 = vmatpush1.msra.mxu0 0.0
    %1817 = vmatprep.subr.mxu0 0.0
    %1818 = vmatpush1.msra.mxu0 0.0
    %1819 = vmatprep.subr.mxu0 0.0
    %1820 = vmatpush1.msra.mxu0 0.0
    %1821 = vmatprep.subr.mxu0 0.0
    %1822 = vmatpush1.msra.mxu0 0.0
    %1823 = vmatprep.subr.mxu0 0.0
    %1824 = vmatpush1.msra.mxu0 0.0
    %1825 = vmatprep.subr.mxu0 0.0
    %1826 = vmatpush1.msra.mxu0 0.0
    %1827 = vmatprep.subr.mxu0 0.0
    %1828 = vmatpush1.msra.mxu0 0.0
    %1829 = vmatprep.subr.mxu0 0.0
    %1830 = vmatpush1.msra.mxu0 0.0
    %1831 = vmatprep.subr.mxu0 0.0
    %1832 = vmatpush1.msra.mxu0 0.0
    %1833 = vmatprep.subr.mxu0 0.0
    %1834 = vmatpush1.msra.mxu0 0.0
    %1835 = vmatprep.mubr.f32.mxu0 0.0
    %1836 = vmatmul.mubr.f32.gmra.mrb[0].mxu0 %v1197
    %v1837 = vpop.f32.mrb[0].mxu0
    %v1838 = vadd.f32 0.0, %v1837
    %v1839 = vpop.f32.mrb[0].mxu0
    %1840 = vmatprep.mubr.f32.mxu0 0.0
    %1841 = vmatmul.mubr.f32.gmra.mrb[0].mxu0 %v1200
    %v1842 = vpop.f32.mrb[0].mxu0
    %v1843 = vadd.f32 0.0, %v1842
    %v1844 = vpop.f32.mrb[0].mxu0
    %1845 = vmatprep.mubr.f32.mxu0 0.0
    %1846 = vmatmul.mubr.f32.gmra.mrb[0].mxu0 %v1203
    %v1847 = vpop.f32.mrb[0].mxu0
    %v1848 = vadd.f32 0.0, %v1847
    %v1849 = vpop.f32.mrb[0].mxu0
    %1850 = vmatprep.mubr.f32.mxu0 0.0
    %1851 = vmatmul.mubr.f32.gmra.mrb[0].mxu0 %v1206
    %v1852 = vpop.f32.mrb[0].mxu0
    %v1853 = vadd.f32 0.0, %v1852
    %v1854 = vpop.f32.mrb[0].mxu0
    %1855 = vdwg.mxu0
    %v1856 = vadd.f32 %v1763, %v1838
    %v1857 = vadd.f32 %v1764, %v1843
    %v1858 = vadd.f32 %v1765, %v1848
    %v1859 = vadd.f32 %v1766, %v1853
    %v1860 = vmax.f32 %v1856, 0.0
    %v1861 = vmax.f32 %v1857, 0.0
    %v1862 = vmax.f32 %v1858, 0.0
    %v1863 = vmax.f32 %v1859, 0.0
    %v1864 = vld [vmem:[%s51] sm:$0x1]
    %v1865 = vld [vmem:[%s49] sm:$0xff]
    %v1866 = vld [vmem:[%s49 + $0x8] sm:$0xff]
    %v1867 = vld [vmem:[%s49 + $0x10] sm:$0xff]
    %v1868 = vld [vmem:[%s49 + $0x18] sm:$0xff]
    %v1869 = vld [vmem:[%s49 + $0x20] sm:$0xff]
    %v1870 = vld [vmem:[%s49 + $0x28] sm:$0xff]
    %v1871 = vld [vmem:[%s49 + $0x30] sm:$0xff]
    %v1872 = vld [vmem:[%s49 + $0x38] sm:$0xff]
    %v1874 = vsel %vm515, %v1860, 0
    %v1877 = vsel %vm515, %v1861, 0
    %v1880 = vsel %vm515, %v1862, 0
    %v1883 = vsel %vm515, %v1863, 0
    %1885 = vmatprep.subr.mxu0 0.0
    %1886 = vmatpush1.msra.mxu0 %v1865
    %1887 = vmatprep.subr.mxu0 0.0
    %1888 = vmatpush1.msra.mxu0 %v1866
    %1889 = vmatprep.subr.mxu0 0.0
    %1890 = vmatpush1.msra.mxu0 %v1867
    %1891 = vmatprep.subr.mxu0 0.0
    %1892 = vmatpush1.msra.mxu0 %v1868
    %1893 = vmatprep.subr.mxu0 0.0
    %1894 = vmatpush1.msra.mxu0 %v1869
    %1895 = vmatprep.subr.mxu0 0.0
    %1896 = vmatpush1.msra.mxu0 %v1870
    %1897 = vmatprep.subr.mxu0 0.0
    %1898 = vmatpush1.msra.mxu0 %v1871
    %1899 = vmatprep.subr.mxu0 0.0
    %1900 = vmatpush1.msra.mxu0 %v1872
    %1901 = vmatprep.subr.mxu0 0.0
    %1902 = vmatpush1.msra.mxu0 0.0
    %1903 = vmatprep.subr.mxu0 0.0
    %1904 = vmatpush1.msra.mxu0 0.0
    %1905 = vmatprep.subr.mxu0 0.0
    %1906 = vmatpush1.msra.mxu0 0.0
    %1907 = vmatprep.subr.mxu0 0.0
    %1908 = vmatpush1.msra.mxu0 0.0
    %1909 = vmatprep.subr.mxu0 0.0
    %1910 = vmatpush1.msra.mxu0 0.0
    %1911 = vmatprep.subr.mxu0 0.0
    %1912 = vmatpush1.msra.mxu0 0.0
    %1913 = vmatprep.subr.mxu0 0.0
    %1914 = vmatpush1.msra.mxu0 0.0
    %1915 = vmatprep.subr.mxu0 0.0
    %1916 = vmatpush1.msra.mxu0 0.0
    %1917 = vmatprep.subr.mxu0 0.0
    %1918 = vmatpush1.msra.mxu0 0.0
    %1919 = vmatprep.subr.mxu0 0.0
    %1920 = vmatpush1.msra.mxu0 0.0
    %1921 = vmatprep.subr.mxu0 0.0
    %1922 = vmatpush1.msra.mxu0 0.0
    %1923 = vmatprep.subr.mxu0 0.0
    %1924 = vmatpush1.msra.mxu0 0.0
    %1925 = vmatprep.subr.mxu0 0.0
    %1926 = vmatpush1.msra.mxu0 0.0
    %1927 = vmatprep.subr.mxu0 0.0
    %1928 = vmatpush1.msra.mxu0 0.0
    %1929 = vmatprep.subr.mxu0 0.0
    %1930 = vmatpush1.msra.mxu0 0.0
    %1931 = vmatprep.subr.mxu0 0.0
    %1932 = vmatpush1.msra.mxu0 0.0
    %1933 = vmatprep.subr.mxu0 0.0
    %1934 = vmatpush1.msra.mxu0 0.0
    %1935 = vmatprep.subr.mxu0 0.0
    %1936 = vmatpush1.msra.mxu0 0.0
    %1937 = vmatprep.subr.mxu0 0.0
    %1938 = vmatpush1.msra.mxu0 0.0
    %1939 = vmatprep.subr.mxu0 0.0
    %1940 = vmatpush1.msra.mxu0 0.0
    %1941 = vmatprep.subr.mxu0 0.0
    %1942 = vmatpush1.msra.mxu0 0.0
    %1943 = vmatprep.subr.mxu0 0.0
    %1944 = vmatpush1.msra.mxu0 0.0
    %1945 = vmatprep.subr.mxu0 0.0
    %1946 = vmatpush1.msra.mxu0 0.0
    %1947 = vmatprep.subr.mxu0 0.0
    %1948 = vmatpush1.msra.mxu0 0.0
    %1949 = vmatprep.mubr.f32.mxu0 0.0
    %1950 = vmatmul.mubr.f32.gmra.mrb[0].mxu0 %v1874
    %v1951 = vpop.f32.mrb[0].mxu0
    %v1952 = vadd.f32 0.0, %v1951
    %v1953 = vpop.f32.mrb[0].mxu0
    %1954 = vmatprep.mubr.f32.mxu0 0.0
    %1955 = vmatmul.mubr.f32.gmra.mrb[0].mxu0 %v1877
    %v1956 = vpop.f32.mrb[0].mxu0
    %v1957 = vadd.f32 0.0, %v1956
    %v1958 = vpop.f32.mrb[0].mxu0
    %1959 = vmatprep.mubr.f32.mxu0 0.0
    %1960 = vmatmul.mubr.f32.gmra.mrb[0].mxu0 %v1880
    %v1961 = vpop.f32.mrb[0].mxu0
    %v1962 = vadd.f32 0.0, %v1961
    %v1963 = vpop.f32.mrb[0].mxu0
    %1964 = vmatprep.mubr.f32.mxu0 0.0
    %1965 = vmatmul.mubr.f32.gmra.mrb[0].mxu0 %v1883
    %v1966 = vpop.f32.mrb[0].mxu0
    %v1967 = vadd.f32 0.0, %v1966
    %v1968 = vpop.f32.mrb[0].mxu0
    %1969 = vdwg.mxu0
    %v1971 = vlaneseq
    %v1972 = vshrl.u32 %v1971, 7
    %v1973 = vsub.s32 0, %v1972
    %v1974 = vrot.slane %v1864, %v1973
    %v1976 = vadd.f32 %v1974, %v1952
    %v1977 = vadd.f32 %v1974, %v1957
    %v1978 = vadd.f32 %v1974, %v1962
    %v1979 = vadd.f32 %v1974, %v1967
    %v1980 = vmax.f32 %v1976, 0.0
    %v1981 = vmax.f32 %v1977, 0.0
    %v1982 = vmax.f32 %v1978, 0.0
    %v1983 = vmax.f32 %v1979, 0.0
    %v1984 = vld [vmem:[%s55] sm:$0x1]
    %v1985 = vld [vmem:[%s53] sm:$0xff]
    %v1986 = vld [vmem:[%s53 + $0x8] sm:$0xff]
    %v1987 = vld [vmem:[%s53 + $0x10] sm:$0xff]
    %v1988 = vld [vmem:[%s53 + $0x18] sm:$0xff]
    %v1989 = vld [vmem:[%s53 + $0x20] sm:$0xff]
    %v1990 = vld [vmem:[%s53 + $0x28] sm:$0xff]
    %v1991 = vld [vmem:[%s53 + $0x30] sm:$0xff]
    %v1992 = vld [vmem:[%s53 + $0x38] sm:$0xff]
    %v1994 = vsel %vm515, %v1980, 0
    %v1997 = vsel %vm515, %v1981, 0
    %v2000 = vsel %vm515, %v1982, 0
    %v2003 = vsel %vm515, %v1983, 0
    %2005 = vmatprep.subr.mxu0 0.0
    %2006 = vmatpush1.msra.mxu0 %v1985
    %2007 = vmatprep.subr.mxu0 0.0
    %2008 = vmatpush1.msra.mxu0 %v1986
    %2009 = vmatprep.subr.mxu0 0.0
    %2010 = vmatpush1.msra.mxu0 %v1987
    %2011 = vmatprep.subr.mxu0 0.0
    %2012 = vmatpush1.msra.mxu0 %v1988
    %2013 = vmatprep.subr.mxu0 0.0
    %2014 = vmatpush1.msra.mxu0 %v1989
    %2015 = vmatprep.subr.mxu0 0.0
    %2016 = vmatpush1.msra.mxu0 %v1990
    %2017 = vmatprep.subr.mxu0 0.0
    %2018 = vmatpush1.msra.mxu0 %v1991
    %2019 = vmatprep.subr.mxu0 0.0
    %2020 = vmatpush1.msra.mxu0 %v1992
    %2021 = vmatprep.subr.mxu0 0.0
    %2022 = vmatpush1.msra.mxu0 0.0
    %2023 = vmatprep.subr.mxu0 0.0
    %2024 = vmatpush1.msra.mxu0 0.0
    %2025 = vmatprep.subr.mxu0 0.0
    %2026 = vmatpush1.msra.mxu0 0.0
    %2027 = vmatprep.subr.mxu0 0.0
    %2028 = vmatpush1.msra.mxu0 0.0
    %2029 = vmatprep.subr.mxu0 0.0
    %2030 = vmatpush1.msra.mxu0 0.0
    %2031 = vmatprep.subr.mxu0 0.0
    %2032 = vmatpush1.msra.mxu0 0.0
    %2033 = vmatprep.subr.mxu0 0.0
    %2034 = vmatpush1.msra.mxu0 0.0
    %2035 = vmatprep.subr.mxu0 0.0
    %2036 = vmatpush1.msra.mxu0 0.0
    %2037 = vmatprep.subr.mxu0 0.0
    %2038 = vmatpush1.msra.mxu0 0.0
    %2039 = vmatprep.subr.mxu0 0.0
    %2040 = vmatpush1.msra.mxu0 0.0
    %2041 = vmatprep.subr.mxu0 0.0
    %2042 = vmatpush1.msra.mxu0 0.0
    %2043 = vmatprep.subr.mxu0 0.0
    %2044 = vmatpush1.msra.mxu0 0.0
    %2045 = vmatprep.subr.mxu0 0.0
    %2046 = vmatpush1.msra.mxu0 0.0
    %2047 = vmatprep.subr.mxu0 0.0
    %2048 = vmatpush1.msra.mxu0 0.0
    %2049 = vmatprep.subr.mxu0 0.0
    %2050 = vmatpush1.msra.mxu0 0.0
    %2051 = vmatprep.subr.mxu0 0.0
    %2052 = vmatpush1.msra.mxu0 0.0
    %2053 = vmatprep.subr.mxu0 0.0
    %2054 = vmatpush1.msra.mxu0 0.0
    %2055 = vmatprep.subr.mxu0 0.0
    %2056 = vmatpush1.msra.mxu0 0.0
    %2057 = vmatprep.subr.mxu0 0.0
    %2058 = vmatpush1.msra.mxu0 0.0
    %2059 = vmatprep.subr.mxu0 0.0
    %2060 = vmatpush1.msra.mxu0 0.0
    %2061 = vmatprep.subr.mxu0 0.0
    %2062 = vmatpush1.msra.mxu0 0.0
    %2063 = vmatprep.subr.mxu0 0.0
    %2064 = vmatpush1.msra.mxu0 0.0
    %2065 = vmatprep.subr.mxu0 0.0
    %2066 = vmatpush1.msra.mxu0 0.0
    %2067 = vmatprep.subr.mxu0 0.0
    %2068 = vmatpush1.msra.mxu0 0.0
    %2069 = vmatprep.mubr.f32.mxu0 0.0
    %2070 = vmatmul.mubr.f32.gmra.mrb[0].mxu0 %v1994
    %v2071 = vpop.f32.mrb[0].mxu0
    %v2072 = vadd.f32 0.0, %v2071
    %v2073 = vpop.f32.mrb[0].mxu0
    %2074 = vmatprep.mubr.f32.mxu0 0.0
    %2075 = vmatmul.mubr.f32.gmra.mrb[0].mxu0 %v1997
    %v2076 = vpop.f32.mrb[0].mxu0
    %v2077 = vadd.f32 0.0, %v2076
    %v2078 = vpop.f32.mrb[0].mxu0
    %2079 = vmatprep.mubr.f32.mxu0 0.0
    %2080 = vmatmul.mubr.f32.gmra.mrb[0].mxu0 %v2000
    %v2081 = vpop.f32.mrb[0].mxu0
    %v2082 = vadd.f32 0.0, %v2081
    %v2083 = vpop.f32.mrb[0].mxu0
    %2084 = vmatprep.mubr.f32.mxu0 0.0
    %2085 = vmatmul.mubr.f32.gmra.mrb[0].mxu0 %v2003
    %v2086 = vpop.f32.mrb[0].mxu0
    %v2087 = vadd.f32 0.0, %v2086
    %v2088 = vpop.f32.mrb[0].mxu0
    %2089 = vdwg.mxu0
    %v2091 = vlaneseq
    %v2092 = vshrl.u32 %v2091, 7
    %v2093 = vsub.s32 0, %v2092
    %v2094 = vrot.slane %v1984, %v2093
    %v2096 = vadd.f32 %v2094, %v2072
    %v2097 = vadd.f32 %v2094, %v2077
    %v2098 = vadd.f32 %v2094, %v2082
    %v2099 = vadd.f32 %v2094, %v2087
    %v2100 = vld [vmem:[%s17] sm:$0xff]
    %v2101 = vld [vmem:[%s17 + $0x8] sm:$0xff]
    %v2102 = vld [vmem:[%s17 + $0x10] sm:$0xff]
    %vm2103 = vcmask 220160
    %v2105 = vsel %vm2103, %v2100, 0
    %v2108 = vsel %vm2103, %v2101, 0
    %v2111 = vsel %vm2103, %v2102, 0
    %vm2113 = vcmask 1042432
    %v2115 = vsel %vm2113, %v2099, 0
    %2117 = vmatprep.subr.mxu0 0.0
    %2118 = vmatpush1.msra.mxu0 %v2096
    %2119 = vmatprep.subr.mxu0 0.0
    %2120 = vmatpush1.msra.mxu0 %v2097
    %2121 = vmatprep.subr.mxu0 0.0
    %2122 = vmatpush1.msra.mxu0 %v2098
    %2123 = vmatprep.subr.mxu0 0.0
    %2124 = vmatpush1.msra.mxu0 %v2115
    %2125 = vmatprep.subr.mxu0 0.0
    %2126 = vmatpush1.msra.mxu0 0.0
    %2127 = vmatprep.subr.mxu0 0.0
    %2128 = vmatpush1.msra.mxu0 0.0
    %2129 = vmatprep.subr.mxu0 0.0
    %2130 = vmatpush1.msra.mxu0 0.0
    %2131 = vmatprep.subr.mxu0 0.0
    %2132 = vmatpush1.msra.mxu0 0.0
    %2133 = vmatprep.subr.mxu0 0.0
    %2134 = vmatpush1.msra.mxu0 0.0
    %2135 = vmatprep.subr.mxu0 0.0
    %2136 = vmatpush1.msra.mxu0 0.0
    %2137 = vmatprep.subr.mxu0 0.0
    %2138 = vmatpush1.msra.mxu0 0.0
    %2139 = vmatprep.subr.mxu0 0.0
    %2140 = vmatpush1.msra.mxu0 0.0
    %2141 = vmatprep.subr.mxu0 0.0
    %2142 = vmatpush1.msra.mxu0 0.0
    %2143 = vmatprep.subr.mxu0 0.0
    %2144 = vmatpush1.msra.mxu0 0.0
    %2145 = vmatprep.subr.mxu0 0.0
    %2146 = vmatpush1.msra.mxu0 0.0
    %2147 = vmatprep.subr.mxu0 0.0
    %2148 = vmatpush1.msra.mxu0 0.0
    %2149 = vmatprep.subr.mxu0 0.0
    %2150 = vmatpush1.msra.mxu0 0.0
    %2151 = vmatprep.subr.mxu0 0.0
    %2152 = vmatpush1.msra.mxu0 0.0
    %2153 = vmatprep.subr.mxu0 0.0
    %2154 = vmatpush1.msra.mxu0 0.0
    %2155 = vmatprep.subr.mxu0 0.0
    %2156 = vmatpush1.msra.mxu0 0.0
    %2157 = vmatprep.subr.mxu0 0.0
    %2158 = vmatpush1.msra.mxu0 0.0
    %2159 = vmatprep.subr.mxu0 0.0
    %2160 = vmatpush1.msra.mxu0 0.0
    %2161 = vmatprep.subr.mxu0 0.0
    %2162 = vmatpush1.msra.mxu0 0.0
    %2163 = vmatprep.subr.mxu0 0.0
    %2164 = vmatpush1.msra.mxu0 0.0
    %2165 = vmatprep.subr.mxu0 0.0
    %2166 = vmatpush1.msra.mxu0 0.0
    %2167 = vmatprep.subr.mxu0 0.0
    %2168 = vmatpush1.msra.mxu0 0.0
    %2169 = vmatprep.subr.mxu0 0.0
    %2170 = vmatpush1.msra.mxu0 0.0
    %2171 = vmatprep.subr.mxu0 0.0
    %2172 = vmatpush1.msra.mxu0 0.0
    %2173 = vmatprep.subr.mxu0 0.0
    %2174 = vmatpush1.msra.mxu0 0.0
    %2175 = vmatprep.subr.mxu0 0.0
    %2176 = vmatpush1.msra.mxu0 0.0
    %2177 = vmatprep.subr.mxu0 0.0
    %2178 = vmatpush1.msra.mxu0 0.0
    %2179 = vmatprep.subr.mxu0 0.0
    %2180 = vmatpush1.msra.mxu0 0.0
    %2181 = vmatprep.mubr.f32.mxu0 0.0
    %2182 = vmatmul.mubr.f32.gmra.mrb[0].mxu0 %v2105
    %v2183 = vpop.f32.mrb[0].mxu0
    %v2184 = vadd.f32 0.0, %v2183
    %v2185 = vpop.f32.mrb[0].mxu0
    %2186 = vmatprep.mubr.f32.mxu0 0.0
    %2187 = vmatmul.mubr.f32.gmra.mrb[0].mxu0 %v2108
    %v2188 = vpop.f32.mrb[0].mxu0
    %v2189 = vadd.f32 0.0, %v2188
    %v2190 = vpop.f32.mrb[0].mxu0
    %2191 = vmatprep.mubr.f32.mxu0 0.0
    %2192 = vmatmul.mubr.f32.gmra.mrb[0].mxu0 %v2111
    %v2193 = vpop.f32.mrb[0].mxu0
    %v2194 = vadd.f32 0.0, %v2193
    %v2195 = vpop.f32.mrb[0].mxu0
    %2196 = vdwg.mxu0
    %v2197 = vld [vmem:[%s15] sm:$0xff]
    %v2198 = vld [vmem:[%s15 + $0x8] sm:$0xff]
    %v2199 = vld [vmem:[%s15 + $0x10] sm:$0xff]
    %v2201 = vsel %vm2103, %v2197, 0
    %v2204 = vsel %vm2103, %v2198, 0
    %v2207 = vsel %vm2103, %v2199, 0
    %2209 = vmatprep.subr.mxu0 0.0
    %2210 = vmatpush1.msra.mxu0 %v2096
    %2211 = vmatprep.subr.mxu0 0.0
    %2212 = vmatpush1.msra.mxu0 %v2097
    %2213 = vmatprep.subr.mxu0 0.0
    %2214 = vmatpush1.msra.mxu0 %v2098
    %2215 = vmatprep.subr.mxu0 0.0
    %2216 = vmatpush1.msra.mxu0 %v2115
    %2217 = vmatprep.subr.mxu0 0.0
    %2218 = vmatpush1.msra.mxu0 0.0
    %2219 = vmatprep.subr.mxu0 0.0
    %2220 = vmatpush1.msra.mxu0 0.0
    %2221 = vmatprep.subr.mxu0 0.0
    %2222 = vmatpush1.msra.mxu0 0.0
    %2223 = vmatprep.subr.mxu0 0.0
    %2224 = vmatpush1.msra.mxu0 0.0
    %2225 = vmatprep.subr.mxu0 0.0
    %2226 = vmatpush1.msra.mxu0 0.0
    %2227 = vmatprep.subr.mxu0 0.0
    %2228 = vmatpush1.msra.mxu0 0.0
    %2229 = vmatprep.subr.mxu0 0.0
    %2230 = vmatpush1.msra.mxu0 0.0
    %2231 = vmatprep.subr.mxu0 0.0
    %2232 = vmatpush1.msra.mxu0 0.0
    %2233 = vmatprep.subr.mxu0 0.0
    %2234 = vmatpush1.msra.mxu0 0.0
    %2235 = vmatprep.subr.mxu0 0.0
    %2236 = vmatpush1.msra.mxu0 0.0
    %2237 = vmatprep.subr.mxu0 0.0
    %2238 = vmatpush1.msra.mxu0 0.0
    %2239 = vmatprep.subr.mxu0 0.0
    %2240 = vmatpush1.msra.mxu0 0.0
    %2241 = vmatprep.subr.mxu0 0.0
    %2242 = vmatpush1.msra.mxu0 0.0
    %2243 = vmatprep.subr.mxu0 0.0
    %2244 = vmatpush1.msra.mxu0 0.0
    %2245 = vmatprep.subr.mxu0 0.0
    %2246 = vmatpush1.msra.mxu0 0.0
    %2247 = vmatprep.subr.mxu0 0.0
    %2248 = vmatpush1.msra.mxu0 0.0
    %2249 = vmatprep.subr.mxu0 0.0
    %2250 = vmatpush1.msra.mxu0 0.0
    %2251 = vmatprep.subr.mxu0 0.0
    %2252 = vmatpush1.msra.mxu0 0.0
    %2253 = vmatprep.subr.mxu0 0.0
    %2254 = vmatpush1.msra.mxu0 0.0
    %2255 = vmatprep.subr.mxu0 0.0
    %2256 = vmatpush1.msra.mxu0 0.0
    %2257 = vmatprep.subr.mxu0 0.0
    %2258 = vmatpush1.msra.mxu0 0.0
    %2259 = vmatprep.subr.mxu0 0.0
    %2260 = vmatpush1.msra.mxu0 0.0
    %2261 = vmatprep.subr.mxu0 0.0
    %2262 = vmatpush1.msra.mxu0 0.0
    %2263 = vmatprep.subr.mxu0 0.0
    %2264 = vmatpush1.msra.mxu0 0.0
    %2265 = vmatprep.subr.mxu0 0.0
    %2266 = vmatpush1.msra.mxu0 0.0
    %2267 = vmatprep.subr.mxu0 0.0
    %2268 = vmatpush1.msra.mxu0 0.0
    %2269 = vmatprep.subr.mxu0 0.0
    %2270 = vmatpush1.msra.mxu0 0.0
    %2271 = vmatprep.subr.mxu0 0.0
    %2272 = vmatpush1.msra.mxu0 0.0
    %2273 = vmatprep.mubr.f32.mxu0 0.0
    %2274 = vmatmul.mubr.f32.gmra.mrb[0].mxu0 %v2201
    %v2275 = vpop.f32.mrb[0].mxu0
    %v2276 = vadd.f32 0.0, %v2275
    %v2277 = vpop.f32.mrb[0].mxu0
    %2278 = vmatprep.mubr.f32.mxu0 0.0
    %2279 = vmatmul.mubr.f32.gmra.mrb[0].mxu0 %v2204
    %v2280 = vpop.f32.mrb[0].mxu0
    %v2281 = vadd.f32 0.0, %v2280
    %v2282 = vpop.f32.mrb[0].mxu0
    %2283 = vmatprep.mubr.f32.mxu0 0.0
    %2284 = vmatmul.mubr.f32.gmra.mrb[0].mxu0 %v2207
    %v2285 = vpop.f32.mrb[0].mxu0
    %v2286 = vadd.f32 0.0, %v2285
    %v2287 = vpop.f32.mrb[0].mxu0
    %2288 = vdwg.mxu0
    %v2289 = vld [vmem:[%s63] sm:$0x1]
    %v2290 = vld [vmem:[%s57] sm:$0xff]
    %v2291 = vld [vmem:[%s57 + $0x8] sm:$0xff]
    %v2292 = vld [vmem:[%s57 + $0x10] sm:$0xff]
    %v2293 = vld [vmem:[%s57 + $0x18] sm:$0xff]
    %2294 = vmatprep.subr.mxu0 0.0
    %2295 = vmatpush1.msra.mxu0 %v2290
    %2296 = vmatprep.subr.mxu0 0.0
    %2297 = vmatpush1.msra.mxu0 %v2291
    %2298 = vmatprep.subr.mxu0 0.0
    %2299 = vmatpush1.msra.mxu0 %v2292
    %2300 = vmatprep.subr.mxu0 0.0
    %2301 = vmatpush1.msra.mxu0 %v2293
    %2302 = vmatprep.subr.mxu0 0.0
    %2303 = vmatpush1.msra.mxu0 0.0
    %2304 = vmatprep.subr.mxu0 0.0
    %2305 = vmatpush1.msra.mxu0 0.0
    %2306 = vmatprep.subr.mxu0 0.0
    %2307 = vmatpush1.msra.mxu0 0.0
    %2308 = vmatprep.subr.mxu0 0.0
    %2309 = vmatpush1.msra.mxu0 0.0
    %2310 = vmatprep.subr.mxu0 0.0
    %2311 = vmatpush1.msra.mxu0 0.0
    %2312 = vmatprep.subr.mxu0 0.0
    %2313 = vmatpush1.msra.mxu0 0.0
    %2314 = vmatprep.subr.mxu0 0.0
    %2315 = vmatpush1.msra.mxu0 0.0
    %2316 = vmatprep.subr.mxu0 0.0
    %2317 = vmatpush1.msra.mxu0 0.0
    %2318 = vmatprep.subr.mxu0 0.0
    %2319 = vmatpush1.msra.mxu0 0.0
    %2320 = vmatprep.subr.mxu0 0.0
    %2321 = vmatpush1.msra.mxu0 0.0
    %2322 = vmatprep.subr.mxu0 0.0
    %2323 = vmatpush1.msra.mxu0 0.0
    %2324 = vmatprep.subr.mxu0 0.0
    %2325 = vmatpush1.msra.mxu0 0.0
    %2326 = vmatprep.subr.mxu0 0.0
    %2327 = vmatpush1.msra.mxu0 0.0
    %2328 = vmatprep.subr.mxu0 0.0
    %2329 = vmatpush1.msra.mxu0 0.0
    %2330 = vmatprep.subr.mxu0 0.0
    %2331 = vmatpush1.msra.mxu0 0.0
    %2332 = vmatprep.subr.mxu0 0.0
    %2333 = vmatpush1.msra.mxu0 0.0
    %2334 = vmatprep.subr.mxu0 0.0
    %2335 = vmatpush1.msra.mxu0 0.0
    %2336 = vmatprep.subr.mxu0 0.0
    %2337 = vmatpush1.msra.mxu0 0.0
    %2338 = vmatprep.subr.mxu0 0.0
    %2339 = vmatpush1.msra.mxu0 0.0
    %2340 = vmatprep.subr.mxu0 0.0
    %2341 = vmatpush1.msra.mxu0 0.0
    %2342 = vmatprep.subr.mxu0 0.0
    %2343 = vmatpush1.msra.mxu0 0.0
    %2344 = vmatprep.subr.mxu0 0.0
    %2345 = vmatpush1.msra.mxu0 0.0
    %2346 = vmatprep.subr.mxu0 0.0
    %2347 = vmatpush1.msra.mxu0 0.0
    %2348 = vmatprep.subr.mxu0 0.0
    %2349 = vmatpush1.msra.mxu0 0.0
    %2350 = vmatprep.subr.mxu0 0.0
    %2351 = vmatpush1.msra.mxu0 0.0
    %2352 = vmatprep.subr.mxu0 0.0
    %2353 = vmatpush1.msra.mxu0 0.0
    %2354 = vmatprep.subr.mxu0 0.0
    %2355 = vmatpush1.msra.mxu0 0.0
    %2356 = vmatprep.subr.mxu0 0.0
    %2357 = vmatpush1.msra.mxu0 0.0
    %2358 = vmatprep.mubr.f32.mxu0 0.0
    %2359 = vmatmul.mubr.f32.gmra.mrb[0].mxu0 %v310
    %v2360 = vpop.f32.mrb[0].mxu0
    %v2361 = vadd.f32 0.0, %v2360
    %v2362 = vpop.f32.mrb[0].mxu0
    %2363 = vmatprep.mubr.f32.mxu0 0.0
    %2364 = vmatmul.mubr.f32.gmra.mrb[0].mxu0 %v313
    %v2365 = vpop.f32.mrb[0].mxu0
    %v2366 = vadd.f32 0.0, %v2365
    %v2367 = vpop.f32.mrb[0].mxu0
    %2368 = vmatprep.mubr.f32.mxu0 0.0
    %2369 = vmatmul.mubr.f32.gmra.mrb[0].mxu0 %v316
    %v2370 = vpop.f32.mrb[0].mxu0
    %v2371 = vadd.f32 0.0, %v2370
    %v2372 = vpop.f32.mrb[0].mxu0
    %2373 = vdwg.mxu0
    %v2375 = vlaneseq
    %v2376 = vshrl.u32 %v2375, 7
    %v2377 = vsub.s32 0, %v2376
    %v2378 = vrot.slane %v2289, %v2377
    %v2380 = vadd.f32 %v2378, %v2361
    %v2381 = vadd.f32 %v2378, %v2366
    %v2382 = vadd.f32 %v2378, %v2371
    %v2383 = vld [vmem:[%s59] sm:$0xff]
    %v2384 = vld [vmem:[%s59 + $0x8] sm:$0xff]
    %v2385 = vld [vmem:[%s59 + $0x10] sm:$0xff]
    %v2386 = vld [vmem:[%s59 + $0x18] sm:$0xff]
    %v2388 = vsel %vm308, %v2184, 0
    %v2391 = vsel %vm308, %v2189, 0
    %v2394 = vsel %vm308, %v2194, 0
    %2396 = vmatprep.subr.mxu0 0.0
    %2397 = vmatpush1.msra.mxu0 %v2383
    %2398 = vmatprep.subr.mxu0 0.0
    %2399 = vmatpush1.msra.mxu0 %v2384
    %2400 = vmatprep.subr.mxu0 0.0
    %2401 = vmatpush1.msra.mxu0 %v2385
    %2402 = vmatprep.subr.mxu0 0.0
    %2403 = vmatpush1.msra.mxu0 %v2386
    %2404 = vmatprep.subr.mxu0 0.0
    %2405 = vmatpush1.msra.mxu0 0.0
    %2406 = vmatprep.subr.mxu0 0.0
    %2407 = vmatpush1.msra.mxu0 0.0
    %2408 = vmatprep.subr.mxu0 0.0
    %2409 = vmatpush1.msra.mxu0 0.0
    %2410 = vmatprep.subr.mxu0 0.0
    %2411 = vmatpush1.msra.mxu0 0.0
    %2412 = vmatprep.subr.mxu0 0.0
    %2413 = vmatpush1.msra.mxu0 0.0
    %2414 = vmatprep.subr.mxu0 0.0
    %2415 = vmatpush1.msra.mxu0 0.0
    %2416 = vmatprep.subr.mxu0 0.0
    %2417 = vmatpush1.msra.mxu0 0.0
    %2418 = vmatprep.subr.mxu0 0.0
    %2419 = vmatpush1.msra.mxu0 0.0
    %2420 = vmatprep.subr.mxu0 0.0
    %2421 = vmatpush1.msra.mxu0 0.0
    %2422 = vmatprep.subr.mxu0 0.0
    %2423 = vmatpush1.msra.mxu0 0.0
    %2424 = vmatprep.subr.mxu0 0.0
    %2425 = vmatpush1.msra.mxu0 0.0
    %2426 = vmatprep.subr.mxu0 0.0
    %2427 = vmatpush1.msra.mxu0 0.0
    %2428 = vmatprep.subr.mxu0 0.0
    %2429 = vmatpush1.msra.mxu0 0.0
    %2430 = vmatprep.subr.mxu0 0.0
    %2431 = vmatpush1.msra.mxu0 0.0
    %2432 = vmatprep.subr.mxu0 0.0
    %2433 = vmatpush1.msra.mxu0 0.0
    %2434 = vmatprep.subr.mxu0 0.0
    %2435 = vmatpush1.msra.mxu0 0.0
    %2436 = vmatprep.subr.mxu0 0.0
    %2437 = vmatpush1.msra.mxu0 0.0
    %2438 = vmatprep.subr.mxu0 0.0
    %2439 = vmatpush1.msra.mxu0 0.0
    %2440 = vmatprep.subr.mxu0 0.0
    %2441 = vmatpush1.msra.mxu0 0.0
    %2442 = vmatprep.subr.mxu0 0.0
    %2443 = vmatpush1.msra.mxu0 0.0
    %2444 = vmatprep.subr.mxu0 0.0
    %2445 = vmatpush1.msra.mxu0 0.0
    %2446 = vmatprep.subr.mxu0 0.0
    %2447 = vmatpush1.msra.mxu0 0.0
    %2448 = vmatprep.subr.mxu0 0.0
    %2449 = vmatpush1.msra.mxu0 0.0
    %2450 = vmatprep.subr.mxu0 0.0
    %2451 = vmatpush1.msra.mxu0 0.0
    %2452 = vmatprep.subr.mxu0 0.0
    %2453 = vmatpush1.msra.mxu0 0.0
    %2454 = vmatprep.subr.mxu0 0.0
    %2455 = vmatpush1.msra.mxu0 0.0
    %2456 = vmatprep.subr.mxu0 0.0
    %2457 = vmatpush1.msra.mxu0 0.0
    %2458 = vmatprep.subr.mxu0 0.0
    %2459 = vmatpush1.msra.mxu0 0.0
    %2460 = vmatprep.mubr.f32.mxu0 0.0
    %2461 = vmatmul.mubr.f32.gmra.mrb[0].mxu0 %v2388
    %v2462 = vpop.f32.mrb[0].mxu0
    %v2463 = vadd.f32 0.0, %v2462
    %v2464 = vpop.f32.mrb[0].mxu0
    %2465 = vmatprep.mubr.f32.mxu0 0.0
    %2466 = vmatmul.mubr.f32.gmra.mrb[0].mxu0 %v2391
    %v2467 = vpop.f32.mrb[0].mxu0
    %v2468 = vadd.f32 0.0, %v2467
    %v2469 = vpop.f32.mrb[0].mxu0
    %2470 = vmatprep.mubr.f32.mxu0 0.0
    %2471 = vmatmul.mubr.f32.gmra.mrb[0].mxu0 %v2394
    %v2472 = vpop.f32.mrb[0].mxu0
    %v2473 = vadd.f32 0.0, %v2472
    %v2474 = vpop.f32.mrb[0].mxu0
    %2475 = vdwg.mxu0
    %v2476 = vadd.f32 %v2380, %v2463
    %v2477 = vadd.f32 %v2381, %v2468
    %v2478 = vadd.f32 %v2382, %v2473
    %v2479 = vld [vmem:[%s61] sm:$0xff]
    %v2480 = vld [vmem:[%s61 + $0x8] sm:$0xff]
    %v2481 = vld [vmem:[%s61 + $0x10] sm:$0xff]
    %v2482 = vld [vmem:[%s61 + $0x18] sm:$0xff]
    %v2484 = vsel %vm308, %v2276, 0
    %v2487 = vsel %vm308, %v2281, 0
    %v2490 = vsel %vm308, %v2286, 0
    %2492 = vmatprep.subr.mxu0 0.0
    %2493 = vmatpush1.msra.mxu0 %v2479
    %2494 = vmatprep.subr.mxu0 0.0
    %2495 = vmatpush1.msra.mxu0 %v2480
    %2496 = vmatprep.subr.mxu0 0.0
    %2497 = vmatpush1.msra.mxu0 %v2481
    %2498 = vmatprep.subr.mxu0 0.0
    %2499 = vmatpush1.msra.mxu0 %v2482
    %2500 = vmatprep.subr.mxu0 0.0
    %2501 = vmatpush1.msra.mxu0 0.0
    %2502 = vmatprep.subr.mxu0 0.0
    %2503 = vmatpush1.msra.mxu0 0.0
    %2504 = vmatprep.subr.mxu0 0.0
    %2505 = vmatpush1.msra.mxu0 0.0
    %2506 = vmatprep.subr.mxu0 0.0
    %2507 = vmatpush1.msra.mxu0 0.0
    %2508 = vmatprep.subr.mxu0 0.0
    %2509 = vmatpush1.msra.mxu0 0.0
    %2510 = vmatprep.subr.mxu0 0.0
    %2511 = vmatpush1.msra.mxu0 0.0
    %2512 = vmatprep.subr.mxu0 0.0
    %2513 = vmatpush1.msra.mxu0 0.0
    %2514 = vmatprep.subr.mxu0 0.0
    %2515 = vmatpush1.msra.mxu0 0.0
    %2516 = vmatprep.subr.mxu0 0.0
    %2517 = vmatpush1.msra.mxu0 0.0
    %2518 = vmatprep.subr.mxu0 0.0
    %2519 = vmatpush1.msra.mxu0 0.0
    %2520 = vmatprep.subr.mxu0 0.0
    %2521 = vmatpush1.msra.mxu0 0.0
    %2522 = vmatprep.subr.mxu0 0.0
    %2523 = vmatpush1.msra.mxu0 0.0
    %2524 = vmatprep.subr.mxu0 0.0
    %2525 = vmatpush1.msra.mxu0 0.0
    %2526 = vmatprep.subr.mxu0 0.0
    %2527 = vmatpush1.msra.mxu0 0.0
    %2528 = vmatprep.subr.mxu0 0.0
    %2529 = vmatpush1.msra.mxu0 0.0
    %2530 = vmatprep.subr.mxu0 0.0
    %2531 = vmatpush1.msra.mxu0 0.0
    %2532 = vmatprep.subr.mxu0 0.0
    %2533 = vmatpush1.msra.mxu0 0.0
    %2534 = vmatprep.subr.mxu0 0.0
    %2535 = vmatpush1.msra.mxu0 0.0
    %2536 = vmatprep.subr.mxu0 0.0
    %2537 = vmatpush1.msra.mxu0 0.0
    %2538 = vmatprep.subr.mxu0 0.0
    %2539 = vmatpush1.msra.mxu0 0.0
    %2540 = vmatprep.subr.mxu0 0.0
    %2541 = vmatpush1.msra.mxu0 0.0
    %2542 = vmatprep.subr.mxu0 0.0
    %2543 = vmatpush1.msra.mxu0 0.0
    %2544 = vmatprep.subr.mxu0 0.0
    %2545 = vmatpush1.msra.mxu0 0.0
    %2546 = vmatprep.subr.mxu0 0.0
    %2547 = vmatpush1.msra.mxu0 0.0
    %2548 = vmatprep.subr.mxu0 0.0
    %2549 = vmatpush1.msra.mxu0 0.0
    %2550 = vmatprep.subr.mxu0 0.0
    %2551 = vmatpush1.msra.mxu0 0.0
    %2552 = vmatprep.subr.mxu0 0.0
    %2553 = vmatpush1.msra.mxu0 0.0
    %2554 = vmatprep.subr.mxu0 0.0
    %2555 = vmatpush1.msra.mxu0 0.0
    %2556 = vmatprep.mubr.f32.mxu0 0.0
    %2557 = vmatmul.mubr.f32.gmra.mrb[0].mxu0 %v2484
    %v2558 = vpop.f32.mrb[0].mxu0
    %v2559 = vadd.f32 0.0, %v2558
    %v2560 = vpop.f32.mrb[0].mxu0
    %2561 = vmatprep.mubr.f32.mxu0 0.0
    %2562 = vmatmul.mubr.f32.gmra.mrb[0].mxu0 %v2487
    %v2563 = vpop.f32.mrb[0].mxu0
    %v2564 = vadd.f32 0.0, %v2563
    %v2565 = vpop.f32.mrb[0].mxu0
    %2566 = vmatprep.mubr.f32.mxu0 0.0
    %2567 = vmatmul.mubr.f32.gmra.mrb[0].mxu0 %v2490
    %v2568 = vpop.f32.mrb[0].mxu0
    %v2569 = vadd.f32 0.0, %v2568
    %v2570 = vpop.f32.mrb[0].mxu0
    %2571 = vdwg.mxu0
    %v2572 = vadd.f32 %v2476, %v2559
    %v2573 = vadd.f32 %v2477, %v2564
    %v2574 = vadd.f32 %v2478, %v2569
    %v2575 = vmax.f32 %v2572, 0.0
    %v2576 = vmax.f32 %v2573, 0.0
    %v2577 = vmax.f32 %v2574, 0.0
    %v2578 = vld [vmem:[%s67] sm:$0x1]
    %v2579 = vld [vmem:[%s65] sm:$0xff]
    %v2580 = vld [vmem:[%s65 + $0x8] sm:$0xff]
    %v2581 = vld [vmem:[%s65 + $0x10] sm:$0xff]
    %v2582 = vld [vmem:[%s65 + $0x18] sm:$0xff]
    %v2583 = vld [vmem:[%s65 + $0x20] sm:$0xff]
    %v2584 = vld [vmem:[%s65 + $0x28] sm:$0xff]
    %v2585 = vld [vmem:[%s65 + $0x30] sm:$0xff]
    %v2586 = vld [vmem:[%s65 + $0x38] sm:$0xff]
    %v2588 = vsel %vm515, %v2575, 0
    %v2591 = vsel %vm515, %v2576, 0
    %v2594 = vsel %vm515, %v2577, 0
    %2596 = vmatprep.subr.mxu0 0.0
    %2597 = vmatpush1.msra.mxu0 %v2579
    %2598 = vmatprep.subr.mxu0 0.0
    %2599 = vmatpush1.msra.mxu0 %v2580
    %2600 = vmatprep.subr.mxu0 0.0
    %2601 = vmatpush1.msra.mxu0 %v2581
    %2602 = vmatprep.subr.mxu0 0.0
    %2603 = vmatpush1.msra.mxu0 %v2582
    %2604 = vmatprep.subr.mxu0 0.0
    %2605 = vmatpush1.msra.mxu0 %v2583
    %2606 = vmatprep.subr.mxu0 0.0
    %2607 = vmatpush1.msra.mxu0 %v2584
    %2608 = vmatprep.subr.mxu0 0.0
    %2609 = vmatpush1.msra.mxu0 %v2585
    %2610 = vmatprep.subr.mxu0 0.0
    %2611 = vmatpush1.msra.mxu0 %v2586
    %2612 = vmatprep.subr.mxu0 0.0
    %2613 = vmatpush1.msra.mxu0 0.0
    %2614 = vmatprep.subr.mxu0 0.0
    %2615 = vmatpush1.msra.mxu0 0.0
    %2616 = vmatprep.subr.mxu0 0.0
    %2617 = vmatpush1.msra.mxu0 0.0
    %2618 = vmatprep.subr.mxu0 0.0
    %2619 = vmatpush1.msra.mxu0 0.0
    %2620 = vmatprep.subr.mxu0 0.0
    %2621 = vmatpush1.msra.mxu0 0.0
    %2622 = vmatprep.subr.mxu0 0.0
    %2623 = vmatpush1.msra.mxu0 0.0
    %2624 = vmatprep.subr.mxu0 0.0
    %2625 = vmatpush1.msra.mxu0 0.0
    %2626 = vmatprep.subr.mxu0 0.0
    %2627 = vmatpush1.msra.mxu0 0.0
    %2628 = vmatprep.subr.mxu0 0.0
    %2629 = vmatpush1.msra.mxu0 0.0
    %2630 = vmatprep.subr.mxu0 0.0
    %2631 = vmatpush1.msra.mxu0 0.0
    %2632 = vmatprep.subr.mxu0 0.0
    %2633 = vmatpush1.msra.mxu0 0.0
    %2634 = vmatprep.subr.mxu0 0.0
    %2635 = vmatpush1.msra.mxu0 0.0
    %2636 = vmatprep.subr.mxu0 0.0
    %2637 = vmatpush1.msra.mxu0 0.0
    %2638 = vmatprep.subr.mxu0 0.0
    %2639 = vmatpush1.msra.mxu0 0.0
    %2640 = vmatprep.subr.mxu0 0.0
    %2641 = vmatpush1.msra.mxu0 0.0
    %2642 = vmatprep.subr.mxu0 0.0
    %2643 = vmatpush1.msra.mxu0 0.0
    %2644 = vmatprep.subr.mxu0 0.0
    %2645 = vmatpush1.msra.mxu0 0.0
    %2646 = vmatprep.subr.mxu0 0.0
    %2647 = vmatpush1.msra.mxu0 0.0
    %2648 = vmatprep.subr.mxu0 0.0
    %2649 = vmatpush1.msra.mxu0 0.0
    %2650 = vmatprep.subr.mxu0 0.0
    %2651 = vmatpush1.msra.mxu0 0.0
    %2652 = vmatprep.subr.mxu0 0.0
    %2653 = vmatpush1.msra.mxu0 0.0
    %2654 = vmatprep.subr.mxu0 0.0
    %2655 = vmatpush1.msra.mxu0 0.0
    %2656 = vmatprep.subr.mxu0 0.0
    %2657 = vmatpush1.msra.mxu0 0.0
    %2658 = vmatprep.subr.mxu0 0.0
    %2659 = vmatpush1.msra.mxu0 0.0
    %2660 = vmatprep.mubr.f32.mxu0 0.0
    %2661 = vmatmul.mubr.f32.gmra.mrb[0].mxu0 %v2588
    %v2662 = vpop.f32.mrb[0].mxu0
    %v2663 = vadd.f32 0.0, %v2662
    %v2664 = vpop.f32.mrb[0].mxu0
    %2665 = vmatprep.mubr.f32.mxu0 0.0
    %2666 = vmatmul.mubr.f32.gmra.mrb[0].mxu0 %v2591
    %v2667 = vpop.f32.mrb[0].mxu0
    %v2668 = vadd.f32 0.0, %v2667
    %v2669 = vpop.f32.mrb[0].mxu0
    %2670 = vmatprep.mubr.f32.mxu0 0.0
    %2671 = vmatmul.mubr.f32.gmra.mrb[0].mxu0 %v2594
    %v2672 = vpop.f32.mrb[0].mxu0
    %v2673 = vadd.f32 0.0, %v2672
    %v2674 = vpop.f32.mrb[0].mxu0
    %2675 = vdwg.mxu0
    %v2677 = vlaneseq
    %v2678 = vshrl.u32 %v2677, 7
    %v2679 = vsub.s32 0, %v2678
    %v2680 = vrot.slane %v2578, %v2679
    %v2682 = vadd.f32 %v2680, %v2663
    %v2683 = vadd.f32 %v2680, %v2668
    %v2684 = vadd.f32 %v2680, %v2673
    %v2685 = vld [vmem:[%s73] sm:$0x1]
    %v2686 = vld [vmem:[%s69] sm:$0xff]
    %v2687 = vld [vmem:[%s69 + $0x8] sm:$0xff]
    %v2688 = vld [vmem:[%s69 + $0x10] sm:$0xff]
    %v2689 = vld [vmem:[%s69 + $0x18] sm:$0xff]
    %v2691 = vsel %vm308, %v611, 0
    %v2694 = vsel %vm308, %v612, 0
    %v2697 = vsel %vm308, %v613, 0
    %2699 = vmatprep.subr.mxu0 0.0
    %2700 = vmatpush1.msra.mxu0 %v2686
    %2701 = vmatprep.subr.mxu0 0.0
    %2702 = vmatpush1.msra.mxu0 %v2687
    %2703 = vmatprep.subr.mxu0 0.0
    %2704 = vmatpush1.msra.mxu0 %v2688
    %2705 = vmatprep.subr.mxu0 0.0
    %2706 = vmatpush1.msra.mxu0 %v2689
    %2707 = vmatprep.subr.mxu0 0.0
    %2708 = vmatpush1.msra.mxu0 0.0
    %2709 = vmatprep.subr.mxu0 0.0
    %2710 = vmatpush1.msra.mxu0 0.0
    %2711 = vmatprep.subr.mxu0 0.0
    %2712 = vmatpush1.msra.mxu0 0.0
    %2713 = vmatprep.subr.mxu0 0.0
    %2714 = vmatpush1.msra.mxu0 0.0
    %2715 = vmatprep.subr.mxu0 0.0
    %2716 = vmatpush1.msra.mxu0 0.0
    %2717 = vmatprep.subr.mxu0 0.0
    %2718 = vmatpush1.msra.mxu0 0.0
    %2719 = vmatprep.subr.mxu0 0.0
    %2720 = vmatpush1.msra.mxu0 0.0
    %2721 = vmatprep.subr.mxu0 0.0
    %2722 = vmatpush1.msra.mxu0 0.0
    %2723 = vmatprep.subr.mxu0 0.0
    %2724 = vmatpush1.msra.mxu0 0.0
    %2725 = vmatprep.subr.mxu0 0.0
    %2726 = vmatpush1.msra.mxu0 0.0
    %2727 = vmatprep.subr.mxu0 0.0
    %2728 = vmatpush1.msra.mxu0 0.0
    %2729 = vmatprep.subr.mxu0 0.0
    %2730 = vmatpush1.msra.mxu0 0.0
    %2731 = vmatprep.subr.mxu0 0.0
    %2732 = vmatpush1.msra.mxu0 0.0
    %2733 = vmatprep.subr.mxu0 0.0
    %2734 = vmatpush1.msra.mxu0 0.0
    %2735 = vmatprep.subr.mxu0 0.0
    %2736 = vmatpush1.msra.mxu0 0.0
    %2737 = vmatprep.subr.mxu0 0.0
    %2738 = vmatpush1.msra.mxu0 0.0
    %2739 = vmatprep.subr.mxu0 0.0
    %2740 = vmatpush1.msra.mxu0 0.0
    %2741 = vmatprep.subr.mxu0 0.0
    %2742 = vmatpush1.msra.mxu0 0.0
    %2743 = vmatprep.subr.mxu0 0.0
    %2744 = vmatpush1.msra.mxu0 0.0
    %2745 = vmatprep.subr.mxu0 0.0
    %2746 = vmatpush1.msra.mxu0 0.0
    %2747 = vmatprep.subr.mxu0 0.0
    %2748 = vmatpush1.msra.mxu0 0.0
    %2749 = vmatprep.subr.mxu0 0.0
    %2750 = vmatpush1.msra.mxu0 0.0
    %2751 = vmatprep.subr.mxu0 0.0
    %2752 = vmatpush1.msra.mxu0 0.0
    %2753 = vmatprep.subr.mxu0 0.0
    %2754 = vmatpush1.msra.mxu0 0.0
    %2755 = vmatprep.subr.mxu0 0.0
    %2756 = vmatpush1.msra.mxu0 0.0
    %2757 = vmatprep.subr.mxu0 0.0
    %2758 = vmatpush1.msra.mxu0 0.0
    %2759 = vmatprep.subr.mxu0 0.0
    %2760 = vmatpush1.msra.mxu0 0.0
    %2761 = vmatprep.subr.mxu0 0.0
    %2762 = vmatpush1.msra.mxu0 0.0
    %2763 = vmatprep.mubr.f32.mxu0 0.0
    %2764 = vmatmul.mubr.f32.gmra.mrb[0].mxu0 %v2691
    %v2765 = vpop.f32.mrb[0].mxu0
    %v2766 = vadd.f32 0.0, %v2765
    %v2767 = vpop.f32.mrb[0].mxu0
    %2768 = vmatprep.mubr.f32.mxu0 0.0
    %2769 = vmatmul.mubr.f32.gmra.mrb[0].mxu0 %v2694
    %v2770 = vpop.f32.mrb[0].mxu0
    %v2771 = vadd.f32 0.0, %v2770
    %v2772 = vpop.f32.mrb[0].mxu0
    %2773 = vmatprep.mubr.f32.mxu0 0.0
    %2774 = vmatmul.mubr.f32.gmra.mrb[0].mxu0 %v2697
    %v2775 = vpop.f32.mrb[0].mxu0
    %v2776 = vadd.f32 0.0, %v2775
    %v2777 = vpop.f32.mrb[0].mxu0
    %2778 = vdwg.mxu0
    %v2780 = vlaneseq
    %v2781 = vshrl.u32 %v2780, 7
    %v2782 = vsub.s32 0, %v2781
    %v2783 = vrot.slane %v2685, %v2782
    %v2785 = vadd.f32 %v2783, %v2766
    %v2786 = vadd.f32 %v2783, %v2771
    %v2787 = vadd.f32 %v2783, %v2776
    %v2788 = vld [vmem:[%s71] sm:$0xff]
    %v2789 = vld [vmem:[%s71 + $0x8] sm:$0xff]
    %v2790 = vld [vmem:[%s71 + $0x10] sm:$0xff]
    %v2791 = vld [vmem:[%s71 + $0x18] sm:$0xff]
    %v2793 = vsel %vm308, %v2682, 0
    %v2796 = vsel %vm308, %v2683, 0
    %v2799 = vsel %vm308, %v2684, 0
    %2801 = vmatprep.subr.mxu0 0.0
    %2802 = vmatpush1.msra.mxu0 %v2788
    %2803 = vmatprep.subr.mxu0 0.0
    %2804 = vmatpush1.msra.mxu0 %v2789
    %2805 = vmatprep.subr.mxu0 0.0
    %2806 = vmatpush1.msra.mxu0 %v2790
    %2807 = vmatprep.subr.mxu0 0.0
    %2808 = vmatpush1.msra.mxu0 %v2791
    %2809 = vmatprep.subr.mxu0 0.0
    %2810 = vmatpush1.msra.mxu0 0.0
    %2811 = vmatprep.subr.mxu0 0.0
    %2812 = vmatpush1.msra.mxu0 0.0
    %2813 = vmatprep.subr.mxu0 0.0
    %2814 = vmatpush1.msra.mxu0 0.0
    %2815 = vmatprep.subr.mxu0 0.0
    %2816 = vmatpush1.msra.mxu0 0.0
    %2817 = vmatprep.subr.mxu0 0.0
    %2818 = vmatpush1.msra.mxu0 0.0
    %2819 = vmatprep.subr.mxu0 0.0
    %2820 = vmatpush1.msra.mxu0 0.0
    %2821 = vmatprep.subr.mxu0 0.0
    %2822 = vmatpush1.msra.mxu0 0.0
    %2823 = vmatprep.subr.mxu0 0.0
    %2824 = vmatpush1.msra.mxu0 0.0
    %2825 = vmatprep.subr.mxu0 0.0
    %2826 = vmatpush1.msra.mxu0 0.0
    %2827 = vmatprep.subr.mxu0 0.0
    %2828 = vmatpush1.msra.mxu0 0.0
    %2829 = vmatprep.subr.mxu0 0.0
    %2830 = vmatpush1.msra.mxu0 0.0
    %2831 = vmatprep.subr.mxu0 0.0
    %2832 = vmatpush1.msra.mxu0 0.0
    %2833 = vmatprep.subr.mxu0 0.0
    %2834 = vmatpush1.msra.mxu0 0.0
    %2835 = vmatprep.subr.mxu0 0.0
    %2836 = vmatpush1.msra.mxu0 0.0
    %2837 = vmatprep.subr.mxu0 0.0
    %2838 = vmatpush1.msra.mxu0 0.0
    %2839 = vmatprep.subr.mxu0 0.0
    %2840 = vmatpush1.msra.mxu0 0.0
    %2841 = vmatprep.subr.mxu0 0.0
    %2842 = vmatpush1.msra.mxu0 0.0
    %2843 = vmatprep.subr.mxu0 0.0
    %2844 = vmatpush1.msra.mxu0 0.0
    %2845 = vmatprep.subr.mxu0 0.0
    %2846 = vmatpush1.msra.mxu0 0.0
    %2847 = vmatprep.subr.mxu0 0.0
    %2848 = vmatpush1.msra.mxu0 0.0
    %2849 = vmatprep.subr.mxu0 0.0
    %2850 = vmatpush1.msra.mxu0 0.0
    %2851 = vmatprep.subr.mxu0 0.0
    %2852 = vmatpush1.msra.mxu0 0.0
    %2853 = vmatprep.subr.mxu0 0.0
    %2854 = vmatpush1.msra.mxu0 0.0
    %2855 = vmatprep.subr.mxu0 0.0
    %2856 = vmatpush1.msra.mxu0 0.0
    %2857 = vmatprep.subr.mxu0 0.0
    %2858 = vmatpush1.msra.mxu0 0.0
    %2859 = vmatprep.subr.mxu0 0.0
    %2860 = vmatpush1.msra.mxu0 0.0
    %2861 = vmatprep.subr.mxu0 0.0
    %2862 = vmatpush1.msra.mxu0 0.0
    %2863 = vmatprep.subr.mxu0 0.0
    %2864 = vmatpush1.msra.mxu0 0.0
    %2865 = vmatprep.mubr.f32.mxu0 0.0
    %2866 = vmatmul.mubr.f32.gmra.mrb[0].mxu0 %v2793
    %v2867 = vpop.f32.mrb[0].mxu0
    %v2868 = vadd.f32 0.0, %v2867
    %v2869 = vpop.f32.mrb[0].mxu0
    %2870 = vmatprep.mubr.f32.mxu0 0.0
    %2871 = vmatmul.mubr.f32.gmra.mrb[0].mxu0 %v2796
    %v2872 = vpop.f32.mrb[0].mxu0
    %v2873 = vadd.f32 0.0, %v2872
    %v2874 = vpop.f32.mrb[0].mxu0
    %2875 = vmatprep.mubr.f32.mxu0 0.0
    %2876 = vmatmul.mubr.f32.gmra.mrb[0].mxu0 %v2799
    %v2877 = vpop.f32.mrb[0].mxu0
    %v2878 = vadd.f32 0.0, %v2877
    %v2879 = vpop.f32.mrb[0].mxu0
    %2880 = vdwg.mxu0
    %v2881 = vadd.f32 %v2785, %v2868
    %v2882 = vadd.f32 %v2786, %v2873
    %v2883 = vadd.f32 %v2787, %v2878
    %v2884 = vmax.f32 %v2881, 0.0
    %v2885 = vmax.f32 %v2882, 0.0
    %v2886 = vmax.f32 %v2883, 0.0
    %v2887 = vld [vmem:[%s77] sm:$0x1]
    %v2888 = vld [vmem:[%s75] sm:$0xff]
    %v2889 = vld [vmem:[%s75 + $0x8] sm:$0xff]
    %v2890 = vld [vmem:[%s75 + $0x10] sm:$0xff]
    %v2891 = vld [vmem:[%s75 + $0x18] sm:$0xff]
    %v2892 = vld [vmem:[%s75 + $0x20] sm:$0xff]
    %v2893 = vld [vmem:[%s75 + $0x28] sm:$0xff]
    %v2894 = vld [vmem:[%s75 + $0x30] sm:$0xff]
    %v2895 = vld [vmem:[%s75 + $0x38] sm:$0xff]
    %v2897 = vsel %vm515, %v2884, 0
    %v2900 = vsel %vm515, %v2885, 0
    %v2903 = vsel %vm515, %v2886, 0
    %2905 = vmatprep.subr.mxu0 0.0
    %2906 = vmatpush1.msra.mxu0 %v2888
    %2907 = vmatprep.subr.mxu0 0.0
    %2908 = vmatpush1.msra.mxu0 %v2889
    %2909 = vmatprep.subr.mxu0 0.0
    %2910 = vmatpush1.msra.mxu0 %v2890
    %2911 = vmatprep.subr.mxu0 0.0
    %2912 = vmatpush1.msra.mxu0 %v2891
    %2913 = vmatprep.subr.mxu0 0.0
    %2914 = vmatpush1.msra.mxu0 %v2892
    %2915 = vmatprep.subr.mxu0 0.0
    %2916 = vmatpush1.msra.mxu0 %v2893
    %2917 = vmatprep.subr.mxu0 0.0
    %2918 = vmatpush1.msra.mxu0 %v2894
    %2919 = vmatprep.subr.mxu0 0.0
    %2920 = vmatpush1.msra.mxu0 %v2895
    %2921 = vmatprep.subr.mxu0 0.0
    %2922 = vmatpush1.msra.mxu0 0.0
    %2923 = vmatprep.subr.mxu0 0.0
    %2924 = vmatpush1.msra.mxu0 0.0
    %2925 = vmatprep.subr.mxu0 0.0
    %2926 = vmatpush1.msra.mxu0 0.0
    %2927 = vmatprep.subr.mxu0 0.0
    %2928 = vmatpush1.msra.mxu0 0.0
    %2929 = vmatprep.subr.mxu0 0.0
    %2930 = vmatpush1.msra.mxu0 0.0
    %2931 = vmatprep.subr.mxu0 0.0
    %2932 = vmatpush1.msra.mxu0 0.0
    %2933 = vmatprep.subr.mxu0 0.0
    %2934 = vmatpush1.msra.mxu0 0.0
    %2935 = vmatprep.subr.mxu0 0.0
    %2936 = vmatpush1.msra.mxu0 0.0
    %2937 = vmatprep.subr.mxu0 0.0
    %2938 = vmatpush1.msra.mxu0 0.0
    %2939 = vmatprep.subr.mxu0 0.0
    %2940 = vmatpush1.msra.mxu0 0.0
    %2941 = vmatprep.subr.mxu0 0.0
    %2942 = vmatpush1.msra.mxu0 0.0
    %2943 = vmatprep.subr.mxu0 0.0
    %2944 = vmatpush1.msra.mxu0 0.0
    %2945 = vmatprep.subr.mxu0 0.0
    %2946 = vmatpush1.msra.mxu0 0.0
    %2947 = vmatprep.subr.mxu0 0.0
    %2948 = vmatpush1.msra.mxu0 0.0
    %2949 = vmatprep.subr.mxu0 0.0
    %2950 = vmatpush1.msra.mxu0 0.0
    %2951 = vmatprep.subr.mxu0 0.0
    %2952 = vmatpush1.msra.mxu0 0.0
    %2953 = vmatprep.subr.mxu0 0.0
    %2954 = vmatpush1.msra.mxu0 0.0
    %2955 = vmatprep.subr.mxu0 0.0
    %2956 = vmatpush1.msra.mxu0 0.0
    %2957 = vmatprep.subr.mxu0 0.0
    %2958 = vmatpush1.msra.mxu0 0.0
    %2959 = vmatprep.subr.mxu0 0.0
    %2960 = vmatpush1.msra.mxu0 0.0
    %2961 = vmatprep.subr.mxu0 0.0
    %2962 = vmatpush1.msra.mxu0 0.0
    %2963 = vmatprep.subr.mxu0 0.0
    %2964 = vmatpush1.msra.mxu0 0.0
    %2965 = vmatprep.subr.mxu0 0.0
    %2966 = vmatpush1.msra.mxu0 0.0
    %2967 = vmatprep.subr.mxu0 0.0
    %2968 = vmatpush1.msra.mxu0 0.0
    %2969 = vmatprep.mubr.f32.mxu0 0.0
    %2970 = vmatmul.mubr.f32.gmra.mrb[0].mxu0 %v2897
    %v2971 = vpop.f32.mrb[0].mxu0
    %v2972 = vadd.f32 0.0, %v2971
    %v2973 = vpop.f32.mrb[0].mxu0
    %2974 = vmatprep.mubr.f32.mxu0 0.0
    %2975 = vmatmul.mubr.f32.gmra.mrb[0].mxu0 %v2900
    %v2976 = vpop.f32.mrb[0].mxu0
    %v2977 = vadd.f32 0.0, %v2976
    %v2978 = vpop.f32.mrb[0].mxu0
    %2979 = vmatprep.mubr.f32.mxu0 0.0
    %2980 = vmatmul.mubr.f32.gmra.mrb[0].mxu0 %v2903
    %v2981 = vpop.f32.mrb[0].mxu0
    %v2982 = vadd.f32 0.0, %v2981
    %v2983 = vpop.f32.mrb[0].mxu0
    %2984 = vdwg.mxu0
    %v2986 = vlaneseq
    %v2987 = vshrl.u32 %v2986, 7
    %v2988 = vsub.s32 0, %v2987
    %v2989 = vrot.slane %v2887, %v2988
    %v2991 = vadd.f32 %v2989, %v2972
    %v2992 = vadd.f32 %v2989, %v2977
    %v2993 = vadd.f32 %v2989, %v2982
    %v2994 = vmax.f32 %v2991, 0.0
    %v2995 = vmax.f32 %v2992, 0.0
    %v2996 = vmax.f32 %v2993, 0.0
    %v2997 = vld [vmem:[%s81] sm:$0x1]
    %v2998 = vld [vmem:[%s79] sm:$0xff]
    %v2999 = vld [vmem:[%s79 + $0x8] sm:$0xff]
    %v3000 = vld [vmem:[%s79 + $0x10] sm:$0xff]
    %v3001 = vld [vmem:[%s79 + $0x18] sm:$0xff]
    %v3002 = vld [vmem:[%s79 + $0x20] sm:$0xff]
    %v3003 = vld [vmem:[%s79 + $0x28] sm:$0xff]
    %v3004 = vld [vmem:[%s79 + $0x30] sm:$0xff]
    %v3005 = vld [vmem:[%s79 + $0x38] sm:$0xff]
    %v3007 = vsel %vm515, %v2994, 0
    %v3010 = vsel %vm515, %v2995, 0
    %v3013 = vsel %vm515, %v2996, 0
    %3015 = vmatprep.subr.mxu0 0.0
    %3016 = vmatpush1.msra.mxu0 %v2998
    %3017 = vmatprep.subr.mxu0 0.0
    %3018 = vmatpush1.msra.mxu0 %v2999
    %3019 = vmatprep.subr.mxu0 0.0
    %3020 = vmatpush1.msra.mxu0 %v3000
    %3021 = vmatprep.subr.mxu0 0.0
    %3022 = vmatpush1.msra.mxu0 %v3001
    %3023 = vmatprep.subr.mxu0 0.0
    %3024 = vmatpush1.msra.mxu0 %v3002
    %3025 = vmatprep.subr.mxu0 0.0
    %3026 = vmatpush1.msra.mxu0 %v3003
    %3027 = vmatprep.subr.mxu0 0.0
    %3028 = vmatpush1.msra.mxu0 %v3004
    %3029 = vmatprep.subr.mxu0 0.0
    %3030 = vmatpush1.msra.mxu0 %v3005
    %3031 = vmatprep.subr.mxu0 0.0
    %3032 = vmatpush1.msra.mxu0 0.0
    %3033 = vmatprep.subr.mxu0 0.0
    %3034 = vmatpush1.msra.mxu0 0.0
    %3035 = vmatprep.subr.mxu0 0.0
    %3036 = vmatpush1.msra.mxu0 0.0
    %3037 = vmatprep.subr.mxu0 0.0
    %3038 = vmatpush1.msra.mxu0 0.0
    %3039 = vmatprep.subr.mxu0 0.0
    %3040 = vmatpush1.msra.mxu0 0.0
    %3041 = vmatprep.subr.mxu0 0.0
    %3042 = vmatpush1.msra.mxu0 0.0
    %3043 = vmatprep.subr.mxu0 0.0
    %3044 = vmatpush1.msra.mxu0 0.0
    %3045 = vmatprep.subr.mxu0 0.0
    %3046 = vmatpush1.msra.mxu0 0.0
    %3047 = vmatprep.subr.mxu0 0.0
    %3048 = vmatpush1.msra.mxu0 0.0
    %3049 = vmatprep.subr.mxu0 0.0
    %3050 = vmatpush1.msra.mxu0 0.0
    %3051 = vmatprep.subr.mxu0 0.0
    %3052 = vmatpush1.msra.mxu0 0.0
    %3053 = vmatprep.subr.mxu0 0.0
    %3054 = vmatpush1.msra.mxu0 0.0
    %3055 = vmatprep.subr.mxu0 0.0
    %3056 = vmatpush1.msra.mxu0 0.0
    %3057 = vmatprep.subr.mxu0 0.0
    %3058 = vmatpush1.msra.mxu0 0.0
    %3059 = vmatprep.subr.mxu0 0.0
    %3060 = vmatpush1.msra.mxu0 0.0
    %3061 = vmatprep.subr.mxu0 0.0
    %3062 = vmatpush1.msra.mxu0 0.0
    %3063 = vmatprep.subr.mxu0 0.0
    %3064 = vmatpush1.msra.mxu0 0.0
    %3065 = vmatprep.subr.mxu0 0.0
    %3066 = vmatpush1.msra.mxu0 0.0
    %3067 = vmatprep.subr.mxu0 0.0
    %3068 = vmatpush1.msra.mxu0 0.0
    %3069 = vmatprep.subr.mxu0 0.0
    %3070 = vmatpush1.msra.mxu0 0.0
    %3071 = vmatprep.subr.mxu0 0.0
    %3072 = vmatpush1.msra.mxu0 0.0
    %3073 = vmatprep.subr.mxu0 0.0
    %3074 = vmatpush1.msra.mxu0 0.0
    %3075 = vmatprep.subr.mxu0 0.0
    %3076 = vmatpush1.msra.mxu0 0.0
    %3077 = vmatprep.subr.mxu0 0.0
    %3078 = vmatpush1.msra.mxu0 0.0
    %3079 = vmatprep.mubr.f32.mxu0 0.0
    %3080 = vmatmul.mubr.f32.gmra.mrb[0].mxu0 %v3007
    %v3081 = vpop.f32.mrb[0].mxu0
    %v3082 = vadd.f32 0.0, %v3081
    %v3083 = vpop.f32.mrb[0].mxu0
    %3084 = vmatprep.mubr.f32.mxu0 0.0
    %3085 = vmatmul.mubr.f32.gmra.mrb[0].mxu0 %v3010
    %v3086 = vpop.f32.mrb[0].mxu0
    %v3087 = vadd.f32 0.0, %v3086
    %v3088 = vpop.f32.mrb[0].mxu0
    %3089 = vmatprep.mubr.f32.mxu0 0.0
    %3090 = vmatmul.mubr.f32.gmra.mrb[0].mxu0 %v3013
    %v3091 = vpop.f32.mrb[0].mxu0
    %v3092 = vadd.f32 0.0, %v3091
    %v3093 = vpop.f32.mrb[0].mxu0
    %3094 = vdwg.mxu0
    %v3096 = vlaneseq
    %v3097 = vshrl.u32 %v3096, 7
    %v3098 = vsub.s32 0, %v3097
    %v3099 = vrot.slane %v2997, %v3098
    %v3101 = vadd.f32 %v3099, %v3082
    %v3102 = vadd.f32 %v3099, %v3087
    %v3103 = vadd.f32 %v3099, %v3092
    %v3104 = vadd.f32 %v201, %v977
    %v3105 = vadd.f32 %v202, %v978
    %3106 = vst.msk [vmem:[#allocation2] sm:$0xff] %vm308, %v3104
    %3107 = vst.msk [vmem:[#allocation2 + $0x8] sm:$0xff] %vm308, %v3105
    %v3108 = vadd.f32 %v203, %v3101
    %v3109 = vadd.f32 %v204, %v3102
    %v3110 = vadd.f32 %v205, %v3103
    %3111 = vst.msk [vmem:[#allocation4] sm:$0xff] %vm308, %v3108
    %3112 = vst.msk [vmem:[#allocation4 + $0x8] sm:$0xff] %vm308, %v3109
    %3113 = vst.msk [vmem:[#allocation4 + $0x10] sm:$0xff] %vm308, %v3110
    %v3114 = vadd.f32 %v206, %v2096
    %v3115 = vadd.f32 %v207, %v2097
    %v3116 = vadd.f32 %v208, %v2098
    %v3117 = vadd.f32 %v209, %v2099
    %3118 = vst.msk [vmem:[#allocation6] sm:$0xff] %vm308, %v3114
    %3119 = vst.msk [vmem:[#allocation6 + $0x8] sm:$0xff] %vm308, %v3115
    %3120 = vst.msk [vmem:[#allocation6 + $0x10] sm:$0xff] %vm308, %v3116
    %vm3121 = vcmask 256000
    %3122 = vst.msk [vmem:[#allocation6 + $0x18] sm:$0x7] %vm3121, %v3117
    // Predicated region
    $region190: #{conv_layer_forward.1} parent=1 // pred_check
      _
    $region191: #{conv_layer_forward.1} parent=1 // pred_check_branch
      %3124 = sbr.rel (0) target = $region193
    $region192: #{conv_layer_forward.1} parent=1 // pred_region
      %s3126 = ssub.s32 256, 256
      %3127 = vsyncadd [#allocation3], %s3126
      %s3128 = sshll.u32 [#allocation2], 4
      %s3129 = int_to_ptr.vmem [resolvable:$true] %s3128
      %3134 = dma.vmem_to_hbm [thread:$0]  %s3129, 256, %s95, [#allocation3], 128, 128, 8
    $region193: #{conv_layer_forward.1} parent=1 // pred_fallthru
      _
    // Predicated region
    $region194: #{conv_layer_forward.1} parent=1 // pred_check
      _
    $region195: #{conv_layer_forward.1} parent=1 // pred_check_branch
      %3136 = sbr.rel (0) target = $region197
    $region196: #{conv_layer_forward.1} parent=1 // pred_region
      %s3138 = ssub.s32 384, 384
      %3139 = vsyncadd [#allocation5], %s3138
      %s3140 = sshll.u32 [#allocation4], 4
      %s3141 = int_to_ptr.vmem [resolvable:$true] %s3140
      %3146 = dma.vmem_to_hbm [thread:$0]  %s3141, 384, %s97, [#allocation5], 128, 128, 8
    $region197: #{conv_layer_forward.1} parent=1 // pred_fallthru
      _
    // Predicated region
    $region198: #{conv_layer_forward.1} parent=1 // pred_check
      _
    $region199: #{conv_layer_forward.1} parent=1 // pred_check_branch
      %3148 = sbr.rel (0) target = $region201
    $region200: #{conv_layer_forward.1} parent=1 // pred_region
      %s3150 = ssub.s32 512, 512
      %3151 = vsyncadd [#allocation5], %s3150
      %s3152 = sshll.u32 [#allocation6], 4
      %s3153 = int_to_ptr.vmem [resolvable:$true] %s3152
      %3158 = dma.vmem_to_hbm [thread:$0]  %s3153, 512, %s99, [#allocation5], 128, 128, 8
    $region201: #{conv_layer_forward.1} parent=1 // pred_fallthru
      _
    // Predicated region
    $region202: #{conv_layer_forward.1} parent=1 // pred_check
      _
    $region203: #{conv_layer_forward.1} parent=1 // pred_check_branch
      %3160 = sbr.rel (0) target = $region205
    $region204: #{conv_layer_forward.1} parent=1 // pred_region
      %3161 = dma.done [#allocation3], 256
    $region205: #{conv_layer_forward.1} parent=1 // pred_fallthru
      _
    // Predicated region
    $region206: #{conv_layer_forward.1} parent=1 // pred_check
      _
    $region207: #{conv_layer_forward.1} parent=1 // pred_check_branch
      %3163 = sbr.rel (0) target = $region209
    $region208: #{conv_layer_forward.1} parent=1 // pred_region
      %3164 = dma.done [#allocation5], 384
    $region209: #{conv_layer_forward.1} parent=1 // pred_fallthru
      _
    // Predicated region
    $region210: #{conv_layer_forward.1} parent=1 // pred_check
      _
    $region211: #{conv_layer_forward.1} parent=1 // pred_check_branch
      %3166 = sbr.rel (0) target = $region213
    $region212: #{conv_layer_forward.1} parent=1 // pred_region
      %3167 = dma.done [#allocation5], 512
    $region213: #{conv_layer_forward.1} parent=1 // pred_fallthru
      _
    %3168 = vsyncpa [#allocation3], 1
    %3169 = vsyncpa [#allocation5], 1

</llo_original>
